<compile_context>
chip_gen: v5e
topology: v5e:2x2
jax: 0.10.0
libtpu: 0.0.40
codegen_flags: <defaults>
</compile_context>

<pallas_src>
import jax
import jax.numpy as jnp
from jax import lax
from jax.experimental import pallas as pl
from jax.experimental.pallas import tpu as pltpu


# ---------------------------------------------------------------------------
# Kernel
# ---------------------------------------------------------------------------

def _l2_normalize_f32(x):
    # F.normalize(x, dim=-1): x / max(||x||, 1e-12) == x * rsqrt(max(sumsq, 1e-24))
    sumsq = jnp.sum(x * x, axis=-1, keepdims=True)
    return x * lax.rsqrt(jnp.maximum(sumsq, 1e-24))


def _graph_encoder_kernel(adj_hbm_ref, x_ref, inv_deg_ref, ln_g_ref, ln_b_ref,
                          *rest):
    """Fused forward: conv1 -> SiLU -> LayerNorm -> conv2..conv5.

    rest = 25 weight/bias refs (5 per layer: Wp, bp, Wl, bl, Wr)
           + output ref + VMEM adjacency scratch + DMA semaphore.
    All intermediates stay on-chip; the adjacency is DMA'd from HBM exactly
    once, overlapped with layer-1's projection.
    """
    *w_refs, o_ref, adj_vmem, adj_sem = rest
    n_layers = len(w_refs) // 5

    # Kick off the (large) adjacency HBM->VMEM copy; it is only needed at
    # layer-1's aggregation, so the first projection matmul hides (part of) it.
    adj_copy = pltpu.make_async_copy(adj_hbm_ref, adj_vmem, adj_sem)
    adj_copy.start()

    inv_deg = inv_deg_ref[...]          # [N, 1] f32 per-row mean scale (exact)
    h = x_ref[...]                      # [N, F_in] f32

    for layer in range(n_layers):
        wp = w_refs[5 * layer + 0][...]   # bf16 [in, in]
        bp = w_refs[5 * layer + 1][...]   # f32  [1, in]
        wl = w_refs[5 * layer + 2][...]   # bf16 [in, out]
        bl = w_refs[5 * layer + 3][...]   # f32  [1, out]
        wr = w_refs[5 * layer + 4][...]   # bf16 [in, out]

        h_bf = h.astype(jnp.bfloat16)

        # project=True: relu(Linear(in, in)(x)) on source features.
        xp = jnp.dot(h_bf, wp, preferred_element_type=jnp.float32) + bp
        xp = jnp.maximum(xp, 0.0)

        if layer == 0:
            adj_copy.wait()             # adjacency DMA hidden behind x @ Wp

        # Exact mean aggregation: binary/count adjacency matmul (bf16 MXU,
        # f32 accumulate), then f32 per-row 1/deg scale on the VPU.
        agg = jnp.dot(adj_vmem[...], xp.astype(jnp.bfloat16),
                      preferred_element_type=jnp.float32) * inv_deg

        # lin_l(agg) + lin_r(x)
        out = jnp.dot(agg.astype(jnp.bfloat16), wl,
                      preferred_element_type=jnp.float32) + bl
        out = out + jnp.dot(h_bf, wr, preferred_element_type=jnp.float32)

        # normalize=True
        h = _l2_normalize_f32(out)

        if layer == 0:
            # SiLU + LayerNorm(64, eps=1e-5) fused into conv1's epilogue (f32).
            h = h * jax.nn.sigmoid(h)   # EUP logistic, frees VALU slots
            mean = jnp.mean(h, axis=-1, keepdims=True)
            var = jnp.mean((h - mean) ** 2, axis=-1, keepdims=True)
            h = (h - mean) * lax.rsqrt(var + 1e-5)
            h = h * ln_g_ref[...] + ln_b_ref[...]

    # TODO(synk): row-block tile layers 3-5 (256/576-wide) for N in the
    # thousands to bound f32 temporaries on v7x's 64 MiB VMEM.
    o_ref[...] = h.astype(o_ref.dtype)


# ---------------------------------------------------------------------------
# Wrapper
# ---------------------------------------------------------------------------

def graph_encoder_forward(x, adj, inv_deg, layers, ln_gamma, ln_beta):
    n = x.shape[0]
    out_dim = layers[-1][2].shape[1]  # lin_l output dim of last layer (576)

    # bf16 for everything that feeds the MXU; biases / LN params / row scale
    # stay f32 (applied after f32 accumulation).
    flat_w = []
    for (wp, bp, wl, bl, wr) in layers:
        flat_w += [wp.astype(jnp.bfloat16), bp,
                   wl.astype(jnp.bfloat16), bl,
                   wr.astype(jnp.bfloat16)]

    args = [adj.astype(jnp.bfloat16),           # stays in HBM (pl.ANY), DMA'd in-kernel
            x.astype(jnp.float32),
            inv_deg.astype(jnp.float32),
            ln_gamma.astype(jnp.float32),
            ln_beta.astype(jnp.float32)] + flat_w

    # --- explicit live-set VMEM estimate --------------------------------
    adj_bytes = 2 * n * n                              # bf16 adjacency scratch
    weight_bytes = sum(int(a.size) * a.dtype.itemsize for a in flat_w)
    # worst-layer activation temporaries (h/xp/agg in f32 + bf16 copies, 576-wide out)
    act_bytes = n * 256 * (4 + 2 + 4 + 2 + 4 + 2) + n * 576 * 4 * 2
    out_bytes = n * out_dim * 4 * 2
    live_bytes = adj_bytes + act_bytes + out_bytes + 2 * weight_bytes + (8 << 20)

    try:
        vmem_cap = int(pltpu.get_tpu_info().vmem_capacity_bytes)
    except Exception:
        vmem_cap = 64 << 20                            # conservative (v7x)
    vmem_limit = int(min(max(live_bytes, 32 << 20), int(vmem_cap * 0.85)))

    # --- advisory cost estimate ------------------------------------------
    flops = 0
    for (wp, bp, wl, bl, wr) in layers:
        d_in, d_out = wl.shape
        flops += 2 * n * d_in * d_in          # projection
        flops += 2 * n * n * d_in             # adjacency aggregation
        flops += 2 * 2 * n * d_in * d_out     # lin_l + lin_r
    bytes_accessed = sum(int(a.size) * a.dtype.itemsize for a in args)
    bytes_accessed += n * out_dim * 4
    cost = pl.CostEstimate(flops=int(flops),
                           transcendentals=int(n * 64),
                           bytes_accessed=int(bytes_accessed))

    in_specs = ([pl.BlockSpec(memory_space=pl.ANY)] +                         # adjacency (HBM)
                [pl.BlockSpec(memory_space=pltpu.MemorySpace.VMEM)] * (len(args) - 1))

    return pl.pallas_call(
        _graph_encoder_kernel,
        out_shape=jax.ShapeDtypeStruct((n, out_dim), jnp.float32),
        in_specs=in_specs,
        out_specs=pl.BlockSpec(memory_space=pltpu.MemorySpace.VMEM),
        scratch_shapes=[pltpu.VMEM((n, n), jnp.bfloat16),   # adjacency buffer
                        pltpu.SemaphoreType.DMA],
        compiler_params=pltpu.CompilerParams(vmem_limit_bytes=vmem_limit),
        cost_estimate=cost,
    )(*args)


# ---------------------------------------------------------------------------
# Parameters / graph preprocessing (host side)
# ---------------------------------------------------------------------------

def init_sage_params(key, in_dim, out_dim):
    k1, k2, k3, k4, k5 = jax.random.split(key, 5)
    s_in = 1.0 / jnp.sqrt(jnp.float32(in_dim))
    wp = jax.random.normal(k1, (in_dim, in_dim), jnp.float32) * s_in   # lin (project)
    bp = jax.random.normal(k2, (1, in_dim), jnp.float32) * 0.01
    wl = jax.random.normal(k3, (in_dim, out_dim), jnp.float32) * s_in  # lin_l
    bl = jax.random.normal(k4, (1, out_dim), jnp.float32) * 0.01
    wr = jax.random.normal(k5, (in_dim, out_dim), jnp.float32) * s_in  # lin_r (no bias)
    return (wp, bp, wl, bl, wr)


def build_adjacency(edge_index, num_nodes):
    """Edge-count adjacency in bf16 (exact small ints) + f32 per-row 1/deg.

    edge_index: [2, E], row 0 = source, row 1 = target (PyG convention).
    adj[i, j] = #edges (j -> i); mean agg == (adj @ x) * inv_deg, matching the
    PyG scatter-mean (duplicate edges counted, isolated nodes aggregate to 0).
    """
    src, dst = edge_index[0], edge_index[1]
    ones_f32 = jnp.ones(src.shape[0], jnp.float32)
    adj = jnp.zeros((num_nodes, num_nodes), jnp.bfloat16)
    adj = adj.at[dst, src].add(ones_f32.astype(jnp.bfloat16))
    deg = jax.ops.segment_sum(ones_f32, dst, num_segments=num_nodes)
    inv_deg = (1.0 / jnp.maximum(deg, 1.0)).reshape(num_nodes, 1)
    return adj, inv_deg


class GraphEncoderPallas:
    def __init__(self, input_dims, key):
        dims = [(input_dims, 64), (64, 128), (128, 256), (256, 256), (256, 576)]
        keys = jax.random.split(key, len(dims))
        self.layers = [init_sage_params(keys[i], d_in, d_out)
                       for i, (d_in, d_out) in enumerate(dims)]
        self.ln_gamma = jnp.ones((1, 64), jnp.float32)
        self.ln_beta = jnp.zeros((1, 64), jnp.float32)

    def __call__(self, x, edge_list):
        # Mirrors `data.edge_list = data.edge_list.transpose(0, 1)`
        edge_index = edge_list.T
        adj, inv_deg = build_adjacency(edge_index, x.shape[0])
        return graph_encoder_forward(x, adj, inv_deg, self.layers,
                                     self.ln_gamma, self.ln_beta)


# ---------------------------------------------------------------------------
# Self-test
# ---------------------------------------------------------------------------

if __name__ == "__main__":
    key = jax.random.PRNGKey(0)
    k_x, k_e, k_p = jax.random.split(key, 3)

    num_nodes = 16
    input_dims = 16
    num_edges = 32

    x = jax.random.normal(k_x, (num_nodes, input_dims), jnp.float32)
    # edge_list as stored on `data`: shape [E, 2] (gets transposed in forward)
    edge_list = jax.random.randint(k_e, (num_edges, 2), 0, num_nodes, jnp.int32)

    model = GraphEncoderPallas(input_dims, k_p)
    out = model(x, edge_list)
    out = jax.block_until_ready(out)

    assert out.shape == (num_nodes, 576)
    assert out.dtype == jnp.float32
    assert bool(jnp.all(jnp.isfinite(out)))
    print("KERNEL_OK")
</pallas_src>

<mosaic_0001>
module attributes {stable_mosaic.version = 11 : i64} {
  func.func @_graph_encoder_kernel(%arg0: memref<16x16xbf16, #tpu.memory_space<any>>, %arg1: memref<16x16xf32, #tpu.memory_space<vmem>>, %arg2: memref<16x1xf32, #tpu.memory_space<vmem>>, %arg3: memref<1x64xf32, #tpu.memory_space<vmem>>, %arg4: memref<1x64xf32, #tpu.memory_space<vmem>>, %arg5: memref<16x16xbf16, #tpu.memory_space<vmem>>, %arg6: memref<1x16xf32, #tpu.memory_space<vmem>>, %arg7: memref<16x64xbf16, #tpu.memory_space<vmem>>, %arg8: memref<1x64xf32, #tpu.memory_space<vmem>>, %arg9: memref<16x64xbf16, #tpu.memory_space<vmem>>, %arg10: memref<64x64xbf16, #tpu.memory_space<vmem>>, %arg11: memref<1x64xf32, #tpu.memory_space<vmem>>, %arg12: memref<64x128xbf16, #tpu.memory_space<vmem>>, %arg13: memref<1x128xf32, #tpu.memory_space<vmem>>, %arg14: memref<64x128xbf16, #tpu.memory_space<vmem>>, %arg15: memref<128x128xbf16, #tpu.memory_space<vmem>>, %arg16: memref<1x128xf32, #tpu.memory_space<vmem>>, %arg17: memref<128x256xbf16, #tpu.memory_space<vmem>>, %arg18: memref<1x256xf32, #tpu.memory_space<vmem>>, %arg19: memref<128x256xbf16, #tpu.memory_space<vmem>>, %arg20: memref<256x256xbf16, #tpu.memory_space<vmem>>, %arg21: memref<1x256xf32, #tpu.memory_space<vmem>>, %arg22: memref<256x256xbf16, #tpu.memory_space<vmem>>, %arg23: memref<1x256xf32, #tpu.memory_space<vmem>>, %arg24: memref<256x256xbf16, #tpu.memory_space<vmem>>, %arg25: memref<256x256xbf16, #tpu.memory_space<vmem>>, %arg26: memref<1x256xf32, #tpu.memory_space<vmem>>, %arg27: memref<256x576xbf16, #tpu.memory_space<vmem>>, %arg28: memref<1x576xf32, #tpu.memory_space<vmem>>, %arg29: memref<256x576xbf16, #tpu.memory_space<vmem>>, %arg30: memref<16x576xf32, #tpu.memory_space<vmem>>, %arg31: memref<16x16xbf16, #tpu.memory_space<vmem>>, %arg32: memref<!tpu.dma_semaphore, #tpu.memory_space<semaphore_mem>>) attributes {dimension_semantics = [], scalar_prefetch = 0 : i64, scratch_operands = 2 : i64, tpu.core_type = #tpu.core_type<tc>} {
    tpu.enqueue_dma source(%arg0 : memref<16x16xbf16, #tpu.memory_space<any>>) target(%arg31 : memref<16x16xbf16, #tpu.memory_space<vmem>>) target_semaphore(%arg32 : memref<!tpu.dma_semaphore, #tpu.memory_space<semaphore_mem>>)
    %c0 = arith.constant 0 : index
    %c0_0 = arith.constant 0 : index
    %0 = vector.load %arg2[%c0, %c0_0] : memref<16x1xf32, #tpu.memory_space<vmem>>, vector<16x1xf32>
    %c0_1 = arith.constant 0 : index
    %c0_2 = arith.constant 0 : index
    %1 = vector.load %arg1[%c0_1, %c0_2] : memref<16x16xf32, #tpu.memory_space<vmem>>, vector<16x16xf32>
    %c0_3 = arith.constant 0 : index
    %c0_4 = arith.constant 0 : index
    %2 = vector.load %arg5[%c0_3, %c0_4] : memref<16x16xbf16, #tpu.memory_space<vmem>>, vector<16x16xbf16>
    %c0_5 = arith.constant 0 : index
    %c0_6 = arith.constant 0 : index
    %3 = vector.load %arg6[%c0_5, %c0_6] : memref<1x16xf32, #tpu.memory_space<vmem>>, vector<1x16xf32>
    %c0_7 = arith.constant 0 : index
    %c0_8 = arith.constant 0 : index
    %4 = vector.load %arg7[%c0_7, %c0_8] : memref<16x64xbf16, #tpu.memory_space<vmem>>, vector<16x64xbf16>
    %c0_9 = arith.constant 0 : index
    %c0_10 = arith.constant 0 : index
    %5 = vector.load %arg8[%c0_9, %c0_10] : memref<1x64xf32, #tpu.memory_space<vmem>>, vector<1x64xf32>
    %c0_11 = arith.constant 0 : index
    %c0_12 = arith.constant 0 : index
    %6 = vector.load %arg9[%c0_11, %c0_12] : memref<16x64xbf16, #tpu.memory_space<vmem>>, vector<16x64xbf16>
    %7 = arith.truncf %1 : vector<16x16xf32> to vector<16x16xbf16>
    %cst = arith.constant dense<0.000000e+00> : vector<16x16xf32>
    %8 = tpu.matmul %7, %2, %cst {dimension_numbers = #tpu.dot_dimension_numbers<[1], [0], [0], [1], [0, 0, 1, 1], [], []>} : vector<16x16xbf16>, vector<16x16xbf16>, vector<16x16xf32> -> vector<16x16xf32>
    %9 = vector.broadcast %3 : vector<1x16xf32> to vector<16x16xf32>
    %10 = arith.addf %8, %9 : vector<16x16xf32>
    %cst_13 = arith.constant 0.000000e+00 : f32
    %11 = vector.broadcast %cst_13 : f32 to vector<16x16xf32>
    %12 = arith.maximumf %10, %11 : vector<16x16xf32>
    tpu.wait_dma2 semaphore(%arg32 : memref<!tpu.dma_semaphore, #tpu.memory_space<semaphore_mem>>) src(%arg0 : memref<16x16xbf16, #tpu.memory_space<any>>) dst(%arg31 : memref<16x16xbf16, #tpu.memory_space<vmem>>)
    %c0_14 = arith.constant 0 : index
    %c0_15 = arith.constant 0 : index
    %13 = vector.load %arg31[%c0_14, %c0_15] : memref<16x16xbf16, #tpu.memory_space<vmem>>, vector<16x16xbf16>
    %14 = arith.truncf %12 : vector<16x16xf32> to vector<16x16xbf16>
    %cst_16 = arith.constant dense<0.000000e+00> : vector<16x16xf32>
    %15 = tpu.matmul %13, %14, %cst_16 {dimension_numbers = #tpu.dot_dimension_numbers<[1], [0], [0], [1], [0, 0, 1, 1], [], []>} : vector<16x16xbf16>, vector<16x16xbf16>, vector<16x16xf32> -> vector<16x16xf32>
    %16 = vector.broadcast %0 : vector<16x1xf32> to vector<16x16xf32>
    %17 = arith.mulf %15, %16 : vector<16x16xf32>
    %18 = arith.truncf %17 : vector<16x16xf32> to vector<16x16xbf16>
    %cst_17 = arith.constant dense<0.000000e+00> : vector<16x64xf32>
    %19 = tpu.matmul %18, %4, %cst_17 {dimension_numbers = #tpu.dot_dimension_numbers<[1], [0], [0], [1], [0, 0, 1, 1], [], []>} : vector<16x16xbf16>, vector<16x64xbf16>, vector<16x64xf32> -> vector<16x64xf32>
    %20 = vector.broadcast %5 : vector<1x64xf32> to vector<16x64xf32>
    %21 = arith.addf %19, %20 : vector<16x64xf32>
    %cst_18 = arith.constant dense<0.000000e+00> : vector<16x64xf32>
    %22 = tpu.matmul %7, %6, %cst_18 {dimension_numbers = #tpu.dot_dimension_numbers<[1], [0], [0], [1], [0, 0, 1, 1], [], []>} : vector<16x16xbf16>, vector<16x64xbf16>, vector<16x64xf32> -> vector<16x64xf32>
    %23 = arith.addf %21, %22 : vector<16x64xf32>
    %24 = arith.mulf %23, %23 : vector<16x64xf32>
    %cst_19 = arith.constant dense<0.000000e+00> : vector<16xf32>
    %25 = vector.multi_reduction <add>, %24, %cst_19 [1] : vector<16x64xf32> to vector<16xf32>
    %26 = vector.shape_cast %25 : vector<16xf32> to vector<16x1xf32>
    %cst_20 = arith.constant 1.000000e-24 : f32
    %27 = vector.broadcast %cst_20 : f32 to vector<16x1xf32>
    %28 = arith.maximumf %26, %27 : vector<16x1xf32>
    %29 = math.rsqrt %28 : vector<16x1xf32>
    %30 = vector.broadcast %29 : vector<16x1xf32> to vector<16x64xf32>
    %31 = arith.mulf %23, %30 : vector<16x64xf32>
    %32 = arith.negf %31 : vector<16x64xf32>
    %33 = math.exp %32 : vector<16x64xf32>
    %cst_21 = arith.constant 1.000000e+00 : f32
    %34 = vector.broadcast %cst_21 : f32 to vector<16x64xf32>
    %35 = arith.addf %34, %33 : vector<16x64xf32>
    %36 = arith.divf %34, %35 : vector<16x64xf32>
    %37 = arith.mulf %31, %36 : vector<16x64xf32>
    %cst_22 = arith.constant dense<0.000000e+00> : vector<16xf32>
    %38 = vector.multi_reduction <add>, %37, %cst_22 [1] : vector<16x64xf32> to vector<16xf32>
    %39 = vector.shape_cast %38 : vector<16xf32> to vector<16x1xf32>
    %cst_23 = arith.constant 6.400000e+01 : f32
    %40 = vector.broadcast %cst_23 : f32 to vector<16x1xf32>
    %41 = arith.divf %39, %40 : vector<16x1xf32>
    %42 = vector.broadcast %41 : vector<16x1xf32> to vector<16x64xf32>
    %43 = arith.subf %37, %42 : vector<16x64xf32>
    %44 = arith.mulf %43, %43 : vector<16x64xf32>
    %cst_24 = arith.constant dense<0.000000e+00> : vector<16xf32>
    %45 = vector.multi_reduction <add>, %44, %cst_24 [1] : vector<16x64xf32> to vector<16xf32>
    %46 = vector.shape_cast %45 : vector<16xf32> to vector<16x1xf32>
    %cst_25 = arith.constant 6.400000e+01 : f32
    %47 = vector.broadcast %cst_25 : f32 to vector<16x1xf32>
    %48 = arith.divf %46, %47 : vector<16x1xf32>
    %49 = vector.broadcast %41 : vector<16x1xf32> to vector<16x64xf32>
    %50 = arith.subf %37, %49 : vector<16x64xf32>
    %cst_26 = arith.constant 9.99999974E-6 : f32
    %51 = vector.broadcast %cst_26 : f32 to vector<16x1xf32>
    %52 = arith.addf %48, %51 : vector<16x1xf32>
    %53 = math.rsqrt %52 : vector<16x1xf32>
    %54 = vector.broadcast %53 : vector<16x1xf32> to vector<16x64xf32>
    %55 = arith.mulf %50, %54 : vector<16x64xf32>
    %c0_27 = arith.constant 0 : index
    %c0_28 = arith.constant 0 : index
    %56 = vector.load %arg3[%c0_27, %c0_28] : memref<1x64xf32, #tpu.memory_space<vmem>>, vector<1x64xf32>
    %57 = vector.broadcast %56 : vector<1x64xf32> to vector<16x64xf32>
    %58 = arith.mulf %55, %57 : vector<16x64xf32>
    %c0_29 = arith.constant 0 : index
    %c0_30 = arith.constant 0 : index
    %59 = vector.load %arg4[%c0_29, %c0_30] : memref<1x64xf32, #tpu.memory_space<vmem>>, vector<1x64xf32>
    %60 = vector.broadcast %59 : vector<1x64xf32> to vector<16x64xf32>
    %61 = arith.addf %58, %60 : vector<16x64xf32>
    %c0_31 = arith.constant 0 : index
    %c0_32 = arith.constant 0 : index
    %62 = vector.load %arg10[%c0_31, %c0_32] : memref<64x64xbf16, #tpu.memory_space<vmem>>, vector<64x64xbf16>
    %c0_33 = arith.constant 0 : index
    %c0_34 = arith.constant 0 : index
    %63 = vector.load %arg11[%c0_33, %c0_34] : memref<1x64xf32, #tpu.memory_space<vmem>>, vector<1x64xf32>
    %c0_35 = arith.constant 0 : index
    %c0_36 = arith.constant 0 : index
    %64 = vector.load %arg12[%c0_35, %c0_36] : memref<64x128xbf16, #tpu.memory_space<vmem>>, vector<64x128xbf16>
    %c0_37 = arith.constant 0 : index
    %c0_38 = arith.constant 0 : index
    %65 = vector.load %arg13[%c0_37, %c0_38] : memref<1x128xf32, #tpu.memory_space<vmem>>, vector<1x128xf32>
    %c0_39 = arith.constant 0 : index
    %c0_40 = arith.constant 0 : index
    %66 = vector.load %arg14[%c0_39, %c0_40] : memref<64x128xbf16, #tpu.memory_space<vmem>>, vector<64x128xbf16>
    %67 = arith.truncf %61 : vector<16x64xf32> to vector<16x64xbf16>
    %cst_41 = arith.constant dense<0.000000e+00> : vector<16x64xf32>
    %68 = tpu.matmul %67, %62, %cst_41 {dimension_numbers = #tpu.dot_dimension_numbers<[1], [0], [0], [1], [0, 0, 1, 1], [], []>} : vector<16x64xbf16>, vector<64x64xbf16>, vector<16x64xf32> -> vector<16x64xf32>
    %69 = vector.broadcast %63 : vector<1x64xf32> to vector<16x64xf32>
    %70 = arith.addf %68, %69 : vector<16x64xf32>
    %cst_42 = arith.constant 0.000000e+00 : f32
    %71 = vector.broadcast %cst_42 : f32 to vector<16x64xf32>
    %72 = arith.maximumf %70, %71 : vector<16x64xf32>
    %c0_43 = arith.constant 0 : index
    %c0_44 = arith.constant 0 : index
    %73 = vector.load %arg31[%c0_43, %c0_44] : memref<16x16xbf16, #tpu.memory_space<vmem>>, vector<16x16xbf16>
    %74 = arith.truncf %72 : vector<16x64xf32> to vector<16x64xbf16>
    %cst_45 = arith.constant dense<0.000000e+00> : vector<16x64xf32>
    %75 = tpu.matmul %73, %74, %cst_45 {dimension_numbers = #tpu.dot_dimension_numbers<[1], [0], [0], [1], [0, 0, 1, 1], [], []>} : vector<16x16xbf16>, vector<16x64xbf16>, vector<16x64xf32> -> vector<16x64xf32>
    %76 = vector.broadcast %0 : vector<16x1xf32> to vector<16x64xf32>
    %77 = arith.mulf %75, %76 : vector<16x64xf32>
    %78 = arith.truncf %77 : vector<16x64xf32> to vector<16x64xbf16>
    %cst_46 = arith.constant dense<0.000000e+00> : vector<16x128xf32>
    %79 = tpu.matmul %78, %64, %cst_46 {dimension_numbers = #tpu.dot_dimension_numbers<[1], [0], [0], [1], [0, 0, 1, 1], [], []>} : vector<16x64xbf16>, vector<64x128xbf16>, vector<16x128xf32> -> vector<16x128xf32>
    %80 = vector.broadcast %65 : vector<1x128xf32> to vector<16x128xf32>
    %81 = arith.addf %79, %80 : vector<16x128xf32>
    %cst_47 = arith.constant dense<0.000000e+00> : vector<16x128xf32>
    %82 = tpu.matmul %67, %66, %cst_47 {dimension_numbers = #tpu.dot_dimension_numbers<[1], [0], [0], [1], [0, 0, 1, 1], [], []>} : vector<16x64xbf16>, vector<64x128xbf16>, vector<16x128xf32> -> vector<16x128xf32>
    %83 = arith.addf %81, %82 : vector<16x128xf32>
    %84 = arith.mulf %83, %83 : vector<16x128xf32>
    %cst_48 = arith.constant dense<0.000000e+00> : vector<16xf32>
    %85 = vector.multi_reduction <add>, %84, %cst_48 [1] : vector<16x128xf32> to vector<16xf32>
    %86 = vector.shape_cast %85 : vector<16xf32> to vector<16x1xf32>
    %cst_49 = arith.constant 1.000000e-24 : f32
    %87 = vector.broadcast %cst_49 : f32 to vector<16x1xf32>
    %88 = arith.maximumf %86, %87 : vector<16x1xf32>
    %89 = math.rsqrt %88 : vector<16x1xf32>
    %90 = vector.broadcast %89 : vector<16x1xf32> to vector<16x128xf32>
    %91 = arith.mulf %83, %90 : vector<16x128xf32>
    %c0_50 = arith.constant 0 : index
    %c0_51 = arith.constant 0 : index
    %92 = vector.load %arg15[%c0_50, %c0_51] : memref<128x128xbf16, #tpu.memory_space<vmem>>, vector<128x128xbf16>
    %c0_52 = arith.constant 0 : index
    %c0_53 = arith.constant 0 : index
    %93 = vector.load %arg16[%c0_52, %c0_53] : memref<1x128xf32, #tpu.memory_space<vmem>>, vector<1x128xf32>
    %c0_54 = arith.constant 0 : index
    %c0_55 = arith.constant 0 : index
    %94 = vector.load %arg17[%c0_54, %c0_55] : memref<128x256xbf16, #tpu.memory_space<vmem>>, vector<128x256xbf16>
    %c0_56 = arith.constant 0 : index
    %c0_57 = arith.constant 0 : index
    %95 = vector.load %arg18[%c0_56, %c0_57] : memref<1x256xf32, #tpu.memory_space<vmem>>, vector<1x256xf32>
    %c0_58 = arith.constant 0 : index
    %c0_59 = arith.constant 0 : index
    %96 = vector.load %arg19[%c0_58, %c0_59] : memref<128x256xbf16, #tpu.memory_space<vmem>>, vector<128x256xbf16>
    %97 = arith.truncf %91 : vector<16x128xf32> to vector<16x128xbf16>
    %cst_60 = arith.constant dense<0.000000e+00> : vector<16x128xf32>
    %98 = tpu.matmul %97, %92, %cst_60 {dimension_numbers = #tpu.dot_dimension_numbers<[1], [0], [0], [1], [0, 0, 1, 1], [], []>} : vector<16x128xbf16>, vector<128x128xbf16>, vector<16x128xf32> -> vector<16x128xf32>
    %99 = vector.broadcast %93 : vector<1x128xf32> to vector<16x128xf32>
    %100 = arith.addf %98, %99 : vector<16x128xf32>
    %cst_61 = arith.constant 0.000000e+00 : f32
    %101 = vector.broadcast %cst_61 : f32 to vector<16x128xf32>
    %102 = arith.maximumf %100, %101 : vector<16x128xf32>
    %c0_62 = arith.constant 0 : index
    %c0_63 = arith.constant 0 : index
    %103 = vector.load %arg31[%c0_62, %c0_63] : memref<16x16xbf16, #tpu.memory_space<vmem>>, vector<16x16xbf16>
    %104 = arith.truncf %102 : vector<16x128xf32> to vector<16x128xbf16>
    %cst_64 = arith.constant dense<0.000000e+00> : vector<16x128xf32>
    %105 = tpu.matmul %103, %104, %cst_64 {dimension_numbers = #tpu.dot_dimension_numbers<[1], [0], [0], [1], [0, 0, 1, 1], [], []>} : vector<16x16xbf16>, vector<16x128xbf16>, vector<16x128xf32> -> vector<16x128xf32>
    %106 = vector.broadcast %0 : vector<16x1xf32> to vector<16x128xf32>
    %107 = arith.mulf %105, %106 : vector<16x128xf32>
    %108 = arith.truncf %107 : vector<16x128xf32> to vector<16x128xbf16>
    %cst_65 = arith.constant dense<0.000000e+00> : vector<16x256xf32>
    %109 = tpu.matmul %108, %94, %cst_65 {dimension_numbers = #tpu.dot_dimension_numbers<[1], [0], [0], [1], [0, 0, 1, 1], [], []>} : vector<16x128xbf16>, vector<128x256xbf16>, vector<16x256xf32> -> vector<16x256xf32>
    %110 = vector.broadcast %95 : vector<1x256xf32> to vector<16x256xf32>
    %111 = arith.addf %109, %110 : vector<16x256xf32>
    %cst_66 = arith.constant dense<0.000000e+00> : vector<16x256xf32>
    %112 = tpu.matmul %97, %96, %cst_66 {dimension_numbers = #tpu.dot_dimension_numbers<[1], [0], [0], [1], [0, 0, 1, 1], [], []>} : vector<16x128xbf16>, vector<128x256xbf16>, vector<16x256xf32> -> vector<16x256xf32>
    %113 = arith.addf %111, %112 : vector<16x256xf32>
    %114 = arith.mulf %113, %113 : vector<16x256xf32>
    %cst_67 = arith.constant dense<0.000000e+00> : vector<16xf32>
    %115 = vector.multi_reduction <add>, %114, %cst_67 [1] : vector<16x256xf32> to vector<16xf32>
    %116 = vector.shape_cast %115 : vector<16xf32> to vector<16x1xf32>
    %cst_68 = arith.constant 1.000000e-24 : f32
    %117 = vector.broadcast %cst_68 : f32 to vector<16x1xf32>
    %118 = arith.maximumf %116, %117 : vector<16x1xf32>
    %119 = math.rsqrt %118 : vector<16x1xf32>
    %120 = vector.broadcast %119 : vector<16x1xf32> to vector<16x256xf32>
    %121 = arith.mulf %113, %120 : vector<16x256xf32>
    %c0_69 = arith.constant 0 : index
    %c0_70 = arith.constant 0 : index
    %122 = vector.load %arg20[%c0_69, %c0_70] : memref<256x256xbf16, #tpu.memory_space<vmem>>, vector<256x256xbf16>
    %c0_71 = arith.constant 0 : index
    %c0_72 = arith.constant 0 : index
    %123 = vector.load %arg21[%c0_71, %c0_72] : memref<1x256xf32, #tpu.memory_space<vmem>>, vector<1x256xf32>
    %c0_73 = arith.constant 0 : index
    %c0_74 = arith.constant 0 : index
    %124 = vector.load %arg22[%c0_73, %c0_74] : memref<256x256xbf16, #tpu.memory_space<vmem>>, vector<256x256xbf16>
    %c0_75 = arith.constant 0 : index
    %c0_76 = arith.constant 0 : index
    %125 = vector.load %arg23[%c0_75, %c0_76] : memref<1x256xf32, #tpu.memory_space<vmem>>, vector<1x256xf32>
    %c0_77 = arith.constant 0 : index
    %c0_78 = arith.constant 0 : index
    %126 = vector.load %arg24[%c0_77, %c0_78] : memref<256x256xbf16, #tpu.memory_space<vmem>>, vector<256x256xbf16>
    %127 = arith.truncf %121 : vector<16x256xf32> to vector<16x256xbf16>
    %cst_79 = arith.constant dense<0.000000e+00> : vector<16x256xf32>
    %128 = tpu.matmul %127, %122, %cst_79 {dimension_numbers = #tpu.dot_dimension_numbers<[1], [0], [0], [1], [0, 0, 1, 1], [], []>} : vector<16x256xbf16>, vector<256x256xbf16>, vector<16x256xf32> -> vector<16x256xf32>
    %129 = vector.broadcast %123 : vector<1x256xf32> to vector<16x256xf32>
    %130 = arith.addf %128, %129 : vector<16x256xf32>
    %cst_80 = arith.constant 0.000000e+00 : f32
    %131 = vector.broadcast %cst_80 : f32 to vector<16x256xf32>
    %132 = arith.maximumf %130, %131 : vector<16x256xf32>
    %c0_81 = arith.constant 0 : index
    %c0_82 = arith.constant 0 : index
    %133 = vector.load %arg31[%c0_81, %c0_82] : memref<16x16xbf16, #tpu.memory_space<vmem>>, vector<16x16xbf16>
    %134 = arith.truncf %132 : vector<16x256xf32> to vector<16x256xbf16>
    %cst_83 = arith.constant dense<0.000000e+00> : vector<16x256xf32>
    %135 = tpu.matmul %133, %134, %cst_83 {dimension_numbers = #tpu.dot_dimension_numbers<[1], [0], [0], [1], [0, 0, 1, 1], [], []>} : vector<16x16xbf16>, vector<16x256xbf16>, vector<16x256xf32> -> vector<16x256xf32>
    %136 = vector.broadcast %0 : vector<16x1xf32> to vector<16x256xf32>
    %137 = arith.mulf %135, %136 : vector<16x256xf32>
    %138 = arith.truncf %137 : vector<16x256xf32> to vector<16x256xbf16>
    %cst_84 = arith.constant dense<0.000000e+00> : vector<16x256xf32>
    %139 = tpu.matmul %138, %124, %cst_84 {dimension_numbers = #tpu.dot_dimension_numbers<[1], [0], [0], [1], [0, 0, 1, 1], [], []>} : vector<16x256xbf16>, vector<256x256xbf16>, vector<16x256xf32> -> vector<16x256xf32>
    %140 = vector.broadcast %125 : vector<1x256xf32> to vector<16x256xf32>
    %141 = arith.addf %139, %140 : vector<16x256xf32>
    %cst_85 = arith.constant dense<0.000000e+00> : vector<16x256xf32>
    %142 = tpu.matmul %127, %126, %cst_85 {dimension_numbers = #tpu.dot_dimension_numbers<[1], [0], [0], [1], [0, 0, 1, 1], [], []>} : vector<16x256xbf16>, vector<256x256xbf16>, vector<16x256xf32> -> vector<16x256xf32>
    %143 = arith.addf %141, %142 : vector<16x256xf32>
    %144 = arith.mulf %143, %143 : vector<16x256xf32>
    %cst_86 = arith.constant dense<0.000000e+00> : vector<16xf32>
    %145 = vector.multi_reduction <add>, %144, %cst_86 [1] : vector<16x256xf32> to vector<16xf32>
    %146 = vector.shape_cast %145 : vector<16xf32> to vector<16x1xf32>
    %cst_87 = arith.constant 1.000000e-24 : f32
    %147 = vector.broadcast %cst_87 : f32 to vector<16x1xf32>
    %148 = arith.maximumf %146, %147 : vector<16x1xf32>
    %149 = math.rsqrt %148 : vector<16x1xf32>
    %150 = vector.broadcast %149 : vector<16x1xf32> to vector<16x256xf32>
    %151 = arith.mulf %143, %150 : vector<16x256xf32>
    %c0_88 = arith.constant 0 : index
    %c0_89 = arith.constant 0 : index
    %152 = vector.load %arg25[%c0_88, %c0_89] : memref<256x256xbf16, #tpu.memory_space<vmem>>, vector<256x256xbf16>
    %c0_90 = arith.constant 0 : index
    %c0_91 = arith.constant 0 : index
    %153 = vector.load %arg26[%c0_90, %c0_91] : memref<1x256xf32, #tpu.memory_space<vmem>>, vector<1x256xf32>
    %c0_92 = arith.constant 0 : index
    %c0_93 = arith.constant 0 : index
    %154 = vector.load %arg27[%c0_92, %c0_93] : memref<256x576xbf16, #tpu.memory_space<vmem>>, vector<256x576xbf16>
    %c0_94 = arith.constant 0 : index
    %c0_95 = arith.constant 0 : index
    %155 = vector.load %arg28[%c0_94, %c0_95] : memref<1x576xf32, #tpu.memory_space<vmem>>, vector<1x576xf32>
    %c0_96 = arith.constant 0 : index
    %c0_97 = arith.constant 0 : index
    %156 = vector.load %arg29[%c0_96, %c0_97] : memref<256x576xbf16, #tpu.memory_space<vmem>>, vector<256x576xbf16>
    %157 = arith.truncf %151 : vector<16x256xf32> to vector<16x256xbf16>
    %cst_98 = arith.constant dense<0.000000e+00> : vector<16x256xf32>
    %158 = tpu.matmul %157, %152, %cst_98 {dimension_numbers = #tpu.dot_dimension_numbers<[1], [0], [0], [1], [0, 0, 1, 1], [], []>} : vector<16x256xbf16>, vector<256x256xbf16>, vector<16x256xf32> -> vector<16x256xf32>
    %159 = vector.broadcast %153 : vector<1x256xf32> to vector<16x256xf32>
    %160 = arith.addf %158, %159 : vector<16x256xf32>
    %cst_99 = arith.constant 0.000000e+00 : f32
    %161 = vector.broadcast %cst_99 : f32 to vector<16x256xf32>
    %162 = arith.maximumf %160, %161 : vector<16x256xf32>
    %c0_100 = arith.constant 0 : index
    %c0_101 = arith.constant 0 : index
    %163 = vector.load %arg31[%c0_100, %c0_101] : memref<16x16xbf16, #tpu.memory_space<vmem>>, vector<16x16xbf16>
    %164 = arith.truncf %162 : vector<16x256xf32> to vector<16x256xbf16>
    %cst_102 = arith.constant dense<0.000000e+00> : vector<16x256xf32>
    %165 = tpu.matmul %163, %164, %cst_102 {dimension_numbers = #tpu.dot_dimension_numbers<[1], [0], [0], [1], [0, 0, 1, 1], [], []>} : vector<16x16xbf16>, vector<16x256xbf16>, vector<16x256xf32> -> vector<16x256xf32>
    %166 = vector.broadcast %0 : vector<16x1xf32> to vector<16x256xf32>
    %167 = arith.mulf %165, %166 : vector<16x256xf32>
    %168 = arith.truncf %167 : vector<16x256xf32> to vector<16x256xbf16>
    %cst_103 = arith.constant dense<0.000000e+00> : vector<16x576xf32>
    %169 = tpu.matmul %168, %154, %cst_103 {dimension_numbers = #tpu.dot_dimension_numbers<[1], [0], [0], [1], [0, 0, 1, 1], [], []>} : vector<16x256xbf16>, vector<256x576xbf16>, vector<16x576xf32> -> vector<16x576xf32>
    %170 = vector.broadcast %155 : vector<1x576xf32> to vector<16x576xf32>
    %171 = arith.addf %169, %170 : vector<16x576xf32>
    %cst_104 = arith.constant dense<0.000000e+00> : vector<16x576xf32>
    %172 = tpu.matmul %157, %156, %cst_104 {dimension_numbers = #tpu.dot_dimension_numbers<[1], [0], [0], [1], [0, 0, 1, 1], [], []>} : vector<16x256xbf16>, vector<256x576xbf16>, vector<16x576xf32> -> vector<16x576xf32>
    %173 = arith.addf %171, %172 : vector<16x576xf32>
    %174 = arith.mulf %173, %173 : vector<16x576xf32>
    %cst_105 = arith.constant dense<0.000000e+00> : vector<16xf32>
    %175 = vector.multi_reduction <add>, %174, %cst_105 [1] : vector<16x576xf32> to vector<16xf32>
    %176 = vector.shape_cast %175 : vector<16xf32> to vector<16x1xf32>
    %cst_106 = arith.constant 1.000000e-24 : f32
    %177 = vector.broadcast %cst_106 : f32 to vector<16x1xf32>
    %178 = arith.maximumf %176, %177 : vector<16x1xf32>
    %179 = math.rsqrt %178 : vector<16x1xf32>
    %180 = vector.broadcast %179 : vector<16x1xf32> to vector<16x576xf32>
    %181 = arith.mulf %173, %180 : vector<16x576xf32>
    %c0_107 = arith.constant 0 : index
    %c0_108 = arith.constant 0 : index
    %182 = vector.load %arg30[%c0_107, %c0_108] : memref<16x576xf32, #tpu.memory_space<vmem>>, vector<16x576xf32>
    tpu.vector_store %arg30[%c0_107, %c0_108], %181 {strides = array<i32>} : memref<16x576xf32, #tpu.memory_space<vmem>>, vector<16x576xf32>,
    return
  }
}

</mosaic_0001>

<llo_original>
// kernel: tpu_custom_call.1
$region0: #{tpu_custom_call.1}
  #allocation0 [shape = 'u32[]', space=smem, size = 0x4, offset = 0x4, fixed_abs, tag = 'smem constant byte address 0x4 - core index']
  #allocation1 [shape = 'u32[72,128]{1,0:T(1,128)}', space=vmem, size = 0x9000, scoped, tag = 'internal scratch']
  #allocation2 [shape = 'bf16[16,16]{1,0:T(8,128)(2,1)}', space=vmem, size = 0x1000, scoped, tag = 'scratch operand']
  #allocation3 [shape = 's32[1]{0}', space=sflag, size = 0x4, scoped, tag = 'scratch operand']
  #allocation6 [shape = 's32[]', space=sflag, size = 0x4, offset = 0, fixed_abs, tag = 'sflag constant byte address 0x0 - dummy sync flag']
  %s0 = inlined_call_operand.smem [shape: u32[31], index: -1, kind: input, shape index: {}]
  %s1 = sld [smem:[%s0]]
  %s2 = scalar_lea.smem %s0, 1
  %s3 = sld [smem:[%s2]]
  %s4 = scalar_lea.smem %s0, 2
  %s5 = sld [smem:[%s4]]
  %s6 = scalar_lea.smem %s0, 3
  %s7 = sld [smem:[%s6]]
  %s8 = scalar_lea.smem %s0, 4
  %s9 = sld [smem:[%s8]]
  %s10 = scalar_lea.smem %s0, 5
  %s11 = sld [smem:[%s10]]
  %s12 = scalar_lea.smem %s0, 6
  %s13 = sld [smem:[%s12]]
  %s14 = scalar_lea.smem %s0, 7
  %s15 = sld [smem:[%s14]]
  %s16 = scalar_lea.smem %s0, 8
  %s17 = sld [smem:[%s16]]
  %s18 = scalar_lea.smem %s0, 9
  %s19 = sld [smem:[%s18]]
  %s20 = scalar_lea.smem %s0, 10
  %s21 = sld [smem:[%s20]]
  %s22 = scalar_lea.smem %s0, 11
  %s23 = sld [smem:[%s22]]
  %s24 = scalar_lea.smem %s0, 12
  %s25 = sld [smem:[%s24]]
  %s26 = scalar_lea.smem %s0, 13
  %s27 = sld [smem:[%s26]]
  %s28 = scalar_lea.smem %s0, 14
  %s29 = sld [smem:[%s28]]
  %s30 = scalar_lea.smem %s0, 15
  %s31 = sld [smem:[%s30]]
  %s32 = scalar_lea.smem %s0, 16
  %s33 = sld [smem:[%s32]]
  %s34 = scalar_lea.smem %s0, 17
  %s35 = sld [smem:[%s34]]
  %s36 = scalar_lea.smem %s0, 18
  %s37 = sld [smem:[%s36]]
  %s38 = scalar_lea.smem %s0, 19
  %s39 = sld [smem:[%s38]]
  %s40 = scalar_lea.smem %s0, 20
  %s41 = sld [smem:[%s40]]
  %s42 = scalar_lea.smem %s0, 21
  %s43 = sld [smem:[%s42]]
  %s44 = scalar_lea.smem %s0, 22
  %s45 = sld [smem:[%s44]]
  %s46 = scalar_lea.smem %s0, 23
  %s47 = sld [smem:[%s46]]
  %s48 = scalar_lea.smem %s0, 24
  %s49 = sld [smem:[%s48]]
  %s50 = scalar_lea.smem %s0, 25
  %s51 = sld [smem:[%s50]]
  %s52 = scalar_lea.smem %s0, 26
  %s53 = sld [smem:[%s52]]
  %s54 = scalar_lea.smem %s0, 27
  %s55 = sld [smem:[%s54]]
  %s56 = scalar_lea.smem %s0, 28
  %s57 = sld [smem:[%s56]]
  %s58 = scalar_lea.smem %s0, 29
  %s59 = sld [smem:[%s58]]
  %s60 = scalar_lea.smem %s0, 30
  %s61 = sld [smem:[%s60]]
  %s62 = sld [smem:[#allocation0]]
  $region160: #{tpu_custom_call.1} parent=0
    _
  %s64 = ssub.s32 1, %s62
  %s65 = scalar_select 0, %s64, %s62
  $region1: #{tpu_custom_call.1} parent=0
    #allocation4 [shape = 'u8[40960]{0}', space=vmem, size = 0xa000, scoped, tag = 'output window, operand 0, single buffered']
    #allocation5 [shape = 's32[1]{0}', space=sflag, size = 0x4, scoped, tag = 'scoped memory for tpu_custom_call.1']
    %66 = vsyncpa [#allocation5], 0
    // Predicated region
    $region2: #{tpu_custom_call.1} parent=1 // pred_check
      _
    $region3: #{tpu_custom_call.1} parent=1 // pred_check_branch
      %68 = sbr.rel (0) target = $region5
    $region4: #{tpu_custom_call.1} parent=1 // pred_region
      _
    $region5: #{tpu_custom_call.1} parent=1 // pred_fallthru
      _
    // Predicated region
    $region6: #{tpu_custom_call.1} parent=1 // pred_check
      _
    $region7: #{tpu_custom_call.1} parent=1 // pred_check_branch
      %70 = sbr.rel (0) target = $region9
    $region8: #{tpu_custom_call.1} parent=1 // pred_region
      _
    $region9: #{tpu_custom_call.1} parent=1 // pred_fallthru
      _
    // Predicated region
    $region10: #{tpu_custom_call.1} parent=1 // pred_check
      _
    $region11: #{tpu_custom_call.1} parent=1 // pred_check_branch
      %72 = sbr.rel (0) target = $region13
    $region12: #{tpu_custom_call.1} parent=1 // pred_region
      _
    $region13: #{tpu_custom_call.1} parent=1 // pred_fallthru
      _
    // Predicated region
    $region14: #{tpu_custom_call.1} parent=1 // pred_check
      _
    $region15: #{tpu_custom_call.1} parent=1 // pred_check_branch
      %74 = sbr.rel (0) target = $region17
    $region16: #{tpu_custom_call.1} parent=1 // pred_region
      _
    $region17: #{tpu_custom_call.1} parent=1 // pred_fallthru
      _
    // Predicated region
    $region18: #{tpu_custom_call.1} parent=1 // pred_check
      _
    $region19: #{tpu_custom_call.1} parent=1 // pred_check_branch
      %76 = sbr.rel (0) target = $region21
    $region20: #{tpu_custom_call.1} parent=1 // pred_region
      _
    $region21: #{tpu_custom_call.1} parent=1 // pred_fallthru
      _
    // Predicated region
    $region22: #{tpu_custom_call.1} parent=1 // pred_check
      _
    $region23: #{tpu_custom_call.1} parent=1 // pred_check_branch
      %78 = sbr.rel (0) target = $region25
    $region24: #{tpu_custom_call.1} parent=1 // pred_region
      _
    $region25: #{tpu_custom_call.1} parent=1 // pred_fallthru
      _
    // Predicated region
    $region26: #{tpu_custom_call.1} parent=1 // pred_check
      _
    $region27: #{tpu_custom_call.1} parent=1 // pred_check_branch
      %80 = sbr.rel (0) target = $region29
    $region28: #{tpu_custom_call.1} parent=1 // pred_region
      _
    $region29: #{tpu_custom_call.1} parent=1 // pred_fallthru
      _
    // Predicated region
    $region30: #{tpu_custom_call.1} parent=1 // pred_check
      _
    $region31: #{tpu_custom_call.1} parent=1 // pred_check_branch
      %82 = sbr.rel (0) target = $region33
    $region32: #{tpu_custom_call.1} parent=1 // pred_region
      _
    $region33: #{tpu_custom_call.1} parent=1 // pred_fallthru
      _
    // Predicated region
    $region34: #{tpu_custom_call.1} parent=1 // pred_check
      _
    $region35: #{tpu_custom_call.1} parent=1 // pred_check_branch
      %84 = sbr.rel (0) target = $region37
    $region36: #{tpu_custom_call.1} parent=1 // pred_region
      _
    $region37: #{tpu_custom_call.1} parent=1 // pred_fallthru
      _
    // Predicated region
    $region38: #{tpu_custom_call.1} parent=1 // pred_check
      _
    $region39: #{tpu_custom_call.1} parent=1 // pred_check_branch
      %86 = sbr.rel (0) target = $region41
    $region40: #{tpu_custom_call.1} parent=1 // pred_region
      _
    $region41: #{tpu_custom_call.1} parent=1 // pred_fallthru
      _
    // Predicated region
    $region42: #{tpu_custom_call.1} parent=1 // pred_check
      _
    $region43: #{tpu_custom_call.1} parent=1 // pred_check_branch
      %88 = sbr.rel (0) target = $region45
    $region44: #{tpu_custom_call.1} parent=1 // pred_region
      _
    $region45: #{tpu_custom_call.1} parent=1 // pred_fallthru
      _
    // Predicated region
    $region46: #{tpu_custom_call.1} parent=1 // pred_check
      _
    $region47: #{tpu_custom_call.1} parent=1 // pred_check_branch
      %90 = sbr.rel (0) target = $region49
    $region48: #{tpu_custom_call.1} parent=1 // pred_region
      _
    $region49: #{tpu_custom_call.1} parent=1 // pred_fallthru
      _
    // Predicated region
    $region50: #{tpu_custom_call.1} parent=1 // pred_check
      _
    $region51: #{tpu_custom_call.1} parent=1 // pred_check_branch
      %92 = sbr.rel (0) target = $region53
    $region52: #{tpu_custom_call.1} parent=1 // pred_region
      _
    $region53: #{tpu_custom_call.1} parent=1 // pred_fallthru
      _
    // Predicated region
    $region54: #{tpu_custom_call.1} parent=1 // pred_check
      _
    $region55: #{tpu_custom_call.1} parent=1 // pred_check_branch
      %94 = sbr.rel (0) target = $region57
    $region56: #{tpu_custom_call.1} parent=1 // pred_region
      _
    $region57: #{tpu_custom_call.1} parent=1 // pred_fallthru
      _
    // Predicated region
    $region58: #{tpu_custom_call.1} parent=1 // pred_check
      _
    $region59: #{tpu_custom_call.1} parent=1 // pred_check_branch
      %96 = sbr.rel (0) target = $region61
    $region60: #{tpu_custom_call.1} parent=1 // pred_region
      _
    $region61: #{tpu_custom_call.1} parent=1 // pred_fallthru
      _
    // Predicated region
    $region62: #{tpu_custom_call.1} parent=1 // pred_check
      _
    $region63: #{tpu_custom_call.1} parent=1 // pred_check_branch
      %98 = sbr.rel (0) target = $region65
    $region64: #{tpu_custom_call.1} parent=1 // pred_region
      _
    $region65: #{tpu_custom_call.1} parent=1 // pred_fallthru
      _
    // Predicated region
    $region66: #{tpu_custom_call.1} parent=1 // pred_check
      _
    $region67: #{tpu_custom_call.1} parent=1 // pred_check_branch
      %100 = sbr.rel (0) target = $region69
    $region68: #{tpu_custom_call.1} parent=1 // pred_region
      _
    $region69: #{tpu_custom_call.1} parent=1 // pred_fallthru
      _
    // Predicated region
    $region70: #{tpu_custom_call.1} parent=1 // pred_check
      _
    $region71: #{tpu_custom_call.1} parent=1 // pred_check_branch
      %102 = sbr.rel (0) target = $region73
    $region72: #{tpu_custom_call.1} parent=1 // pred_region
      _
    $region73: #{tpu_custom_call.1} parent=1 // pred_fallthru
      _
    // Predicated region
    $region74: #{tpu_custom_call.1} parent=1 // pred_check
      _
    $region75: #{tpu_custom_call.1} parent=1 // pred_check_branch
      %104 = sbr.rel (0) target = $region77
    $region76: #{tpu_custom_call.1} parent=1 // pred_region
      _
    $region77: #{tpu_custom_call.1} parent=1 // pred_fallthru
      _
    // Predicated region
    $region78: #{tpu_custom_call.1} parent=1 // pred_check
      _
    $region79: #{tpu_custom_call.1} parent=1 // pred_check_branch
      %106 = sbr.rel (0) target = $region81
    $region80: #{tpu_custom_call.1} parent=1 // pred_region
      _
    $region81: #{tpu_custom_call.1} parent=1 // pred_fallthru
      _
    // Predicated region
    $region82: #{tpu_custom_call.1} parent=1 // pred_check
      _
    $region83: #{tpu_custom_call.1} parent=1 // pred_check_branch
      %108 = sbr.rel (0) target = $region85
    $region84: #{tpu_custom_call.1} parent=1 // pred_region
      _
    $region85: #{tpu_custom_call.1} parent=1 // pred_fallthru
      _
    // Predicated region
    $region86: #{tpu_custom_call.1} parent=1 // pred_check
      _
    $region87: #{tpu_custom_call.1} parent=1 // pred_check_branch
      %110 = sbr.rel (0) target = $region89
    $region88: #{tpu_custom_call.1} parent=1 // pred_region
      _
    $region89: #{tpu_custom_call.1} parent=1 // pred_fallthru
      _
    // Predicated region
    $region90: #{tpu_custom_call.1} parent=1 // pred_check
      _
    $region91: #{tpu_custom_call.1} parent=1 // pred_check_branch
      %112 = sbr.rel (0) target = $region93
    $region92: #{tpu_custom_call.1} parent=1 // pred_region
      _
    $region93: #{tpu_custom_call.1} parent=1 // pred_fallthru
      _
    // Predicated region
    $region94: #{tpu_custom_call.1} parent=1 // pred_check
      _
    $region95: #{tpu_custom_call.1} parent=1 // pred_check_branch
      %114 = sbr.rel (0) target = $region97
    $region96: #{tpu_custom_call.1} parent=1 // pred_region
      _
    $region97: #{tpu_custom_call.1} parent=1 // pred_fallthru
      _
    // Predicated region
    $region98: #{tpu_custom_call.1} parent=1 // pred_check
      _
    $region99: #{tpu_custom_call.1} parent=1 // pred_check_branch
      %116 = sbr.rel (0) target = $region101
    $region100: #{tpu_custom_call.1} parent=1 // pred_region
      _
    $region101: #{tpu_custom_call.1} parent=1 // pred_fallthru
      _
    // Predicated region
    $region102: #{tpu_custom_call.1} parent=1 // pred_check
      _
    $region103: #{tpu_custom_call.1} parent=1 // pred_check_branch
      %118 = sbr.rel (0) target = $region105
    $region104: #{tpu_custom_call.1} parent=1 // pred_region
      _
    $region105: #{tpu_custom_call.1} parent=1 // pred_fallthru
      _
    // Predicated region
    $region106: #{tpu_custom_call.1} parent=1 // pred_check
      _
    $region107: #{tpu_custom_call.1} parent=1 // pred_check_branch
      %120 = sbr.rel (0) target = $region109
    $region108: #{tpu_custom_call.1} parent=1 // pred_region
      _
    $region109: #{tpu_custom_call.1} parent=1 // pred_fallthru
      _
    // Predicated region
    $region110: #{tpu_custom_call.1} parent=1 // pred_check
      _
    $region111: #{tpu_custom_call.1} parent=1 // pred_check_branch
      %122 = sbr.rel (0) target = $region113
    $region112: #{tpu_custom_call.1} parent=1 // pred_region
      _
    $region113: #{tpu_custom_call.1} parent=1 // pred_fallthru
      _
    // Predicated region
    $region114: #{tpu_custom_call.1} parent=1 // pred_check
      _
    $region115: #{tpu_custom_call.1} parent=1 // pred_check_branch
      %124 = sbr.rel (0) target = $region117
    $region116: #{tpu_custom_call.1} parent=1 // pred_region
      _
    $region117: #{tpu_custom_call.1} parent=1 // pred_fallthru
      _
    // Predicated region
    $region118: #{tpu_custom_call.1} parent=1 // pred_check
      _
    $region119: #{tpu_custom_call.1} parent=1 // pred_check_branch
      %127 = sbr.rel (0) target = $region121
    $region120: #{tpu_custom_call.1} parent=1 // pred_region
      // Predicated region
      $region133: #{tpu_custom_call.1} parent=120 // pred_check
        _
      $region134: #{tpu_custom_call.1} parent=120 // pred_check_branch
        %143 = sbr.rel (0) target = $region136
      $region135: #{tpu_custom_call.1} parent=120 // pred_region
        loop: start=0, step=1, limit=1
        $region137: #{tpu_custom_call.1} parent=135 // loop_pre_header
          _
        $region138: #{tpu_custom_call.1} parent=135 // loop_header
          %s145 = sphi 0, %s149
          %p146 = scmp.ge.s32.totalorder %s145, 1
          %s150 = sphi %s1, %s1
          %s151 = sphi [#allocation2], [#allocation2]
        $region139: #{tpu_custom_call.1} parent=135 // loop_header_branch
          %148 = sbr.rel (%p146) target = $region143
        $region140: #{tpu_custom_call.1} parent=135 // loop_body
          %v152 = vld [vmem:[%s150] sm:$0xff]
          %153 = vst [vmem:[%s151] sm:$0xff] %v152
        $region141: #{tpu_custom_call.1} parent=135 // loop_footer
          %s149 = sadd.s32 1, %s145
        $region142: #{tpu_custom_call.1} parent=135 // loop_footer_branch
          %144 = sbr.rel target = $region138
        $region143: #{tpu_custom_call.1} parent=135 // loop_exit
          _
      $region136: #{tpu_custom_call.1} parent=120 // pred_fallthru
        _
      // Predicated region
      $region144: #{tpu_custom_call.1} parent=120 // pred_check
        _
      $region145: #{tpu_custom_call.1} parent=120 // pred_check_branch
        %155 = sbr.rel target = $region147
      $region146: #{tpu_custom_call.1} parent=120 // pred_region
        _
      $region147: #{tpu_custom_call.1} parent=120 // pred_fallthru
        _
    $region121: #{tpu_custom_call.1} parent=1 // pred_fallthru
      _
    // Predicated region
    $region122: #{tpu_custom_call.1} parent=1 // pred_check
      _
    $region123: #{tpu_custom_call.1} parent=1 // pred_check_branch
      %129 = sbr.rel target = $region125
    $region124: #{tpu_custom_call.1} parent=1 // pred_region
      %s131 = ssub.s32 256, 1
      loop: start=0, step=1, limit=1
      $region126: #{tpu_custom_call.1} parent=124 // loop_pre_header
        _
      $region127: #{tpu_custom_call.1} parent=124 // loop_header
        %s133 = sphi 0, %s137
        %p134 = scmp.ge.s32.totalorder %s133, 1
        %s138 = sphi %s1, %s1
        %s139 = sphi [#allocation2], [#allocation2]
      $region128: #{tpu_custom_call.1} parent=124 // loop_header_branch
        %136 = sbr.rel (%p134) target = $region132
      $region129: #{tpu_custom_call.1} parent=124 // loop_body
        %v140 = vld [vmem:[%s138] sm:%s131]
        %141 = vst [vmem:[%s139] sm:%s131] %v140
      $region130: #{tpu_custom_call.1} parent=124 // loop_footer
        %s137 = sadd.s32 1, %s133
      $region131: #{tpu_custom_call.1} parent=124 // loop_footer_branch
        %132 = sbr.rel target = $region127
      $region132: #{tpu_custom_call.1} parent=124 // loop_exit
        _
    $region125: #{tpu_custom_call.1} parent=1 // pred_fallthru
      _
    // Predicated region
    $region148: #{tpu_custom_call.1} parent=1 // pred_check
      _
    $region149: #{tpu_custom_call.1} parent=1 // pred_check_branch
      %158 = sbr.rel (0) target = $region151
    $region150: #{tpu_custom_call.1} parent=1 // pred_region
      %159 = vsyncadd [#allocation3], 128
    $region151: #{tpu_custom_call.1} parent=1 // pred_fallthru
      _
    %v160 = vld [vmem:[%s5] sm:$0xff]
    %v161 = vld [vmem:[%s5 + $0x8] sm:$0xff]
    %v162 = vld [vmem:[%s3] sm:$0xff]
    %v163 = vld [vmem:[%s3 + $0x8] sm:$0xff]
    %v164 = vld [vmem:[%s11] sm:$0xf]
    %v165 = vld [vmem:[%s11 + $0x4] sm:$0xf]
    %v166 = vld [vmem:[%s13] sm:$0x1]
    %v167 = vld [vmem:[%s15] sm:$0xf]
    %v168 = vld [vmem:[%s15 + $0x4] sm:$0xf]
    %v169 = vld [vmem:[%s17] sm:$0x1]
    %v170 = vld [vmem:[%s19] sm:$0xf]
    %v171 = vld [vmem:[%s19 + $0x4] sm:$0xf]
    %v172 = vpack.c.bf16 %v163, %v162
    %v174 = vperm.slane %v166, 0
    %v178 = vunpack.c.l.b16 %v164
    %v179 = vunpack.c.l.b16 %v165
    %v180 = vpack.c.b16 %v179, %v178
    %vm182 = vcmask 130048
    %v184 = vsel %vm182, %v172, 0
    %186 = vmatpush.bf16.msra.mxu0 0
    %187 = vmatpush.bf16.msra.mxu0 0
    %188 = vmatpush.bf16.msra.mxu0 0
    %189 = vmatpush.bf16.msra.mxu0 0
    %190 = vmatpush.bf16.msra.mxu0 0
    %191 = vmatpush.bf16.msra.mxu0 0
    %192 = vmatpush.bf16.msra.mxu0 0
    %193 = vmatpush.bf16.msra.mxu0 %v180
    %194 = vmatmul.bf16.gmra.mxu0 %v184
    %v195 = vpop.f32.mrf.mxu0
    %v196 = vadd.f32 %v174, %v195
    %v197 = vpop.f32.mrf.mxu0
    %v198 = vadd.f32 %v174, %v197
    %199 = vdwg.mxu0
    %v200 = vmax.f32 %v196, 0.0
    %v201 = vmax.f32 %v198, 0.0
    %s202 = smul.u32 4, 2
    %s203 = smul.u32 %s202, 1
    %s204 = sshll.u32 %s203, 4
    %205 = dma.done [#allocation3], %s204
    %v206 = vld [vmem:[#allocation2] sm:$0xf]
    %v207 = vld [vmem:[#allocation2 + $0x4] sm:$0xf]
    %v208 = vpack.c.bf16 %v201, %v200
    %v211 = vunpack.c.l.b16 %v206
    %v212 = vunpack.c.l.b16 %v207
    %v213 = vpack.c.b16 %v212, %v211
    %v215 = vsel %vm182, %v213, 0
    %217 = vmatpush.bf16.msra.mxu0 0
    %218 = vmatpush.bf16.msra.mxu0 0
    %219 = vmatpush.bf16.msra.mxu0 0
    %220 = vmatpush.bf16.msra.mxu0 0
    %221 = vmatpush.bf16.msra.mxu0 0
    %222 = vmatpush.bf16.msra.mxu0 0
    %223 = vmatpush.bf16.msra.mxu0 0
    %224 = vmatpush.bf16.msra.mxu0 %v208
    %225 = vmatmul.bf16.gmra.mxu0 %v215
    %v226 = vpop.f32.mrf.mxu0
    %v227 = vadd.f32 0.0, %v226
    %v228 = vpop.f32.mrf.mxu0
    %v229 = vadd.f32 0.0, %v228
    %230 = vdwg.mxu0
    %232 = vset.pattern.permute.xlu0 0
    %233 = vperm.xlu0 %232, %v160
    %v234 = vpop.permute.xlu0 %233
    %237 = vset.pattern.permute.xlu0 0
    %238 = vperm.xlu0 %237, %v161
    %v239 = vpop.permute.xlu0 %238
    %v241 = vmul.f32 %v227, %v234
    %v242 = vmul.f32 %v229, %v239
    %v243 = vpack.c.bf16 %v242, %v241
    %v245 = vperm.slane %v169, 0
    %v249 = vunpack.c.l.b16 %v167
    %v250 = vunpack.c.l.b16 %v168
    %v251 = vpack.c.b16 %v250, %v249
    %v254 = vsel %vm182, %v243, 0
    %256 = vmatpush.bf16.msra.mxu0 0
    %257 = vmatpush.bf16.msra.mxu0 0
    %258 = vmatpush.bf16.msra.mxu0 0
    %259 = vmatpush.bf16.msra.mxu0 0
    %260 = vmatpush.bf16.msra.mxu0 0
    %261 = vmatpush.bf16.msra.mxu0 0
    %262 = vmatpush.bf16.msra.mxu0 0
    %263 = vmatpush.bf16.msra.mxu0 %v251
    %264 = vmatmul.bf16.gmra.mxu0 %v254
    %v265 = vpop.f32.mrf.mxu0
    %v266 = vadd.f32 %v245, %v265
    %v267 = vpop.f32.mrf.mxu0
    %v268 = vadd.f32 %v245, %v267
    %269 = vdwg.mxu0
    %v272 = vunpack.c.l.b16 %v170
    %v273 = vunpack.c.l.b16 %v171
    %v274 = vpack.c.b16 %v273, %v272
    %276 = vmatpush.bf16.msra.mxu0 0
    %277 = vmatpush.bf16.msra.mxu0 0
    %278 = vmatpush.bf16.msra.mxu0 0
    %279 = vmatpush.bf16.msra.mxu0 0
    %280 = vmatpush.bf16.msra.mxu0 0
    %281 = vmatpush.bf16.msra.mxu0 0
    %282 = vmatpush.bf16.msra.mxu0 0
    %283 = vmatpush.bf16.msra.mxu0 %v274
    %284 = vmatmul.bf16.gmra.mxu0 %v184
    %v285 = vpop.f32.mrf.mxu0
    %v286 = vadd.f32 0.0, %v285
    %v287 = vpop.f32.mrf.mxu0
    %v288 = vadd.f32 0.0, %v287
    %289 = vdwg.mxu0
    %v290 = vadd.f32 %v266, %v286
    %v291 = vadd.f32 %v268, %v288
    %v292 = vmul.f32 %v290, %v290
    %v293 = vmul.f32 %v291, %v291
    %vm294 = vcmask 523264
    %v295 = vsel %vm294, %v292, 0.0
    %296 = vadd.xlane.f32.xlu0 %v295
    %v297 = vpop.xlane.xlu0 %296
    %v298 = vsel %vm294, %v293, 0.0
    %299 = vadd.xlane.f32.xlu0 %v298
    %v300 = vpop.xlane.xlu0 %299
    %v301 = vmax.f32 %v297, 1e-24
    %v302 = vmax.f32 %v300, 1e-24
    %v303 = vrsqrt.pop %v301
    %v304 = vmul.f32 %v303, %v301
    %v305 = vmul.f32 %v304, %v303
    %v306 = vmul.f32 0.5, %v305
    %v307 = vsub.f32 1.5, %v306
    %v308 = vmul.f32 %v303, %v307
    %vm309 = vweird.f32 %v301
    %vm310 = vweird.f32 %v303
    %vm311 = vmor %vm309, %vm310
    %v312 = vsel %vm311, %v303, %v308
    %v313 = vrsqrt.pop %v302
    %v314 = vmul.f32 %v313, %v302
    %v315 = vmul.f32 %v314, %v313
    %v316 = vmul.f32 0.5, %v315
    %v317 = vsub.f32 1.5, %v316
    %v318 = vmul.f32 %v313, %v317
    %vm319 = vweird.f32 %v302
    %vm320 = vweird.f32 %v313
    %vm321 = vmor %vm319, %vm320
    %v322 = vsel %vm321, %v313, %v318
    %v323 = vmul.f32 %v290, %v312
    %v324 = vmul.f32 %v291, %v322
    %v325 = vxor.u32 %v323, 2147483648
    %v326 = vxor.u32 %v324, 2147483648
    %v327 = vmul.f32 %v325, 1.442695
    %v328 = vpow.pop %v327
    %v329 = vmul.f32 %v326, 1.442695
    %v330 = vpow.pop %v329
    %v331 = vadd.f32 %v328, 1.0
    %v332 = vadd.f32 %v330, 1.0
    %v333 = vrcp.pop %v331
    %v334 = vmul.f32 %v331, %v333
    %v335 = vsub.f32 1.0, %v334
    %v336 = vmul.f32 %v333, %v335
    %v337 = vadd.f32 %v333, %v336
    %vm338 = vweird.f32 %v331
    %vm339 = vweird.f32 %v333
    %vm340 = vmor %vm338, %vm339
    %v341 = vsel %vm340, %v333, %v337
    %v342 = vand.u32 2147483647, %v331
    %vm343 = vcmp.eq.f32.partialorder %v342, 8.507059e+37
    %v344 = vand.u32 %v331, 2147483648
    %v345 = vor.u32 1.1754944e-38, %v344
    %v346 = vsel %vm343, %v345, %v341
    %v347 = vmul.f32 1.0, %v346
    %v348 = vrcp.pop %v332
    %v349 = vmul.f32 %v332, %v348
    %v350 = vsub.f32 1.0, %v349
    %v351 = vmul.f32 %v348, %v350
    %v352 = vadd.f32 %v348, %v351
    %vm353 = vweird.f32 %v332
    %vm354 = vweird.f32 %v348
    %vm355 = vmor %vm353, %vm354
    %v356 = vsel %vm355, %v348, %v352
    %v357 = vand.u32 2147483647, %v332
    %vm358 = vcmp.eq.f32.partialorder %v357, 8.507059e+37
    %v359 = vand.u32 %v332, 2147483648
    %v360 = vor.u32 1.1754944e-38, %v359
    %v361 = vsel %vm358, %v360, %v356
    %v362 = vmul.f32 1.0, %v361
    %v363 = vmul.f32 %v323, %v347
    %v364 = vmul.f32 %v324, %v362
    %v365 = vsel %vm294, %v363, 0.0
    %366 = vadd.xlane.f32.xlu0 %v365
    %v367 = vpop.xlane.xlu0 %366
    %v368 = vsel %vm294, %v364, 0.0
    %369 = vadd.xlane.f32.xlu0 %v368
    %v370 = vpop.xlane.xlu0 %369
    %v371 = vrcp.pop 64.0
    %v372 = vmul.f32 64.0, %v371
    %v373 = vsub.f32 1.0, %v372
    %v374 = vmul.f32 %v371, %v373
    %v375 = vadd.f32 %v371, %v374
    %vm376 = vweird.f32 %v371
    %v377 = vsel %vm376, %v371, %v375
    %v378 = vmul.f32 %v367, %v377
    %v379 = vmul.f32 %v370, %v377
    %v380 = vsub.f32 %v363, %v378
    %v381 = vsub.f32 %v364, %v379
    %v382 = vmul.f32 %v380, %v380
    %v383 = vmul.f32 %v381, %v381
    %v384 = vsel %vm294, %v382, 0.0
    %385 = vadd.xlane.f32.xlu0 %v384
    %v386 = vpop.xlane.xlu0 %385
    %v387 = vsel %vm294, %v383, 0.0
    %388 = vadd.xlane.f32.xlu0 %v387
    %v389 = vpop.xlane.xlu0 %388
    %v390 = vmul.f32 %v386, %v377
    %v391 = vmul.f32 %v389, %v377
    %v392 = vadd.f32 %v390, 1e-05
    %v393 = vadd.f32 %v391, 1e-05
    %v394 = vrsqrt.pop %v392
    %v395 = vmul.f32 %v394, %v392
    %v396 = vmul.f32 %v395, %v394
    %v397 = vmul.f32 0.5, %v396
    %v398 = vsub.f32 1.5, %v397
    %v399 = vmul.f32 %v394, %v398
    %vm400 = vweird.f32 %v392
    %vm401 = vweird.f32 %v394
    %vm402 = vmor %vm400, %vm401
    %v403 = vsel %vm402, %v394, %v399
    %v404 = vrsqrt.pop %v393
    %v405 = vmul.f32 %v404, %v393
    %v406 = vmul.f32 %v405, %v404
    %v407 = vmul.f32 0.5, %v406
    %v408 = vsub.f32 1.5, %v407
    %v409 = vmul.f32 %v404, %v408
    %vm410 = vweird.f32 %v393
    %vm411 = vweird.f32 %v404
    %vm412 = vmor %vm410, %vm411
    %v413 = vsel %vm412, %v404, %v409
    %v414 = vmul.f32 %v380, %v403
    %v415 = vmul.f32 %v381, %v413
    %v416 = vld [vmem:[%s7] sm:$0x1]
    %v418 = vperm.slane %v416, 0
    %v420 = vmul.f32 %v414, %v418
    %v421 = vmul.f32 %v415, %v418
    %v422 = vld [vmem:[%s9] sm:$0x1]
    %v424 = vperm.slane %v422, 0
    %v426 = vadd.f32 %v420, %v424
    %v427 = vadd.f32 %v421, %v424
    %v428 = vld [vmem:[%s21] sm:$0xf]
    %v429 = vld [vmem:[%s21 + $0x4] sm:$0xf]
    %v430 = vld [vmem:[%s21 + $0x8] sm:$0xf]
    %v431 = vld [vmem:[%s21 + $0xc] sm:$0xf]
    %v432 = vld [vmem:[%s21 + $0x10] sm:$0xf]
    %v433 = vld [vmem:[%s21 + $0x14] sm:$0xf]
    %v434 = vld [vmem:[%s21 + $0x18] sm:$0xf]
    %v435 = vld [vmem:[%s21 + $0x1c] sm:$0xf]
    %v436 = vld [vmem:[%s23] sm:$0x1]
    %v437 = vld [vmem:[%s25] sm:$0xf]
    %v438 = vld [vmem:[%s25 + $0x4] sm:$0xf]
    %v439 = vld [vmem:[%s25 + $0x8] sm:$0xf]
    %v440 = vld [vmem:[%s25 + $0xc] sm:$0xf]
    %v441 = vld [vmem:[%s25 + $0x10] sm:$0xf]
    %v442 = vld [vmem:[%s25 + $0x14] sm:$0xf]
    %v443 = vld [vmem:[%s25 + $0x18] sm:$0xf]
    %v444 = vld [vmem:[%s25 + $0x1c] sm:$0xf]
    %v445 = vld [vmem:[%s27] sm:$0x1]
    %v446 = vld [vmem:[%s29] sm:$0xf]
    %v447 = vld [vmem:[%s29 + $0x4] sm:$0xf]
    %v448 = vld [vmem:[%s29 + $0x8] sm:$0xf]
    %v449 = vld [vmem:[%s29 + $0xc] sm:$0xf]
    %v450 = vld [vmem:[%s29 + $0x10] sm:$0xf]
    %v451 = vld [vmem:[%s29 + $0x14] sm:$0xf]
    %v452 = vld [vmem:[%s29 + $0x18] sm:$0xf]
    %v453 = vld [vmem:[%s29 + $0x1c] sm:$0xf]
    %v454 = vpack.c.bf16 %v427, %v426
    %v456 = vperm.slane %v436, 0
    %v466 = vunpack.c.l.b16 %v428
    %v467 = vunpack.c.l.b16 %v429
    %v468 = vunpack.c.l.b16 %v430
    %v469 = vunpack.c.l.b16 %v431
    %v470 = vunpack.c.l.b16 %v432
    %v471 = vunpack.c.l.b16 %v433
    %v472 = vunpack.c.l.b16 %v434
    %v473 = vunpack.c.l.b16 %v435
    %v474 = vpack.c.b16 %v467, %v466
    %v475 = vpack.c.b16 %v469, %v468
    %v476 = vpack.c.b16 %v471, %v470
    %v477 = vpack.c.b16 %v473, %v472
    %v483 = vsel %vm294, %v454, 0
    %485 = vmatpush.bf16.msra.mxu0 0
    %486 = vmatpush.bf16.msra.mxu0 0
    %487 = vmatpush.bf16.msra.mxu0 0
    %488 = vmatpush.bf16.msra.mxu0 0
    %489 = vmatpush.bf16.msra.mxu0 %v477
    %490 = vmatpush.bf16.msra.mxu0 %v476
    %491 = vmatpush.bf16.msra.mxu0 %v475
    %492 = vmatpush.bf16.msra.mxu0 %v474
    %493 = vmatmul.bf16.gmra.mxu0 %v483
    %v494 = vpop.f32.mrf.mxu0
    %v495 = vadd.f32 %v456, %v494
    %v496 = vpop.f32.mrf.mxu0
    %v497 = vadd.f32 %v456, %v496
    %498 = vdwg.mxu0
    %v499 = vmax.f32 %v495, 0.0
    %v500 = vmax.f32 %v497, 0.0
    %v501 = vpack.c.bf16 %v500, %v499
    %502 = vmatpush.bf16.msra.mxu0 0
    %503 = vmatpush.bf16.msra.mxu0 0
    %504 = vmatpush.bf16.msra.mxu0 0
    %505 = vmatpush.bf16.msra.mxu0 0
    %506 = vmatpush.bf16.msra.mxu0 0
    %507 = vmatpush.bf16.msra.mxu0 0
    %508 = vmatpush.bf16.msra.mxu0 0
    %509 = vmatpush.bf16.msra.mxu0 %v501
    %510 = vmatmul.bf16.gmra.mxu0 %v215
    %v511 = vpop.f32.mrf.mxu0
    %v512 = vadd.f32 0.0, %v511
    %v513 = vpop.f32.mrf.mxu0
    %v514 = vadd.f32 0.0, %v513
    %515 = vdwg.mxu0
    %v516 = vmul.f32 %v512, %v234
    %v517 = vmul.f32 %v514, %v239
    %v518 = vpack.c.bf16 %v517, %v516
    %v520 = vperm.slane %v445, 0
    %v530 = vunpack.c.l.b16 %v437
    %v531 = vunpack.c.l.b16 %v438
    %v532 = vunpack.c.l.b16 %v439
    %v533 = vunpack.c.l.b16 %v440
    %v534 = vunpack.c.l.b16 %v441
    %v535 = vunpack.c.l.b16 %v442
    %v536 = vunpack.c.l.b16 %v443
    %v537 = vunpack.c.l.b16 %v444
    %v538 = vpack.c.b16 %v531, %v530
    %v539 = vpack.c.b16 %v533, %v532
    %v540 = vpack.c.b16 %v535, %v534
    %v541 = vpack.c.b16 %v537, %v536
    %v547 = vsel %vm294, %v518, 0
    %549 = vmatpush.bf16.msra.mxu0 0
    %550 = vmatpush.bf16.msra.mxu0 0
    %551 = vmatpush.bf16.msra.mxu0 0
    %552 = vmatpush.bf16.msra.mxu0 0
    %553 = vmatpush.bf16.msra.mxu0 %v541
    %554 = vmatpush.bf16.msra.mxu0 %v540
    %555 = vmatpush.bf16.msra.mxu0 %v539
    %556 = vmatpush.bf16.msra.mxu0 %v538
    %557 = vmatmul.bf16.gmra.mxu0 %v547
    %v558 = vpop.f32.mrf.mxu0
    %v559 = vadd.f32 %v520, %v558
    %v560 = vpop.f32.mrf.mxu0
    %v561 = vadd.f32 %v520, %v560
    %562 = vdwg.mxu0
    %v571 = vunpack.c.l.b16 %v446
    %v572 = vunpack.c.l.b16 %v447
    %v573 = vunpack.c.l.b16 %v448
    %v574 = vunpack.c.l.b16 %v449
    %v575 = vunpack.c.l.b16 %v450
    %v576 = vunpack.c.l.b16 %v451
    %v577 = vunpack.c.l.b16 %v452
    %v578 = vunpack.c.l.b16 %v453
    %v579 = vpack.c.b16 %v572, %v571
    %v580 = vpack.c.b16 %v574, %v573
    %v581 = vpack.c.b16 %v576, %v575
    %v582 = vpack.c.b16 %v578, %v577
    %587 = vmatpush.bf16.msra.mxu0 0
    %588 = vmatpush.bf16.msra.mxu0 0
    %589 = vmatpush.bf16.msra.mxu0 0
    %590 = vmatpush.bf16.msra.mxu0 0
    %591 = vmatpush.bf16.msra.mxu0 %v582
    %592 = vmatpush.bf16.msra.mxu0 %v581
    %593 = vmatpush.bf16.msra.mxu0 %v580
    %594 = vmatpush.bf16.msra.mxu0 %v579
    %595 = vmatmul.bf16.gmra.mxu0 %v483
    %v596 = vpop.f32.mrf.mxu0
    %v597 = vadd.f32 0.0, %v596
    %v598 = vpop.f32.mrf.mxu0
    %v599 = vadd.f32 0.0, %v598
    %600 = vdwg.mxu0
    %v601 = vadd.f32 %v559, %v597
    %v602 = vadd.f32 %v561, %v599
    %v603 = vmul.f32 %v601, %v601
    %v604 = vmul.f32 %v602, %v602
    %605 = vadd.xlane.f32.xlu0 %v603
    %v606 = vpop.xlane.xlu0 %605
    %607 = vadd.xlane.f32.xlu0 %v604
    %v608 = vpop.xlane.xlu0 %607
    %v609 = vmax.f32 %v606, 1e-24
    %v610 = vmax.f32 %v608, 1e-24
    %v611 = vrsqrt.pop %v609
    %v612 = vmul.f32 %v611, %v609
    %v613 = vmul.f32 %v612, %v611
    %v614 = vmul.f32 0.5, %v613
    %v615 = vsub.f32 1.5, %v614
    %v616 = vmul.f32 %v611, %v615
    %vm617 = vweird.f32 %v609
    %vm618 = vweird.f32 %v611
    %vm619 = vmor %vm617, %vm618
    %v620 = vsel %vm619, %v611, %v616
    %v621 = vrsqrt.pop %v610
    %v622 = vmul.f32 %v621, %v610
    %v623 = vmul.f32 %v622, %v621
    %v624 = vmul.f32 0.5, %v623
    %v625 = vsub.f32 1.5, %v624
    %v626 = vmul.f32 %v621, %v625
    %vm627 = vweird.f32 %v610
    %vm628 = vweird.f32 %v621
    %vm629 = vmor %vm627, %vm628
    %v630 = vsel %vm629, %v621, %v626
    %v631 = vmul.f32 %v601, %v620
    %v632 = vmul.f32 %v602, %v630
    %v633 = vld [vmem:[%s31] sm:$0xf]
    %v634 = vld [vmem:[%s31 + $0x4] sm:$0xf]
    %v635 = vld [vmem:[%s31 + $0x8] sm:$0xf]
    %v636 = vld [vmem:[%s31 + $0xc] sm:$0xf]
    %v637 = vld [vmem:[%s31 + $0x10] sm:$0xf]
    %v638 = vld [vmem:[%s31 + $0x14] sm:$0xf]
    %v639 = vld [vmem:[%s31 + $0x18] sm:$0xf]
    %v640 = vld [vmem:[%s31 + $0x1c] sm:$0xf]
    %v641 = vld [vmem:[%s31 + $0x20] sm:$0xf]
    %v642 = vld [vmem:[%s31 + $0x24] sm:$0xf]
    %v643 = vld [vmem:[%s31 + $0x28] sm:$0xf]
    %v644 = vld [vmem:[%s31 + $0x2c] sm:$0xf]
    %v645 = vld [vmem:[%s31 + $0x30] sm:$0xf]
    %v646 = vld [vmem:[%s31 + $0x34] sm:$0xf]
    %v647 = vld [vmem:[%s31 + $0x38] sm:$0xf]
    %v648 = vld [vmem:[%s31 + $0x3c] sm:$0xf]
    %v649 = vld [vmem:[%s33] sm:$0x1]
    %v650 = vld [vmem:[%s35] sm:$0xff]
    %v651 = vld [vmem:[%s35 + $0x8] sm:$0xff]
    %v652 = vld [vmem:[%s35 + $0x10] sm:$0xff]
    %v653 = vld [vmem:[%s35 + $0x18] sm:$0xff]
    %v654 = vld [vmem:[%s35 + $0x20] sm:$0xff]
    %v655 = vld [vmem:[%s35 + $0x28] sm:$0xff]
    %v656 = vld [vmem:[%s35 + $0x30] sm:$0xff]
    %v657 = vld [vmem:[%s35 + $0x38] sm:$0xff]
    %v658 = vld [vmem:[%s35 + $0x40] sm:$0xff]
    %v659 = vld [vmem:[%s35 + $0x48] sm:$0xff]
    %v660 = vld [vmem:[%s35 + $0x50] sm:$0xff]
    %v661 = vld [vmem:[%s35 + $0x58] sm:$0xff]
    %v662 = vld [vmem:[%s35 + $0x60] sm:$0xff]
    %v663 = vld [vmem:[%s35 + $0x68] sm:$0xff]
    %v664 = vld [vmem:[%s35 + $0x70] sm:$0xff]
    %v665 = vld [vmem:[%s35 + $0x78] sm:$0xff]
    %v666 = vld [vmem:[%s37] sm:$0x3]
    %v667 = vld [vmem:[%s39] sm:$0xff]
    %v668 = vld [vmem:[%s39 + $0x8] sm:$0xff]
    %v669 = vld [vmem:[%s39 + $0x10] sm:$0xff]
    %v670 = vld [vmem:[%s39 + $0x18] sm:$0xff]
    %v671 = vld [vmem:[%s39 + $0x20] sm:$0xff]
    %v672 = vld [vmem:[%s39 + $0x28] sm:$0xff]
    %v673 = vld [vmem:[%s39 + $0x30] sm:$0xff]
    %v674 = vld [vmem:[%s39 + $0x38] sm:$0xff]
    %v675 = vld [vmem:[%s39 + $0x40] sm:$0xff]
    %v676 = vld [vmem:[%s39 + $0x48] sm:$0xff]
    %v677 = vld [vmem:[%s39 + $0x50] sm:$0xff]
    %v678 = vld [vmem:[%s39 + $0x58] sm:$0xff]
    %v679 = vld [vmem:[%s39 + $0x60] sm:$0xff]
    %v680 = vld [vmem:[%s39 + $0x68] sm:$0xff]
    %v681 = vld [vmem:[%s39 + $0x70] sm:$0xff]
    %v682 = vld [vmem:[%s39 + $0x78] sm:$0xff]
    %v683 = vpack.c.bf16 %v632, %v631
    %v685 = vperm.slane %v649, 0
    %v703 = vunpack.c.l.b16 %v633
    %v704 = vunpack.c.l.b16 %v634
    %v705 = vunpack.c.l.b16 %v635
    %v706 = vunpack.c.l.b16 %v636
    %v707 = vunpack.c.l.b16 %v637
    %v708 = vunpack.c.l.b16 %v638
    %v709 = vunpack.c.l.b16 %v639
    %v710 = vunpack.c.l.b16 %v640
    %v711 = vunpack.c.l.b16 %v641
    %v712 = vunpack.c.l.b16 %v642
    %v713 = vunpack.c.l.b16 %v643
    %v714 = vunpack.c.l.b16 %v644
    %v715 = vunpack.c.l.b16 %v645
    %v716 = vunpack.c.l.b16 %v646
    %v717 = vunpack.c.l.b16 %v647
    %v718 = vunpack.c.l.b16 %v648
    %v719 = vpack.c.b16 %v704, %v703
    %v720 = vpack.c.b16 %v706, %v705
    %v721 = vpack.c.b16 %v708, %v707
    %v722 = vpack.c.b16 %v710, %v709
    %v723 = vpack.c.b16 %v712, %v711
    %v724 = vpack.c.b16 %v714, %v713
    %v725 = vpack.c.b16 %v716, %v715
    %v726 = vpack.c.b16 %v718, %v717
    %735 = vmatpush.bf16.msra.mxu0 %v726
    %736 = vmatpush.bf16.msra.mxu0 %v725
    %737 = vmatpush.bf16.msra.mxu0 %v724
    %738 = vmatpush.bf16.msra.mxu0 %v723
    %739 = vmatpush.bf16.msra.mxu0 %v722
    %740 = vmatpush.bf16.msra.mxu0 %v721
    %741 = vmatpush.bf16.msra.mxu0 %v720
    %742 = vmatpush.bf16.msra.mxu0 %v719
    %743 = vmatmul.bf16.gmra.mxu0 %v683
    %v744 = vpop.f32.mrf.mxu0
    %v745 = vadd.f32 %v685, %v744
    %v746 = vpop.f32.mrf.mxu0
    %v747 = vadd.f32 %v685, %v746
    %748 = vdwg.mxu0
    %v749 = vmax.f32 %v745, 0.0
    %v750 = vmax.f32 %v747, 0.0
    %v751 = vpack.c.bf16 %v750, %v749
    %752 = vmatpush.bf16.msra.mxu0 0
    %753 = vmatpush.bf16.msra.mxu0 0
    %754 = vmatpush.bf16.msra.mxu0 0
    %755 = vmatpush.bf16.msra.mxu0 0
    %756 = vmatpush.bf16.msra.mxu0 0
    %757 = vmatpush.bf16.msra.mxu0 0
    %758 = vmatpush.bf16.msra.mxu0 0
    %759 = vmatpush.bf16.msra.mxu0 %v751
    %760 = vmatmul.bf16.gmra.mxu0 %v215
    %v761 = vpop.f32.mrf.mxu0
    %v762 = vadd.f32 0.0, %v761
    %v763 = vpop.f32.mrf.mxu0
    %v764 = vadd.f32 0.0, %v763
    %765 = vdwg.mxu0
    %v766 = vmul.f32 %v762, %v234
    %v767 = vmul.f32 %v764, %v239
    %v768 = vpack.c.bf16 %v767, %v766
    %v770 = vperm.slane %v666, 0
    %v771 = vperm.slane %v666, 1
    %v790 = vunpack.c.l.b16 %v650
    %v791 = vunpack.c.h.b16 %v650
    %v792 = vunpack.c.l.b16 %v651
    %v793 = vunpack.c.h.b16 %v651
    %v794 = vunpack.c.l.b16 %v652
    %v795 = vunpack.c.h.b16 %v652
    %v796 = vunpack.c.l.b16 %v653
    %v797 = vunpack.c.h.b16 %v653
    %v798 = vunpack.c.l.b16 %v654
    %v799 = vunpack.c.h.b16 %v654
    %v800 = vunpack.c.l.b16 %v655
    %v801 = vunpack.c.h.b16 %v655
    %v802 = vunpack.c.l.b16 %v656
    %v803 = vunpack.c.h.b16 %v656
    %v804 = vunpack.c.l.b16 %v657
    %v805 = vunpack.c.h.b16 %v657
    %v806 = vunpack.c.l.b16 %v658
    %v807 = vunpack.c.h.b16 %v658
    %v808 = vunpack.c.l.b16 %v659
    %v809 = vunpack.c.h.b16 %v659
    %v810 = vunpack.c.l.b16 %v660
    %v811 = vunpack.c.h.b16 %v660
    %v812 = vunpack.c.l.b16 %v661
    %v813 = vunpack.c.h.b16 %v661
    %v814 = vunpack.c.l.b16 %v662
    %v815 = vunpack.c.h.b16 %v662
    %v816 = vunpack.c.l.b16 %v663
    %v817 = vunpack.c.h.b16 %v663
    %v818 = vunpack.c.l.b16 %v664
    %v819 = vunpack.c.h.b16 %v664
    %v820 = vunpack.c.l.b16 %v665
    %v821 = vunpack.c.h.b16 %v665
    %v822 = vpack.c.b16 %v792, %v790
    %v823 = vpack.c.b16 %v793, %v791
    %v824 = vpack.c.b16 %v796, %v794
    %v825 = vpack.c.b16 %v797, %v795
    %v826 = vpack.c.b16 %v800, %v798
    %v827 = vpack.c.b16 %v801, %v799
    %v828 = vpack.c.b16 %v804, %v802
    %v829 = vpack.c.b16 %v805, %v803
    %v830 = vpack.c.b16 %v808, %v806
    %v831 = vpack.c.b16 %v809, %v807
    %v832 = vpack.c.b16 %v812, %v810
    %v833 = vpack.c.b16 %v813, %v811
    %v834 = vpack.c.b16 %v816, %v814
    %v835 = vpack.c.b16 %v817, %v815
    %v836 = vpack.c.b16 %v820, %v818
    %v837 = vpack.c.b16 %v821, %v819
    %854 = vmatpush.bf16.msra.mxu0 %v836
    %855 = vmatpush.bf16.msra.mxu0 %v834
    %856 = vmatpush.bf16.msra.mxu0 %v832
    %857 = vmatpush.bf16.msra.mxu0 %v830
    %858 = vmatpush.bf16.msra.mxu0 %v828
    %859 = vmatpush.bf16.msra.mxu0 %v826
    %860 = vmatpush.bf16.msra.mxu0 %v824
    %861 = vmatpush.bf16.msra.mxu0 %v822
    %862 = vmatmul.bf16.gmra.mxu0 %v768
    %v863 = vpop.f32.mrf.mxu0
    %v864 = vadd.f32 %v770, %v863
    %v865 = vpop.f32.mrf.mxu0
    %v866 = vadd.f32 %v770, %v865
    %867 = vdwg.mxu0
    %868 = vmatpush.bf16.msra.mxu0 %v837
    %869 = vmatpush.bf16.msra.mxu0 %v835
    %870 = vmatpush.bf16.msra.mxu0 %v833
    %871 = vmatpush.bf16.msra.mxu0 %v831
    %872 = vmatpush.bf16.msra.mxu0 %v829
    %873 = vmatpush.bf16.msra.mxu0 %v827
    %874 = vmatpush.bf16.msra.mxu0 %v825
    %875 = vmatpush.bf16.msra.mxu0 %v823
    %876 = vmatmul.bf16.gmra.mxu0 %v768
    %v877 = vpop.f32.mrf.mxu0
    %v878 = vadd.f32 %v771, %v877
    %v879 = vpop.f32.mrf.mxu0
    %v880 = vadd.f32 %v771, %v879
    %881 = vdwg.mxu0
    %v898 = vunpack.c.l.b16 %v667
    %v899 = vunpack.c.h.b16 %v667
    %v900 = vunpack.c.l.b16 %v668
    %v901 = vunpack.c.h.b16 %v668
    %v902 = vunpack.c.l.b16 %v669
    %v903 = vunpack.c.h.b16 %v669
    %v904 = vunpack.c.l.b16 %v670
    %v905 = vunpack.c.h.b16 %v670
    %v906 = vunpack.c.l.b16 %v671
    %v907 = vunpack.c.h.b16 %v671
    %v908 = vunpack.c.l.b16 %v672
    %v909 = vunpack.c.h.b16 %v672
    %v910 = vunpack.c.l.b16 %v673
    %v911 = vunpack.c.h.b16 %v673
    %v912 = vunpack.c.l.b16 %v674
    %v913 = vunpack.c.h.b16 %v674
    %v914 = vunpack.c.l.b16 %v675
    %v915 = vunpack.c.h.b16 %v675
    %v916 = vunpack.c.l.b16 %v676
    %v917 = vunpack.c.h.b16 %v676
    %v918 = vunpack.c.l.b16 %v677
    %v919 = vunpack.c.h.b16 %v677
    %v920 = vunpack.c.l.b16 %v678
    %v921 = vunpack.c.h.b16 %v678
    %v922 = vunpack.c.l.b16 %v679
    %v923 = vunpack.c.h.b16 %v679
    %v924 = vunpack.c.l.b16 %v680
    %v925 = vunpack.c.h.b16 %v680
    %v926 = vunpack.c.l.b16 %v681
    %v927 = vunpack.c.h.b16 %v681
    %v928 = vunpack.c.l.b16 %v682
    %v929 = vunpack.c.h.b16 %v682
    %v930 = vpack.c.b16 %v900, %v898
    %v931 = vpack.c.b16 %v901, %v899
    %v932 = vpack.c.b16 %v904, %v902
    %v933 = vpack.c.b16 %v905, %v903
    %v934 = vpack.c.b16 %v908, %v906
    %v935 = vpack.c.b16 %v909, %v907
    %v936 = vpack.c.b16 %v912, %v910
    %v937 = vpack.c.b16 %v913, %v911
    %v938 = vpack.c.b16 %v916, %v914
    %v939 = vpack.c.b16 %v917, %v915
    %v940 = vpack.c.b16 %v920, %v918
    %v941 = vpack.c.b16 %v921, %v919
    %v942 = vpack.c.b16 %v924, %v922
    %v943 = vpack.c.b16 %v925, %v923
    %v944 = vpack.c.b16 %v928, %v926
    %v945 = vpack.c.b16 %v929, %v927
    %962 = vmatpush.bf16.msra.mxu0 %v944
    %963 = vmatpush.bf16.msra.mxu0 %v942
    %964 = vmatpush.bf16.msra.mxu0 %v940
    %965 = vmatpush.bf16.msra.mxu0 %v938
    %966 = vmatpush.bf16.msra.mxu0 %v936
    %967 = vmatpush.bf16.msra.mxu0 %v934
    %968 = vmatpush.bf16.msra.mxu0 %v932
    %969 = vmatpush.bf16.msra.mxu0 %v930
    %970 = vmatmul.bf16.gmra.mxu0 %v683
    %v971 = vpop.f32.mrf.mxu0
    %v972 = vadd.f32 0.0, %v971
    %v973 = vpop.f32.mrf.mxu0
    %v974 = vadd.f32 0.0, %v973
    %975 = vdwg.mxu0
    %976 = vmatpush.bf16.msra.mxu0 %v945
    %977 = vmatpush.bf16.msra.mxu0 %v943
    %978 = vmatpush.bf16.msra.mxu0 %v941
    %979 = vmatpush.bf16.msra.mxu0 %v939
    %980 = vmatpush.bf16.msra.mxu0 %v937
    %981 = vmatpush.bf16.msra.mxu0 %v935
    %982 = vmatpush.bf16.msra.mxu0 %v933
    %983 = vmatpush.bf16.msra.mxu0 %v931
    %984 = vmatmul.bf16.gmra.mxu0 %v683
    %v985 = vpop.f32.mrf.mxu0
    %v986 = vadd.f32 0.0, %v985
    %v987 = vpop.f32.mrf.mxu0
    %v988 = vadd.f32 0.0, %v987
    %989 = vdwg.mxu0
    %v990 = vadd.f32 %v864, %v972
    %v991 = vadd.f32 %v878, %v986
    %v992 = vadd.f32 %v866, %v974
    %v993 = vadd.f32 %v880, %v988
    %v994 = vmul.f32 %v990, %v990
    %v995 = vmul.f32 %v991, %v991
    %v996 = vmul.f32 %v992, %v992
    %v997 = vmul.f32 %v993, %v993
    %v998 = vadd.f32 %v994, %v995
    %999 = vadd.xlane.f32.xlu0 %v998
    %v1000 = vpop.xlane.xlu0 %999
    %v1001 = vadd.f32 %v996, %v997
    %1002 = vadd.xlane.f32.xlu0 %v1001
    %v1003 = vpop.xlane.xlu0 %1002
    %v1004 = vmax.f32 %v1000, 1e-24
    %v1005 = vmax.f32 %v1003, 1e-24
    %v1006 = vrsqrt.pop %v1004
    %v1007 = vmul.f32 %v1006, %v1004
    %v1008 = vmul.f32 %v1007, %v1006
    %v1009 = vmul.f32 0.5, %v1008
    %v1010 = vsub.f32 1.5, %v1009
    %v1011 = vmul.f32 %v1006, %v1010
    %vm1012 = vweird.f32 %v1004
    %vm1013 = vweird.f32 %v1006
    %vm1014 = vmor %vm1012, %vm1013
    %v1015 = vsel %vm1014, %v1006, %v1011
    %v1016 = vrsqrt.pop %v1005
    %v1017 = vmul.f32 %v1016, %v1005
    %v1018 = vmul.f32 %v1017, %v1016
    %v1019 = vmul.f32 0.5, %v1018
    %v1020 = vsub.f32 1.5, %v1019
    %v1021 = vmul.f32 %v1016, %v1020
    %vm1022 = vweird.f32 %v1005
    %vm1023 = vweird.f32 %v1016
    %vm1024 = vmor %vm1022, %vm1023
    %v1025 = vsel %vm1024, %v1016, %v1021
    %v1026 = vmul.f32 %v990, %v1015
    %v1027 = vmul.f32 %v991, %v1015
    %v1028 = vmul.f32 %v992, %v1025
    %v1029 = vmul.f32 %v993, %v1025
    %v1030 = vld [vmem:[%s41] sm:$0xff]
    %v1031 = vld [vmem:[%s41 + $0x8] sm:$0xff]
    %v1032 = vld [vmem:[%s41 + $0x10] sm:$0xff]
    %v1033 = vld [vmem:[%s41 + $0x18] sm:$0xff]
    %v1034 = vld [vmem:[%s41 + $0x20] sm:$0xff]
    %v1035 = vld [vmem:[%s41 + $0x28] sm:$0xff]
    %v1036 = vld [vmem:[%s41 + $0x30] sm:$0xff]
    %v1037 = vld [vmem:[%s41 + $0x38] sm:$0xff]
    %v1038 = vld [vmem:[%s41 + $0x40] sm:$0xff]
    %v1039 = vld [vmem:[%s41 + $0x48] sm:$0xff]
    %v1040 = vld [vmem:[%s41 + $0x50] sm:$0xff]
    %v1041 = vld [vmem:[%s41 + $0x58] sm:$0xff]
    %v1042 = vld [vmem:[%s41 + $0x60] sm:$0xff]
    %v1043 = vld [vmem:[%s41 + $0x68] sm:$0xff]
    %v1044 = vld [vmem:[%s41 + $0x70] sm:$0xff]
    %v1045 = vld [vmem:[%s41 + $0x78] sm:$0xff]
    %v1046 = vld [vmem:[%s41 + $0x80] sm:$0xff]
    %v1047 = vld [vmem:[%s41 + $0x88] sm:$0xff]
    %v1048 = vld [vmem:[%s41 + $0x90] sm:$0xff]
    %v1049 = vld [vmem:[%s41 + $0x98] sm:$0xff]
    %v1050 = vld [vmem:[%s41 + $0xa0] sm:$0xff]
    %v1051 = vld [vmem:[%s41 + $0xa8] sm:$0xff]
    %v1052 = vld [vmem:[%s41 + $0xb0] sm:$0xff]
    %v1053 = vld [vmem:[%s41 + $0xb8] sm:$0xff]
    %v1054 = vld [vmem:[%s41 + $0xc0] sm:$0xff]
    %v1055 = vld [vmem:[%s41 + $0xc8] sm:$0xff]
    %v1056 = vld [vmem:[%s41 + $0xd0] sm:$0xff]
    %v1057 = vld [vmem:[%s41 + $0xd8] sm:$0xff]
    %v1058 = vld [vmem:[%s41 + $0xe0] sm:$0xff]
    %v1059 = vld [vmem:[%s41 + $0xe8] sm:$0xff]
    %v1060 = vld [vmem:[%s41 + $0xf0] sm:$0xff]
    %v1061 = vld [vmem:[%s41 + $0xf8] sm:$0xff]
    %v1062 = vld [vmem:[%s43] sm:$0x3]
    %v1063 = vld [vmem:[%s45] sm:$0xff]
    %v1064 = vld [vmem:[%s45 + $0x8] sm:$0xff]
    %v1065 = vld [vmem:[%s45 + $0x10] sm:$0xff]
    %v1066 = vld [vmem:[%s45 + $0x18] sm:$0xff]
    %v1067 = vld [vmem:[%s45 + $0x20] sm:$0xff]
    %v1068 = vld [vmem:[%s45 + $0x28] sm:$0xff]
    %v1069 = vld [vmem:[%s45 + $0x30] sm:$0xff]
    %v1070 = vld [vmem:[%s45 + $0x38] sm:$0xff]
    %v1071 = vld [vmem:[%s45 + $0x40] sm:$0xff]
    %v1072 = vld [vmem:[%s45 + $0x48] sm:$0xff]
    %v1073 = vld [vmem:[%s45 + $0x50] sm:$0xff]
    %v1074 = vld [vmem:[%s45 + $0x58] sm:$0xff]
    %v1075 = vld [vmem:[%s45 + $0x60] sm:$0xff]
    %v1076 = vld [vmem:[%s45 + $0x68] sm:$0xff]
    %v1077 = vld [vmem:[%s45 + $0x70] sm:$0xff]
    %v1078 = vld [vmem:[%s45 + $0x78] sm:$0xff]
    %v1079 = vld [vmem:[%s45 + $0x80] sm:$0xff]
    %v1080 = vld [vmem:[%s45 + $0x88] sm:$0xff]
    %v1081 = vld [vmem:[%s45 + $0x90] sm:$0xff]
    %v1082 = vld [vmem:[%s45 + $0x98] sm:$0xff]
    %v1083 = vld [vmem:[%s45 + $0xa0] sm:$0xff]
    %v1084 = vld [vmem:[%s45 + $0xa8] sm:$0xff]
    %v1085 = vld [vmem:[%s45 + $0xb0] sm:$0xff]
    %v1086 = vld [vmem:[%s45 + $0xb8] sm:$0xff]
    %v1087 = vld [vmem:[%s45 + $0xc0] sm:$0xff]
    %v1088 = vld [vmem:[%s45 + $0xc8] sm:$0xff]
    %v1089 = vld [vmem:[%s45 + $0xd0] sm:$0xff]
    %v1090 = vld [vmem:[%s45 + $0xd8] sm:$0xff]
    %v1091 = vld [vmem:[%s45 + $0xe0] sm:$0xff]
    %v1092 = vld [vmem:[%s45 + $0xe8] sm:$0xff]
    %v1093 = vld [vmem:[%s45 + $0xf0] sm:$0xff]
    %v1094 = vld [vmem:[%s45 + $0xf8] sm:$0xff]
    %v1095 = vld [vmem:[%s47] sm:$0x3]
    %v1096 = vld [vmem:[%s49] sm:$0xff]
    %v1097 = vld [vmem:[%s49 + $0x8] sm:$0xff]
    %v1098 = vld [vmem:[%s49 + $0x10] sm:$0xff]
    %v1099 = vld [vmem:[%s49 + $0x18] sm:$0xff]
    %v1100 = vld [vmem:[%s49 + $0x20] sm:$0xff]
    %v1101 = vld [vmem:[%s49 + $0x28] sm:$0xff]
    %v1102 = vld [vmem:[%s49 + $0x30] sm:$0xff]
    %v1103 = vld [vmem:[%s49 + $0x38] sm:$0xff]
    %v1104 = vld [vmem:[%s49 + $0x40] sm:$0xff]
    %v1105 = vld [vmem:[%s49 + $0x48] sm:$0xff]
    %v1106 = vld [vmem:[%s49 + $0x50] sm:$0xff]
    %v1107 = vld [vmem:[%s49 + $0x58] sm:$0xff]
    %v1108 = vld [vmem:[%s49 + $0x60] sm:$0xff]
    %v1109 = vld [vmem:[%s49 + $0x68] sm:$0xff]
    %v1110 = vld [vmem:[%s49 + $0x70] sm:$0xff]
    %v1111 = vld [vmem:[%s49 + $0x78] sm:$0xff]
    %v1112 = vld [vmem:[%s49 + $0x80] sm:$0xff]
    %v1113 = vld [vmem:[%s49 + $0x88] sm:$0xff]
    %v1114 = vld [vmem:[%s49 + $0x90] sm:$0xff]
    %v1115 = vld [vmem:[%s49 + $0x98] sm:$0xff]
    %v1116 = vld [vmem:[%s49 + $0xa0] sm:$0xff]
    %v1117 = vld [vmem:[%s49 + $0xa8] sm:$0xff]
    %v1118 = vld [vmem:[%s49 + $0xb0] sm:$0xff]
    %v1119 = vld [vmem:[%s49 + $0xb8] sm:$0xff]
    %v1120 = vld [vmem:[%s49 + $0xc0] sm:$0xff]
    %v1121 = vld [vmem:[%s49 + $0xc8] sm:$0xff]
    %v1122 = vld [vmem:[%s49 + $0xd0] sm:$0xff]
    %v1123 = vld [vmem:[%s49 + $0xd8] sm:$0xff]
    %v1124 = vld [vmem:[%s49 + $0xe0] sm:$0xff]
    %v1125 = vld [vmem:[%s49 + $0xe8] sm:$0xff]
    %v1126 = vld [vmem:[%s49 + $0xf0] sm:$0xff]
    %v1127 = vld [vmem:[%s49 + $0xf8] sm:$0xff]
    %v1128 = vpack.c.bf16 %v1028, %v1026
    %v1129 = vpack.c.bf16 %v1029, %v1027
    %v1131 = vperm.slane %v1062, 0
    %v1132 = vperm.slane %v1062, 1
    %v1167 = vunpack.c.l.b16 %v1030
    %v1168 = vunpack.c.h.b16 %v1030
    %v1169 = vunpack.c.l.b16 %v1031
    %v1170 = vunpack.c.h.b16 %v1031
    %v1171 = vunpack.c.l.b16 %v1032
    %v1172 = vunpack.c.h.b16 %v1032
    %v1173 = vunpack.c.l.b16 %v1033
    %v1174 = vunpack.c.h.b16 %v1033
    %v1175 = vunpack.c.l.b16 %v1034
    %v1176 = vunpack.c.h.b16 %v1034
    %v1177 = vunpack.c.l.b16 %v1035
    %v1178 = vunpack.c.h.b16 %v1035
    %v1179 = vunpack.c.l.b16 %v1036
    %v1180 = vunpack.c.h.b16 %v1036
    %v1181 = vunpack.c.l.b16 %v1037
    %v1182 = vunpack.c.h.b16 %v1037
    %v1183 = vunpack.c.l.b16 %v1038
    %v1184 = vunpack.c.h.b16 %v1038
    %v1185 = vunpack.c.l.b16 %v1039
    %v1186 = vunpack.c.h.b16 %v1039
    %v1187 = vunpack.c.l.b16 %v1040
    %v1188 = vunpack.c.h.b16 %v1040
    %v1189 = vunpack.c.l.b16 %v1041
    %v1190 = vunpack.c.h.b16 %v1041
    %v1191 = vunpack.c.l.b16 %v1042
    %v1192 = vunpack.c.h.b16 %v1042
    %v1193 = vunpack.c.l.b16 %v1043
    %v1194 = vunpack.c.h.b16 %v1043
    %v1195 = vunpack.c.l.b16 %v1044
    %v1196 = vunpack.c.h.b16 %v1044
    %v1197 = vunpack.c.l.b16 %v1045
    %v1198 = vunpack.c.h.b16 %v1045
    %v1199 = vunpack.c.l.b16 %v1046
    %v1200 = vunpack.c.h.b16 %v1046
    %v1201 = vunpack.c.l.b16 %v1047
    %v1202 = vunpack.c.h.b16 %v1047
    %v1203 = vunpack.c.l.b16 %v1048
    %v1204 = vunpack.c.h.b16 %v1048
    %v1205 = vunpack.c.l.b16 %v1049
    %v1206 = vunpack.c.h.b16 %v1049
    %v1207 = vunpack.c.l.b16 %v1050
    %v1208 = vunpack.c.h.b16 %v1050
    %v1209 = vunpack.c.l.b16 %v1051
    %v1210 = vunpack.c.h.b16 %v1051
    %v1211 = vunpack.c.l.b16 %v1052
    %v1212 = vunpack.c.h.b16 %v1052
    %v1213 = vunpack.c.l.b16 %v1053
    %v1214 = vunpack.c.h.b16 %v1053
    %v1215 = vunpack.c.l.b16 %v1054
    %v1216 = vunpack.c.h.b16 %v1054
    %v1217 = vunpack.c.l.b16 %v1055
    %v1218 = vunpack.c.h.b16 %v1055
    %v1219 = vunpack.c.l.b16 %v1056
    %v1220 = vunpack.c.h.b16 %v1056
    %v1221 = vunpack.c.l.b16 %v1057
    %v1222 = vunpack.c.h.b16 %v1057
    %v1223 = vunpack.c.l.b16 %v1058
    %v1224 = vunpack.c.h.b16 %v1058
    %v1225 = vunpack.c.l.b16 %v1059
    %v1226 = vunpack.c.h.b16 %v1059
    %v1227 = vunpack.c.l.b16 %v1060
    %v1228 = vunpack.c.h.b16 %v1060
    %v1229 = vunpack.c.l.b16 %v1061
    %v1230 = vunpack.c.h.b16 %v1061
    %v1231 = vpack.c.b16 %v1169, %v1167
    %v1232 = vpack.c.b16 %v1170, %v1168
    %v1233 = vpack.c.b16 %v1173, %v1171
    %v1234 = vpack.c.b16 %v1174, %v1172
    %v1235 = vpack.c.b16 %v1177, %v1175
    %v1236 = vpack.c.b16 %v1178, %v1176
    %v1237 = vpack.c.b16 %v1181, %v1179
    %v1238 = vpack.c.b16 %v1182, %v1180
    %v1239 = vpack.c.b16 %v1185, %v1183
    %v1240 = vpack.c.b16 %v1186, %v1184
    %v1241 = vpack.c.b16 %v1189, %v1187
    %v1242 = vpack.c.b16 %v1190, %v1188
    %v1243 = vpack.c.b16 %v1193, %v1191
    %v1244 = vpack.c.b16 %v1194, %v1192
    %v1245 = vpack.c.b16 %v1197, %v1195
    %v1246 = vpack.c.b16 %v1198, %v1196
    %v1247 = vpack.c.b16 %v1201, %v1199
    %v1248 = vpack.c.b16 %v1202, %v1200
    %v1249 = vpack.c.b16 %v1205, %v1203
    %v1250 = vpack.c.b16 %v1206, %v1204
    %v1251 = vpack.c.b16 %v1209, %v1207
    %v1252 = vpack.c.b16 %v1210, %v1208
    %v1253 = vpack.c.b16 %v1213, %v1211
    %v1254 = vpack.c.b16 %v1214, %v1212
    %v1255 = vpack.c.b16 %v1217, %v1215
    %v1256 = vpack.c.b16 %v1218, %v1216
    %v1257 = vpack.c.b16 %v1221, %v1219
    %v1258 = vpack.c.b16 %v1222, %v1220
    %v1259 = vpack.c.b16 %v1225, %v1223
    %v1260 = vpack.c.b16 %v1226, %v1224
    %v1261 = vpack.c.b16 %v1229, %v1227
    %v1262 = vpack.c.b16 %v1230, %v1228
    %1295 = vmatpush.bf16.msra.mxu0 %v1245
    %1296 = vmatpush.bf16.msra.mxu0 %v1243
    %1297 = vmatpush.bf16.msra.mxu0 %v1241
    %1298 = vmatpush.bf16.msra.mxu0 %v1239
    %1299 = vmatpush.bf16.msra.mxu0 %v1237
    %1300 = vmatpush.bf16.msra.mxu0 %v1235
    %1301 = vmatpush.bf16.msra.mxu0 %v1233
    %1302 = vmatpush.bf16.msra.mxu0 %v1231
    %1303 = vmatmul.bf16.gmra.mxu0 %v1128
    %v1304 = vpop.f32.mrf.mxu0
    %v1305 = vadd.f32 %v1131, %v1304
    %v1306 = vpop.f32.mrf.mxu0
    %v1307 = vadd.f32 %v1131, %v1306
    %1308 = vdwg.mxu0
    %1309 = vmatpush.bf16.msra.mxu0 %v1261
    %1310 = vmatpush.bf16.msra.mxu0 %v1259
    %1311 = vmatpush.bf16.msra.mxu0 %v1257
    %1312 = vmatpush.bf16.msra.mxu0 %v1255
    %1313 = vmatpush.bf16.msra.mxu0 %v1253
    %1314 = vmatpush.bf16.msra.mxu0 %v1251
    %1315 = vmatpush.bf16.msra.mxu0 %v1249
    %1316 = vmatpush.bf16.msra.mxu0 %v1247
    %1317 = vmatmul.bf16.gmra.mxu0 %v1129
    %v1318 = vpop.f32.mrf.mxu0
    %v1319 = vadd.f32 %v1305, %v1318
    %v1320 = vpop.f32.mrf.mxu0
    %v1321 = vadd.f32 %v1307, %v1320
    %1322 = vdwg.mxu0
    %1323 = vmatpush.bf16.msra.mxu0 %v1246
    %1324 = vmatpush.bf16.msra.mxu0 %v1244
    %1325 = vmatpush.bf16.msra.mxu0 %v1242
    %1326 = vmatpush.bf16.msra.mxu0 %v1240
    %1327 = vmatpush.bf16.msra.mxu0 %v1238
    %1328 = vmatpush.bf16.msra.mxu0 %v1236
    %1329 = vmatpush.bf16.msra.mxu0 %v1234
    %1330 = vmatpush.bf16.msra.mxu0 %v1232
    %1331 = vmatmul.bf16.gmra.mxu0 %v1128
    %v1332 = vpop.f32.mrf.mxu0
    %v1333 = vadd.f32 %v1132, %v1332
    %v1334 = vpop.f32.mrf.mxu0
    %v1335 = vadd.f32 %v1132, %v1334
    %1336 = vdwg.mxu0
    %1337 = vmatpush.bf16.msra.mxu0 %v1262
    %1338 = vmatpush.bf16.msra.mxu0 %v1260
    %1339 = vmatpush.bf16.msra.mxu0 %v1258
    %1340 = vmatpush.bf16.msra.mxu0 %v1256
    %1341 = vmatpush.bf16.msra.mxu0 %v1254
    %1342 = vmatpush.bf16.msra.mxu0 %v1252
    %1343 = vmatpush.bf16.msra.mxu0 %v1250
    %1344 = vmatpush.bf16.msra.mxu0 %v1248
    %1345 = vmatmul.bf16.gmra.mxu0 %v1129
    %v1346 = vpop.f32.mrf.mxu0
    %v1347 = vadd.f32 %v1333, %v1346
    %v1348 = vpop.f32.mrf.mxu0
    %v1349 = vadd.f32 %v1335, %v1348
    %1350 = vdwg.mxu0
    %v1351 = vmax.f32 %v1319, 0.0
    %v1352 = vmax.f32 %v1347, 0.0
    %v1353 = vmax.f32 %v1321, 0.0
    %v1354 = vmax.f32 %v1349, 0.0
    %v1355 = vpack.c.bf16 %v1353, %v1351
    %v1356 = vpack.c.bf16 %v1354, %v1352
    %1357 = vmatpush.bf16.msra.mxu0 0
    %1358 = vmatpush.bf16.msra.mxu0 0
    %1359 = vmatpush.bf16.msra.mxu0 0
    %1360 = vmatpush.bf16.msra.mxu0 0
    %1361 = vmatpush.bf16.msra.mxu0 0
    %1362 = vmatpush.bf16.msra.mxu0 0
    %1363 = vmatpush.bf16.msra.mxu0 0
    %1364 = vmatpush.bf16.msra.mxu0 %v1355
    %1365 = vmatmul.bf16.gmra.mxu0 %v215
    %v1366 = vpop.f32.mrf.mxu0
    %v1367 = vadd.f32 0.0, %v1366
    %v1368 = vpop.f32.mrf.mxu0
    %v1369 = vadd.f32 0.0, %v1368
    %1370 = vdwg.mxu0
    %1371 = vmatpush.bf16.msra.mxu0 0
    %1372 = vmatpush.bf16.msra.mxu0 0
    %1373 = vmatpush.bf16.msra.mxu0 0
    %1374 = vmatpush.bf16.msra.mxu0 0
    %1375 = vmatpush.bf16.msra.mxu0 0
    %1376 = vmatpush.bf16.msra.mxu0 0
    %1377 = vmatpush.bf16.msra.mxu0 0
    %1378 = vmatpush.bf16.msra.mxu0 %v1356
    %1379 = vmatmul.bf16.gmra.mxu0 %v215
    %v1380 = vpop.f32.mrf.mxu0
    %v1381 = vadd.f32 0.0, %v1380
    %v1382 = vpop.f32.mrf.mxu0
    %v1383 = vadd.f32 0.0, %v1382
    %1384 = vdwg.mxu0
    %v1385 = vmul.f32 %v1367, %v234
    %v1386 = vmul.f32 %v1381, %v234
    %v1387 = vmul.f32 %v1369, %v239
    %v1388 = vmul.f32 %v1383, %v239
    %v1389 = vpack.c.bf16 %v1387, %v1385
    %v1390 = vpack.c.bf16 %v1388, %v1386
    %v1392 = vperm.slane %v1095, 0
    %v1393 = vperm.slane %v1095, 1
    %v1428 = vunpack.c.l.b16 %v1063
    %v1429 = vunpack.c.h.b16 %v1063
    %v1430 = vunpack.c.l.b16 %v1064
    %v1431 = vunpack.c.h.b16 %v1064
    %v1432 = vunpack.c.l.b16 %v1065
    %v1433 = vunpack.c.h.b16 %v1065
    %v1434 = vunpack.c.l.b16 %v1066
    %v1435 = vunpack.c.h.b16 %v1066
    %v1436 = vunpack.c.l.b16 %v1067
    %v1437 = vunpack.c.h.b16 %v1067
    %v1438 = vunpack.c.l.b16 %v1068
    %v1439 = vunpack.c.h.b16 %v1068
    %v1440 = vunpack.c.l.b16 %v1069
    %v1441 = vunpack.c.h.b16 %v1069
    %v1442 = vunpack.c.l.b16 %v1070
    %v1443 = vunpack.c.h.b16 %v1070
    %v1444 = vunpack.c.l.b16 %v1071
    %v1445 = vunpack.c.h.b16 %v1071
    %v1446 = vunpack.c.l.b16 %v1072
    %v1447 = vunpack.c.h.b16 %v1072
    %v1448 = vunpack.c.l.b16 %v1073
    %v1449 = vunpack.c.h.b16 %v1073
    %v1450 = vunpack.c.l.b16 %v1074
    %v1451 = vunpack.c.h.b16 %v1074
    %v1452 = vunpack.c.l.b16 %v1075
    %v1453 = vunpack.c.h.b16 %v1075
    %v1454 = vunpack.c.l.b16 %v1076
    %v1455 = vunpack.c.h.b16 %v1076
    %v1456 = vunpack.c.l.b16 %v1077
    %v1457 = vunpack.c.h.b16 %v1077
    %v1458 = vunpack.c.l.b16 %v1078
    %v1459 = vunpack.c.h.b16 %v1078
    %v1460 = vunpack.c.l.b16 %v1079
    %v1461 = vunpack.c.h.b16 %v1079
    %v1462 = vunpack.c.l.b16 %v1080
    %v1463 = vunpack.c.h.b16 %v1080
    %v1464 = vunpack.c.l.b16 %v1081
    %v1465 = vunpack.c.h.b16 %v1081
    %v1466 = vunpack.c.l.b16 %v1082
    %v1467 = vunpack.c.h.b16 %v1082
    %v1468 = vunpack.c.l.b16 %v1083
    %v1469 = vunpack.c.h.b16 %v1083
    %v1470 = vunpack.c.l.b16 %v1084
    %v1471 = vunpack.c.h.b16 %v1084
    %v1472 = vunpack.c.l.b16 %v1085
    %v1473 = vunpack.c.h.b16 %v1085
    %v1474 = vunpack.c.l.b16 %v1086
    %v1475 = vunpack.c.h.b16 %v1086
    %v1476 = vunpack.c.l.b16 %v1087
    %v1477 = vunpack.c.h.b16 %v1087
    %v1478 = vunpack.c.l.b16 %v1088
    %v1479 = vunpack.c.h.b16 %v1088
    %v1480 = vunpack.c.l.b16 %v1089
    %v1481 = vunpack.c.h.b16 %v1089
    %v1482 = vunpack.c.l.b16 %v1090
    %v1483 = vunpack.c.h.b16 %v1090
    %v1484 = vunpack.c.l.b16 %v1091
    %v1485 = vunpack.c.h.b16 %v1091
    %v1486 = vunpack.c.l.b16 %v1092
    %v1487 = vunpack.c.h.b16 %v1092
    %v1488 = vunpack.c.l.b16 %v1093
    %v1489 = vunpack.c.h.b16 %v1093
    %v1490 = vunpack.c.l.b16 %v1094
    %v1491 = vunpack.c.h.b16 %v1094
    %v1492 = vpack.c.b16 %v1430, %v1428
    %v1493 = vpack.c.b16 %v1431, %v1429
    %v1494 = vpack.c.b16 %v1434, %v1432
    %v1495 = vpack.c.b16 %v1435, %v1433
    %v1496 = vpack.c.b16 %v1438, %v1436
    %v1497 = vpack.c.b16 %v1439, %v1437
    %v1498 = vpack.c.b16 %v1442, %v1440
    %v1499 = vpack.c.b16 %v1443, %v1441
    %v1500 = vpack.c.b16 %v1446, %v1444
    %v1501 = vpack.c.b16 %v1447, %v1445
    %v1502 = vpack.c.b16 %v1450, %v1448
    %v1503 = vpack.c.b16 %v1451, %v1449
    %v1504 = vpack.c.b16 %v1454, %v1452
    %v1505 = vpack.c.b16 %v1455, %v1453
    %v1506 = vpack.c.b16 %v1458, %v1456
    %v1507 = vpack.c.b16 %v1459, %v1457
    %v1508 = vpack.c.b16 %v1462, %v1460
    %v1509 = vpack.c.b16 %v1463, %v1461
    %v1510 = vpack.c.b16 %v1466, %v1464
    %v1511 = vpack.c.b16 %v1467, %v1465
    %v1512 = vpack.c.b16 %v1470, %v1468
    %v1513 = vpack.c.b16 %v1471, %v1469
    %v1514 = vpack.c.b16 %v1474, %v1472
    %v1515 = vpack.c.b16 %v1475, %v1473
    %v1516 = vpack.c.b16 %v1478, %v1476
    %v1517 = vpack.c.b16 %v1479, %v1477
    %v1518 = vpack.c.b16 %v1482, %v1480
    %v1519 = vpack.c.b16 %v1483, %v1481
    %v1520 = vpack.c.b16 %v1486, %v1484
    %v1521 = vpack.c.b16 %v1487, %v1485
    %v1522 = vpack.c.b16 %v1490, %v1488
    %v1523 = vpack.c.b16 %v1491, %v1489
    %1556 = vmatpush.bf16.msra.mxu0 %v1506
    %1557 = vmatpush.bf16.msra.mxu0 %v1504
    %1558 = vmatpush.bf16.msra.mxu0 %v1502
    %1559 = vmatpush.bf16.msra.mxu0 %v1500
    %1560 = vmatpush.bf16.msra.mxu0 %v1498
    %1561 = vmatpush.bf16.msra.mxu0 %v1496
    %1562 = vmatpush.bf16.msra.mxu0 %v1494
    %1563 = vmatpush.bf16.msra.mxu0 %v1492
    %1564 = vmatmul.bf16.gmra.mxu0 %v1389
    %v1565 = vpop.f32.mrf.mxu0
    %v1566 = vadd.f32 %v1392, %v1565
    %v1567 = vpop.f32.mrf.mxu0
    %v1568 = vadd.f32 %v1392, %v1567
    %1569 = vdwg.mxu0
    %1570 = vmatpush.bf16.msra.mxu0 %v1522
    %1571 = vmatpush.bf16.msra.mxu0 %v1520
    %1572 = vmatpush.bf16.msra.mxu0 %v1518
    %1573 = vmatpush.bf16.msra.mxu0 %v1516
    %1574 = vmatpush.bf16.msra.mxu0 %v1514
    %1575 = vmatpush.bf16.msra.mxu0 %v1512
    %1576 = vmatpush.bf16.msra.mxu0 %v1510
    %1577 = vmatpush.bf16.msra.mxu0 %v1508
    %1578 = vmatmul.bf16.gmra.mxu0 %v1390
    %v1579 = vpop.f32.mrf.mxu0
    %v1580 = vadd.f32 %v1566, %v1579
    %v1581 = vpop.f32.mrf.mxu0
    %v1582 = vadd.f32 %v1568, %v1581
    %1583 = vdwg.mxu0
    %1584 = vmatpush.bf16.msra.mxu0 %v1507
    %1585 = vmatpush.bf16.msra.mxu0 %v1505
    %1586 = vmatpush.bf16.msra.mxu0 %v1503
    %1587 = vmatpush.bf16.msra.mxu0 %v1501
    %1588 = vmatpush.bf16.msra.mxu0 %v1499
    %1589 = vmatpush.bf16.msra.mxu0 %v1497
    %1590 = vmatpush.bf16.msra.mxu0 %v1495
    %1591 = vmatpush.bf16.msra.mxu0 %v1493
    %1592 = vmatmul.bf16.gmra.mxu0 %v1389
    %v1593 = vpop.f32.mrf.mxu0
    %v1594 = vadd.f32 %v1393, %v1593
    %v1595 = vpop.f32.mrf.mxu0
    %v1596 = vadd.f32 %v1393, %v1595
    %1597 = vdwg.mxu0
    %1598 = vmatpush.bf16.msra.mxu0 %v1523
    %1599 = vmatpush.bf16.msra.mxu0 %v1521
    %1600 = vmatpush.bf16.msra.mxu0 %v1519
    %1601 = vmatpush.bf16.msra.mxu0 %v1517
    %1602 = vmatpush.bf16.msra.mxu0 %v1515
    %1603 = vmatpush.bf16.msra.mxu0 %v1513
    %1604 = vmatpush.bf16.msra.mxu0 %v1511
    %1605 = vmatpush.bf16.msra.mxu0 %v1509
    %1606 = vmatmul.bf16.gmra.mxu0 %v1390
    %v1607 = vpop.f32.mrf.mxu0
    %v1608 = vadd.f32 %v1594, %v1607
    %v1609 = vpop.f32.mrf.mxu0
    %v1610 = vadd.f32 %v1596, %v1609
    %1611 = vdwg.mxu0
    %v1644 = vunpack.c.l.b16 %v1096
    %v1645 = vunpack.c.h.b16 %v1096
    %v1646 = vunpack.c.l.b16 %v1097
    %v1647 = vunpack.c.h.b16 %v1097
    %v1648 = vunpack.c.l.b16 %v1098
    %v1649 = vunpack.c.h.b16 %v1098
    %v1650 = vunpack.c.l.b16 %v1099
    %v1651 = vunpack.c.h.b16 %v1099
    %v1652 = vunpack.c.l.b16 %v1100
    %v1653 = vunpack.c.h.b16 %v1100
    %v1654 = vunpack.c.l.b16 %v1101
    %v1655 = vunpack.c.h.b16 %v1101
    %v1656 = vunpack.c.l.b16 %v1102
    %v1657 = vunpack.c.h.b16 %v1102
    %v1658 = vunpack.c.l.b16 %v1103
    %v1659 = vunpack.c.h.b16 %v1103
    %v1660 = vunpack.c.l.b16 %v1104
    %v1661 = vunpack.c.h.b16 %v1104
    %v1662 = vunpack.c.l.b16 %v1105
    %v1663 = vunpack.c.h.b16 %v1105
    %v1664 = vunpack.c.l.b16 %v1106
    %v1665 = vunpack.c.h.b16 %v1106
    %v1666 = vunpack.c.l.b16 %v1107
    %v1667 = vunpack.c.h.b16 %v1107
    %v1668 = vunpack.c.l.b16 %v1108
    %v1669 = vunpack.c.h.b16 %v1108
    %v1670 = vunpack.c.l.b16 %v1109
    %v1671 = vunpack.c.h.b16 %v1109
    %v1672 = vunpack.c.l.b16 %v1110
    %v1673 = vunpack.c.h.b16 %v1110
    %v1674 = vunpack.c.l.b16 %v1111
    %v1675 = vunpack.c.h.b16 %v1111
    %v1676 = vunpack.c.l.b16 %v1112
    %v1677 = vunpack.c.h.b16 %v1112
    %v1678 = vunpack.c.l.b16 %v1113
    %v1679 = vunpack.c.h.b16 %v1113
    %v1680 = vunpack.c.l.b16 %v1114
    %v1681 = vunpack.c.h.b16 %v1114
    %v1682 = vunpack.c.l.b16 %v1115
    %v1683 = vunpack.c.h.b16 %v1115
    %v1684 = vunpack.c.l.b16 %v1116
    %v1685 = vunpack.c.h.b16 %v1116
    %v1686 = vunpack.c.l.b16 %v1117
    %v1687 = vunpack.c.h.b16 %v1117
    %v1688 = vunpack.c.l.b16 %v1118
    %v1689 = vunpack.c.h.b16 %v1118
    %v1690 = vunpack.c.l.b16 %v1119
    %v1691 = vunpack.c.h.b16 %v1119
    %v1692 = vunpack.c.l.b16 %v1120
    %v1693 = vunpack.c.h.b16 %v1120
    %v1694 = vunpack.c.l.b16 %v1121
    %v1695 = vunpack.c.h.b16 %v1121
    %v1696 = vunpack.c.l.b16 %v1122
    %v1697 = vunpack.c.h.b16 %v1122
    %v1698 = vunpack.c.l.b16 %v1123
    %v1699 = vunpack.c.h.b16 %v1123
    %v1700 = vunpack.c.l.b16 %v1124
    %v1701 = vunpack.c.h.b16 %v1124
    %v1702 = vunpack.c.l.b16 %v1125
    %v1703 = vunpack.c.h.b16 %v1125
    %v1704 = vunpack.c.l.b16 %v1126
    %v1705 = vunpack.c.h.b16 %v1126
    %v1706 = vunpack.c.l.b16 %v1127
    %v1707 = vunpack.c.h.b16 %v1127
    %v1708 = vpack.c.b16 %v1646, %v1644
    %v1709 = vpack.c.b16 %v1647, %v1645
    %v1710 = vpack.c.b16 %v1650, %v1648
    %v1711 = vpack.c.b16 %v1651, %v1649
    %v1712 = vpack.c.b16 %v1654, %v1652
    %v1713 = vpack.c.b16 %v1655, %v1653
    %v1714 = vpack.c.b16 %v1658, %v1656
    %v1715 = vpack.c.b16 %v1659, %v1657
    %v1716 = vpack.c.b16 %v1662, %v1660
    %v1717 = vpack.c.b16 %v1663, %v1661
    %v1718 = vpack.c.b16 %v1666, %v1664
    %v1719 = vpack.c.b16 %v1667, %v1665
    %v1720 = vpack.c.b16 %v1670, %v1668
    %v1721 = vpack.c.b16 %v1671, %v1669
    %v1722 = vpack.c.b16 %v1674, %v1672
    %v1723 = vpack.c.b16 %v1675, %v1673
    %v1724 = vpack.c.b16 %v1678, %v1676
    %v1725 = vpack.c.b16 %v1679, %v1677
    %v1726 = vpack.c.b16 %v1682, %v1680
    %v1727 = vpack.c.b16 %v1683, %v1681
    %v1728 = vpack.c.b16 %v1686, %v1684
    %v1729 = vpack.c.b16 %v1687, %v1685
    %v1730 = vpack.c.b16 %v1690, %v1688
    %v1731 = vpack.c.b16 %v1691, %v1689
    %v1732 = vpack.c.b16 %v1694, %v1692
    %v1733 = vpack.c.b16 %v1695, %v1693
    %v1734 = vpack.c.b16 %v1698, %v1696
    %v1735 = vpack.c.b16 %v1699, %v1697
    %v1736 = vpack.c.b16 %v1702, %v1700
    %v1737 = vpack.c.b16 %v1703, %v1701
    %v1738 = vpack.c.b16 %v1706, %v1704
    %v1739 = vpack.c.b16 %v1707, %v1705
    %1772 = vmatpush.bf16.msra.mxu0 %v1722
    %1773 = vmatpush.bf16.msra.mxu0 %v1720
    %1774 = vmatpush.bf16.msra.mxu0 %v1718
    %1775 = vmatpush.bf16.msra.mxu0 %v1716
    %1776 = vmatpush.bf16.msra.mxu0 %v1714
    %1777 = vmatpush.bf16.msra.mxu0 %v1712
    %1778 = vmatpush.bf16.msra.mxu0 %v1710
    %1779 = vmatpush.bf16.msra.mxu0 %v1708
    %1780 = vmatmul.bf16.gmra.mxu0 %v1128
    %v1781 = vpop.f32.mrf.mxu0
    %v1782 = vadd.f32 0.0, %v1781
    %v1783 = vpop.f32.mrf.mxu0
    %v1784 = vadd.f32 0.0, %v1783
    %1785 = vdwg.mxu0
    %1786 = vmatpush.bf16.msra.mxu0 %v1738
    %1787 = vmatpush.bf16.msra.mxu0 %v1736
    %1788 = vmatpush.bf16.msra.mxu0 %v1734
    %1789 = vmatpush.bf16.msra.mxu0 %v1732
    %1790 = vmatpush.bf16.msra.mxu0 %v1730
    %1791 = vmatpush.bf16.msra.mxu0 %v1728
    %1792 = vmatpush.bf16.msra.mxu0 %v1726
    %1793 = vmatpush.bf16.msra.mxu0 %v1724
    %1794 = vmatmul.bf16.gmra.mxu0 %v1129
    %v1795 = vpop.f32.mrf.mxu0
    %v1796 = vadd.f32 %v1782, %v1795
    %v1797 = vpop.f32.mrf.mxu0
    %v1798 = vadd.f32 %v1784, %v1797
    %1799 = vdwg.mxu0
    %1800 = vmatpush.bf16.msra.mxu0 %v1723
    %1801 = vmatpush.bf16.msra.mxu0 %v1721
    %1802 = vmatpush.bf16.msra.mxu0 %v1719
    %1803 = vmatpush.bf16.msra.mxu0 %v1717
    %1804 = vmatpush.bf16.msra.mxu0 %v1715
    %1805 = vmatpush.bf16.msra.mxu0 %v1713
    %1806 = vmatpush.bf16.msra.mxu0 %v1711
    %1807 = vmatpush.bf16.msra.mxu0 %v1709
    %1808 = vmatmul.bf16.gmra.mxu0 %v1128
    %v1809 = vpop.f32.mrf.mxu0
    %v1810 = vadd.f32 0.0, %v1809
    %v1811 = vpop.f32.mrf.mxu0
    %v1812 = vadd.f32 0.0, %v1811
    %1813 = vdwg.mxu0
    %1814 = vmatpush.bf16.msra.mxu0 %v1739
    %1815 = vmatpush.bf16.msra.mxu0 %v1737
    %1816 = vmatpush.bf16.msra.mxu0 %v1735
    %1817 = vmatpush.bf16.msra.mxu0 %v1733
    %1818 = vmatpush.bf16.msra.mxu0 %v1731
    %1819 = vmatpush.bf16.msra.mxu0 %v1729
    %1820 = vmatpush.bf16.msra.mxu0 %v1727
    %1821 = vmatpush.bf16.msra.mxu0 %v1725
    %1822 = vmatmul.bf16.gmra.mxu0 %v1129
    %v1823 = vpop.f32.mrf.mxu0
    %v1824 = vadd.f32 %v1810, %v1823
    %v1825 = vpop.f32.mrf.mxu0
    %v1826 = vadd.f32 %v1812, %v1825
    %1827 = vdwg.mxu0
    %v1828 = vadd.f32 %v1580, %v1796
    %v1829 = vadd.f32 %v1608, %v1824
    %v1830 = vadd.f32 %v1582, %v1798
    %v1831 = vadd.f32 %v1610, %v1826
    %v1832 = vmul.f32 %v1828, %v1828
    %v1833 = vmul.f32 %v1829, %v1829
    %v1834 = vmul.f32 %v1830, %v1830
    %v1835 = vmul.f32 %v1831, %v1831
    %v1836 = vadd.f32 %v1832, %v1833
    %1837 = vadd.xlane.f32.xlu0 %v1836
    %v1838 = vpop.xlane.xlu0 %1837
    %v1839 = vadd.f32 %v1834, %v1835
    %1840 = vadd.xlane.f32.xlu0 %v1839
    %v1841 = vpop.xlane.xlu0 %1840
    %v1842 = vmax.f32 %v1838, 1e-24
    %v1843 = vmax.f32 %v1841, 1e-24
    %v1844 = vrsqrt.pop %v1842
    %v1845 = vmul.f32 %v1844, %v1842
    %v1846 = vmul.f32 %v1845, %v1844
    %v1847 = vmul.f32 0.5, %v1846
    %v1848 = vsub.f32 1.5, %v1847
    %v1849 = vmul.f32 %v1844, %v1848
    %vm1850 = vweird.f32 %v1842
    %vm1851 = vweird.f32 %v1844
    %vm1852 = vmor %vm1850, %vm1851
    %v1853 = vsel %vm1852, %v1844, %v1849
    %v1854 = vrsqrt.pop %v1843
    %v1855 = vmul.f32 %v1854, %v1843
    %v1856 = vmul.f32 %v1855, %v1854
    %v1857 = vmul.f32 0.5, %v1856
    %v1858 = vsub.f32 1.5, %v1857
    %v1859 = vmul.f32 %v1854, %v1858
    %vm1860 = vweird.f32 %v1843
    %vm1861 = vweird.f32 %v1854
    %vm1862 = vmor %vm1860, %vm1861
    %v1863 = vsel %vm1862, %v1854, %v1859
    %v1864 = vmul.f32 %v1828, %v1853
    %v1865 = vmul.f32 %v1829, %v1853
    %v1866 = vmul.f32 %v1830, %v1863
    %v1867 = vmul.f32 %v1831, %v1863
    %v1868 = vld [vmem:[%s51] sm:$0xff]
    %v1869 = vld [vmem:[%s51 + $0x8] sm:$0xff]
    %v1870 = vld [vmem:[%s51 + $0x10] sm:$0xff]
    %v1871 = vld [vmem:[%s51 + $0x18] sm:$0xff]
    %v1872 = vld [vmem:[%s51 + $0x20] sm:$0xff]
    %v1873 = vld [vmem:[%s51 + $0x28] sm:$0xff]
    %v1874 = vld [vmem:[%s51 + $0x30] sm:$0xff]
    %v1875 = vld [vmem:[%s51 + $0x38] sm:$0xff]
    %v1876 = vld [vmem:[%s51 + $0x40] sm:$0xff]
    %v1877 = vld [vmem:[%s51 + $0x48] sm:$0xff]
    %v1878 = vld [vmem:[%s51 + $0x50] sm:$0xff]
    %v1879 = vld [vmem:[%s51 + $0x58] sm:$0xff]
    %v1880 = vld [vmem:[%s51 + $0x60] sm:$0xff]
    %v1881 = vld [vmem:[%s51 + $0x68] sm:$0xff]
    %v1882 = vld [vmem:[%s51 + $0x70] sm:$0xff]
    %v1883 = vld [vmem:[%s51 + $0x78] sm:$0xff]
    %v1884 = vld [vmem:[%s51 + $0x80] sm:$0xff]
    %v1885 = vld [vmem:[%s51 + $0x88] sm:$0xff]
    %v1886 = vld [vmem:[%s51 + $0x90] sm:$0xff]
    %v1887 = vld [vmem:[%s51 + $0x98] sm:$0xff]
    %v1888 = vld [vmem:[%s51 + $0xa0] sm:$0xff]
    %v1889 = vld [vmem:[%s51 + $0xa8] sm:$0xff]
    %v1890 = vld [vmem:[%s51 + $0xb0] sm:$0xff]
    %v1891 = vld [vmem:[%s51 + $0xb8] sm:$0xff]
    %v1892 = vld [vmem:[%s51 + $0xc0] sm:$0xff]
    %v1893 = vld [vmem:[%s51 + $0xc8] sm:$0xff]
    %v1894 = vld [vmem:[%s51 + $0xd0] sm:$0xff]
    %v1895 = vld [vmem:[%s51 + $0xd8] sm:$0xff]
    %v1896 = vld [vmem:[%s51 + $0xe0] sm:$0xff]
    %v1897 = vld [vmem:[%s51 + $0xe8] sm:$0xff]
    %v1898 = vld [vmem:[%s51 + $0xf0] sm:$0xff]
    %v1899 = vld [vmem:[%s51 + $0xf8] sm:$0xff]
    %v1900 = vld [vmem:[%s53] sm:$0x3]
    %v1901 = vld [vmem:[%s55] sm:$0xff]
    %v1902 = vld [vmem:[%s55 + $0x8] sm:$0xff]
    %v1903 = vld [vmem:[%s55 + $0x10] sm:$0xf]
    %v1904 = vld [vmem:[%s55 + $0x14] sm:$0xff]
    %v1905 = vld [vmem:[%s55 + $0x1c] sm:$0xff]
    %v1906 = vld [vmem:[%s55 + $0x24] sm:$0xf]
    %v1907 = vld [vmem:[%s55 + $0x28] sm:$0xff]
    %v1908 = vld [vmem:[%s55 + $0x30] sm:$0xff]
    %v1909 = vld [vmem:[%s55 + $0x38] sm:$0xf]
    %v1910 = vld [vmem:[%s55 + $0x3c] sm:$0xff]
    %v1911 = vld [vmem:[%s55 + $0x44] sm:$0xff]
    %v1912 = vld [vmem:[%s55 + $0x4c] sm:$0xf]
    %v1913 = vld [vmem:[%s55 + $0x50] sm:$0xff]
    %v1914 = vld [vmem:[%s55 + $0x58] sm:$0xff]
    %v1915 = vld [vmem:[%s55 + $0x60] sm:$0xf]
    %v1916 = vld [vmem:[%s55 + $0x64] sm:$0xff]
    %v1917 = vld [vmem:[%s55 + $0x6c] sm:$0xff]
    %v1918 = vld [vmem:[%s55 + $0x74] sm:$0xf]
    %v1919 = vld [vmem:[%s55 + $0x78] sm:$0xff]
    %v1920 = vld [vmem:[%s55 + $0x80] sm:$0xff]
    %v1921 = vld [vmem:[%s55 + $0x88] sm:$0xf]
    %v1922 = vld [vmem:[%s55 + $0x8c] sm:$0xff]
    %v1923 = vld [vmem:[%s55 + $0x94] sm:$0xff]
    %v1924 = vld [vmem:[%s55 + $0x9c] sm:$0xf]
    %v1925 = vld [vmem:[%s55 + $0xa0] sm:$0xff]
    %v1926 = vld [vmem:[%s55 + $0xa8] sm:$0xff]
    %v1927 = vld [vmem:[%s55 + $0xb0] sm:$0xf]
    %v1928 = vld [vmem:[%s55 + $0xb4] sm:$0xff]
    %v1929 = vld [vmem:[%s55 + $0xbc] sm:$0xff]
    %v1930 = vld [vmem:[%s55 + $0xc4] sm:$0xf]
    %v1931 = vld [vmem:[%s55 + $0xc8] sm:$0xff]
    %v1932 = vld [vmem:[%s55 + $0xd0] sm:$0xff]
    %v1933 = vld [vmem:[%s55 + $0xd8] sm:$0xf]
    %v1934 = vld [vmem:[%s55 + $0xdc] sm:$0xff]
    %v1935 = vld [vmem:[%s55 + $0xe4] sm:$0xff]
    %v1936 = vld [vmem:[%s55 + $0xec] sm:$0xf]
    %v1937 = vld [vmem:[%s55 + $0xf0] sm:$0xff]
    %v1938 = vld [vmem:[%s55 + $0xf8] sm:$0xff]
    %v1939 = vld [vmem:[%s55 + $0x100] sm:$0xf]
    %v1940 = vld [vmem:[%s55 + $0x104] sm:$0xff]
    %v1941 = vld [vmem:[%s55 + $0x10c] sm:$0xff]
    %v1942 = vld [vmem:[%s55 + $0x114] sm:$0xf]
    %v1943 = vld [vmem:[%s55 + $0x118] sm:$0xff]
    %v1944 = vld [vmem:[%s55 + $0x120] sm:$0xff]
    %v1945 = vld [vmem:[%s55 + $0x128] sm:$0xf]
    %v1946 = vld [vmem:[%s55 + $0x12c] sm:$0xff]
    %v1947 = vld [vmem:[%s55 + $0x134] sm:$0xff]
    %v1948 = vld [vmem:[%s55 + $0x13c] sm:$0xf]
    %v1949 = vld [vmem:[%s55 + $0x140] sm:$0xff]
    %v1950 = vld [vmem:[%s55 + $0x148] sm:$0xff]
    %v1951 = vld [vmem:[%s55 + $0x150] sm:$0xf]
    %v1952 = vld [vmem:[%s55 + $0x154] sm:$0xff]
    %v1953 = vld [vmem:[%s55 + $0x15c] sm:$0xff]
    %v1954 = vld [vmem:[%s55 + $0x164] sm:$0xf]
    %v1955 = vld [vmem:[%s55 + $0x168] sm:$0xff]
    %v1956 = vld [vmem:[%s55 + $0x170] sm:$0xff]
    %v1957 = vld [vmem:[%s55 + $0x178] sm:$0xf]
    %v1958 = vld [vmem:[%s55 + $0x17c] sm:$0xff]
    %v1959 = vld [vmem:[%s55 + $0x184] sm:$0xff]
    %v1960 = vld [vmem:[%s55 + $0x18c] sm:$0xf]
    %v1961 = vld [vmem:[%s55 + $0x190] sm:$0xff]
    %v1962 = vld [vmem:[%s55 + $0x198] sm:$0xff]
    %v1963 = vld [vmem:[%s55 + $0x1a0] sm:$0xf]
    %v1964 = vld [vmem:[%s55 + $0x1a4] sm:$0xff]
    %v1965 = vld [vmem:[%s55 + $0x1ac] sm:$0xff]
    %v1966 = vld [vmem:[%s55 + $0x1b4] sm:$0xf]
    %v1967 = vld [vmem:[%s55 + $0x1b8] sm:$0xff]
    %v1968 = vld [vmem:[%s55 + $0x1c0] sm:$0xff]
    %v1969 = vld [vmem:[%s55 + $0x1c8] sm:$0xf]
    %v1970 = vld [vmem:[%s55 + $0x1cc] sm:$0xff]
    %v1971 = vld [vmem:[%s55 + $0x1d4] sm:$0xff]
    %v1972 = vld [vmem:[%s55 + $0x1dc] sm:$0xf]
    %v1973 = vld [vmem:[%s55 + $0x1e0] sm:$0xff]
    %v1974 = vld [vmem:[%s55 + $0x1e8] sm:$0xff]
    %v1975 = vld [vmem:[%s55 + $0x1f0] sm:$0xf]
    %v1976 = vld [vmem:[%s55 + $0x1f4] sm:$0xff]
    %v1977 = vld [vmem:[%s55 + $0x1fc] sm:$0xff]
    %v1978 = vld [vmem:[%s55 + $0x204] sm:$0xf]
    %v1979 = vld [vmem:[%s55 + $0x208] sm:$0xff]
    %v1980 = vld [vmem:[%s55 + $0x210] sm:$0xff]
    %v1981 = vld [vmem:[%s55 + $0x218] sm:$0xf]
    %v1982 = vld [vmem:[%s55 + $0x21c] sm:$0xff]
    %v1983 = vld [vmem:[%s55 + $0x224] sm:$0xff]
    %v1984 = vld [vmem:[%s55 + $0x22c] sm:$0xf]
    %v1985 = vld [vmem:[%s55 + $0x230] sm:$0xff]
    %v1986 = vld [vmem:[%s55 + $0x238] sm:$0xff]
    %v1987 = vld [vmem:[%s55 + $0x240] sm:$0xf]
    %v1988 = vld [vmem:[%s55 + $0x244] sm:$0xff]
    %v1989 = vld [vmem:[%s55 + $0x24c] sm:$0xff]
    %v1990 = vld [vmem:[%s55 + $0x254] sm:$0xf]
    %v1991 = vld [vmem:[%s55 + $0x258] sm:$0xff]
    %v1992 = vld [vmem:[%s55 + $0x260] sm:$0xff]
    %v1993 = vld [vmem:[%s55 + $0x268] sm:$0xf]
    %v1994 = vld [vmem:[%s55 + $0x26c] sm:$0xff]
    %v1995 = vld [vmem:[%s55 + $0x274] sm:$0xff]
    %v1996 = vld [vmem:[%s55 + $0x27c] sm:$0xf]
    %v1997 = vld [vmem:[%s57] sm:$0x1f]
    %v1998 = vld [vmem:[%s59] sm:$0xff]
    %v1999 = vld [vmem:[%s59 + $0x8] sm:$0xff]
    %v2000 = vld [vmem:[%s59 + $0x10] sm:$0xf]
    %v2001 = vld [vmem:[%s59 + $0x14] sm:$0xff]
    %v2002 = vld [vmem:[%s59 + $0x1c] sm:$0xff]
    %v2003 = vld [vmem:[%s59 + $0x24] sm:$0xf]
    %v2004 = vld [vmem:[%s59 + $0x28] sm:$0xff]
    %v2005 = vld [vmem:[%s59 + $0x30] sm:$0xff]
    %v2006 = vld [vmem:[%s59 + $0x38] sm:$0xf]
    %v2007 = vld [vmem:[%s59 + $0x3c] sm:$0xff]
    %v2008 = vld [vmem:[%s59 + $0x44] sm:$0xff]
    %v2009 = vld [vmem:[%s59 + $0x4c] sm:$0xf]
    %v2010 = vld [vmem:[%s59 + $0x50] sm:$0xff]
    %v2011 = vld [vmem:[%s59 + $0x58] sm:$0xff]
    %v2012 = vld [vmem:[%s59 + $0x60] sm:$0xf]
    %v2013 = vld [vmem:[%s59 + $0x64] sm:$0xff]
    %v2014 = vld [vmem:[%s59 + $0x6c] sm:$0xff]
    %v2015 = vld [vmem:[%s59 + $0x74] sm:$0xf]
    %v2016 = vld [vmem:[%s59 + $0x78] sm:$0xff]
    %v2017 = vld [vmem:[%s59 + $0x80] sm:$0xff]
    %v2018 = vld [vmem:[%s59 + $0x88] sm:$0xf]
    %v2019 = vld [vmem:[%s59 + $0x8c] sm:$0xff]
    %v2020 = vld [vmem:[%s59 + $0x94] sm:$0xff]
    %v2021 = vld [vmem:[%s59 + $0x9c] sm:$0xf]
    %v2022 = vld [vmem:[%s59 + $0xa0] sm:$0xff]
    %v2023 = vld [vmem:[%s59 + $0xa8] sm:$0xff]
    %v2024 = vld [vmem:[%s59 + $0xb0] sm:$0xf]
    %v2025 = vld [vmem:[%s59 + $0xb4] sm:$0xff]
    %v2026 = vld [vmem:[%s59 + $0xbc] sm:$0xff]
    %v2027 = vld [vmem:[%s59 + $0xc4] sm:$0xf]
    %v2028 = vld [vmem:[%s59 + $0xc8] sm:$0xff]
    %v2029 = vld [vmem:[%s59 + $0xd0] sm:$0xff]
    %v2030 = vld [vmem:[%s59 + $0xd8] sm:$0xf]
    %v2031 = vld [vmem:[%s59 + $0xdc] sm:$0xff]
    %v2032 = vld [vmem:[%s59 + $0xe4] sm:$0xff]
    %v2033 = vld [vmem:[%s59 + $0xec] sm:$0xf]
    %v2034 = vld [vmem:[%s59 + $0xf0] sm:$0xff]
    %v2035 = vld [vmem:[%s59 + $0xf8] sm:$0xff]
    %v2036 = vld [vmem:[%s59 + $0x100] sm:$0xf]
    %v2037 = vld [vmem:[%s59 + $0x104] sm:$0xff]
    %v2038 = vld [vmem:[%s59 + $0x10c] sm:$0xff]
    %v2039 = vld [vmem:[%s59 + $0x114] sm:$0xf]
    %v2040 = vld [vmem:[%s59 + $0x118] sm:$0xff]
    %v2041 = vld [vmem:[%s59 + $0x120] sm:$0xff]
    %v2042 = vld [vmem:[%s59 + $0x128] sm:$0xf]
    %v2043 = vld [vmem:[%s59 + $0x12c] sm:$0xff]
    %v2044 = vld [vmem:[%s59 + $0x134] sm:$0xff]
    %v2045 = vld [vmem:[%s59 + $0x13c] sm:$0xf]
    %v2046 = vld [vmem:[%s59 + $0x140] sm:$0xff]
    %v2047 = vld [vmem:[%s59 + $0x148] sm:$0xff]
    %v2048 = vld [vmem:[%s59 + $0x150] sm:$0xf]
    %v2049 = vld [vmem:[%s59 + $0x154] sm:$0xff]
    %v2050 = vld [vmem:[%s59 + $0x15c] sm:$0xff]
    %v2051 = vld [vmem:[%s59 + $0x164] sm:$0xf]
    %v2052 = vld [vmem:[%s59 + $0x168] sm:$0xff]
    %v2053 = vld [vmem:[%s59 + $0x170] sm:$0xff]
    %v2054 = vld [vmem:[%s59 + $0x178] sm:$0xf]
    %v2055 = vld [vmem:[%s59 + $0x17c] sm:$0xff]
    %v2056 = vld [vmem:[%s59 + $0x184] sm:$0xff]
    %v2057 = vld [vmem:[%s59 + $0x18c] sm:$0xf]
    %v2058 = vld [vmem:[%s59 + $0x190] sm:$0xff]
    %v2059 = vld [vmem:[%s59 + $0x198] sm:$0xff]
    %v2060 = vld [vmem:[%s59 + $0x1a0] sm:$0xf]
    %v2061 = vld [vmem:[%s59 + $0x1a4] sm:$0xff]
    %v2062 = vld [vmem:[%s59 + $0x1ac] sm:$0xff]
    %v2063 = vld [vmem:[%s59 + $0x1b4] sm:$0xf]
    %v2064 = vld [vmem:[%s59 + $0x1b8] sm:$0xff]
    %v2065 = vld [vmem:[%s59 + $0x1c0] sm:$0xff]
    %v2066 = vld [vmem:[%s59 + $0x1c8] sm:$0xf]
    %v2067 = vld [vmem:[%s59 + $0x1cc] sm:$0xff]
    %v2068 = vld [vmem:[%s59 + $0x1d4] sm:$0xff]
    %v2069 = vld [vmem:[%s59 + $0x1dc] sm:$0xf]
    %v2070 = vld [vmem:[%s59 + $0x1e0] sm:$0xff]
    %v2071 = vld [vmem:[%s59 + $0x1e8] sm:$0xff]
    %v2072 = vld [vmem:[%s59 + $0x1f0] sm:$0xf]
    %v2073 = vld [vmem:[%s59 + $0x1f4] sm:$0xff]
    %v2074 = vld [vmem:[%s59 + $0x1fc] sm:$0xff]
    %v2075 = vld [vmem:[%s59 + $0x204] sm:$0xf]
    %v2076 = vld [vmem:[%s59 + $0x208] sm:$0xff]
    %v2077 = vld [vmem:[%s59 + $0x210] sm:$0xff]
    %v2078 = vld [vmem:[%s59 + $0x218] sm:$0xf]
    %v2079 = vld [vmem:[%s59 + $0x21c] sm:$0xff]
    %v2080 = vld [vmem:[%s59 + $0x224] sm:$0xff]
    %v2081 = vld [vmem:[%s59 + $0x22c] sm:$0xf]
    %v2082 = vld [vmem:[%s59 + $0x230] sm:$0xff]
    %v2083 = vld [vmem:[%s59 + $0x238] sm:$0xff]
    %v2084 = vld [vmem:[%s59 + $0x240] sm:$0xf]
    %v2085 = vld [vmem:[%s59 + $0x244] sm:$0xff]
    %v2086 = vld [vmem:[%s59 + $0x24c] sm:$0xff]
    %v2087 = vld [vmem:[%s59 + $0x254] sm:$0xf]
    %v2088 = vld [vmem:[%s59 + $0x258] sm:$0xff]
    %v2089 = vld [vmem:[%s59 + $0x260] sm:$0xff]
    %v2090 = vld [vmem:[%s59 + $0x268] sm:$0xf]
    %v2091 = vld [vmem:[%s59 + $0x26c] sm:$0xff]
    %v2092 = vld [vmem:[%s59 + $0x274] sm:$0xff]
    %v2093 = vld [vmem:[%s59 + $0x27c] sm:$0xf]
    %v2094 = vpack.c.bf16 %v1866, %v1864
    %v2095 = vpack.c.bf16 %v1867, %v1865
    %v2097 = vperm.slane %v1900, 0
    %v2098 = vperm.slane %v1900, 1
    %v2133 = vunpack.c.l.b16 %v1868
    %v2134 = vunpack.c.h.b16 %v1868
    %v2135 = vunpack.c.l.b16 %v1869
    %v2136 = vunpack.c.h.b16 %v1869
    %v2137 = vunpack.c.l.b16 %v1870
    %v2138 = vunpack.c.h.b16 %v1870
    %v2139 = vunpack.c.l.b16 %v1871
    %v2140 = vunpack.c.h.b16 %v1871
    %v2141 = vunpack.c.l.b16 %v1872
    %v2142 = vunpack.c.h.b16 %v1872
    %v2143 = vunpack.c.l.b16 %v1873
    %v2144 = vunpack.c.h.b16 %v1873
    %v2145 = vunpack.c.l.b16 %v1874
    %v2146 = vunpack.c.h.b16 %v1874
    %v2147 = vunpack.c.l.b16 %v1875
    %v2148 = vunpack.c.h.b16 %v1875
    %v2149 = vunpack.c.l.b16 %v1876
    %v2150 = vunpack.c.h.b16 %v1876
    %v2151 = vunpack.c.l.b16 %v1877
    %v2152 = vunpack.c.h.b16 %v1877
    %v2153 = vunpack.c.l.b16 %v1878
    %v2154 = vunpack.c.h.b16 %v1878
    %v2155 = vunpack.c.l.b16 %v1879
    %v2156 = vunpack.c.h.b16 %v1879
    %v2157 = vunpack.c.l.b16 %v1880
    %v2158 = vunpack.c.h.b16 %v1880
    %v2159 = vunpack.c.l.b16 %v1881
    %v2160 = vunpack.c.h.b16 %v1881
    %v2161 = vunpack.c.l.b16 %v1882
    %v2162 = vunpack.c.h.b16 %v1882
    %v2163 = vunpack.c.l.b16 %v1883
    %v2164 = vunpack.c.h.b16 %v1883
    %v2165 = vunpack.c.l.b16 %v1884
    %v2166 = vunpack.c.h.b16 %v1884
    %v2167 = vunpack.c.l.b16 %v1885
    %v2168 = vunpack.c.h.b16 %v1885
    %v2169 = vunpack.c.l.b16 %v1886
    %v2170 = vunpack.c.h.b16 %v1886
    %v2171 = vunpack.c.l.b16 %v1887
    %v2172 = vunpack.c.h.b16 %v1887
    %v2173 = vunpack.c.l.b16 %v1888
    %v2174 = vunpack.c.h.b16 %v1888
    %v2175 = vunpack.c.l.b16 %v1889
    %v2176 = vunpack.c.h.b16 %v1889
    %v2177 = vunpack.c.l.b16 %v1890
    %v2178 = vunpack.c.h.b16 %v1890
    %v2179 = vunpack.c.l.b16 %v1891
    %v2180 = vunpack.c.h.b16 %v1891
    %v2181 = vunpack.c.l.b16 %v1892
    %v2182 = vunpack.c.h.b16 %v1892
    %v2183 = vunpack.c.l.b16 %v1893
    %v2184 = vunpack.c.h.b16 %v1893
    %v2185 = vunpack.c.l.b16 %v1894
    %v2186 = vunpack.c.h.b16 %v1894
    %v2187 = vunpack.c.l.b16 %v1895
    %v2188 = vunpack.c.h.b16 %v1895
    %v2189 = vunpack.c.l.b16 %v1896
    %v2190 = vunpack.c.h.b16 %v1896
    %v2191 = vunpack.c.l.b16 %v1897
    %v2192 = vunpack.c.h.b16 %v1897
    %v2193 = vunpack.c.l.b16 %v1898
    %v2194 = vunpack.c.h.b16 %v1898
    %v2195 = vunpack.c.l.b16 %v1899
    %v2196 = vunpack.c.h.b16 %v1899
    %v2197 = vpack.c.b16 %v2135, %v2133
    %v2198 = vpack.c.b16 %v2136, %v2134
    %v2199 = vpack.c.b16 %v2139, %v2137
    %v2200 = vpack.c.b16 %v2140, %v2138
    %v2201 = vpack.c.b16 %v2143, %v2141
    %v2202 = vpack.c.b16 %v2144, %v2142
    %v2203 = vpack.c.b16 %v2147, %v2145
    %v2204 = vpack.c.b16 %v2148, %v2146
    %v2205 = vpack.c.b16 %v2151, %v2149
    %v2206 = vpack.c.b16 %v2152, %v2150
    %v2207 = vpack.c.b16 %v2155, %v2153
    %v2208 = vpack.c.b16 %v2156, %v2154
    %v2209 = vpack.c.b16 %v2159, %v2157
    %v2210 = vpack.c.b16 %v2160, %v2158
    %v2211 = vpack.c.b16 %v2163, %v2161
    %v2212 = vpack.c.b16 %v2164, %v2162
    %v2213 = vpack.c.b16 %v2167, %v2165
    %v2214 = vpack.c.b16 %v2168, %v2166
    %v2215 = vpack.c.b16 %v2171, %v2169
    %v2216 = vpack.c.b16 %v2172, %v2170
    %v2217 = vpack.c.b16 %v2175, %v2173
    %v2218 = vpack.c.b16 %v2176, %v2174
    %v2219 = vpack.c.b16 %v2179, %v2177
    %v2220 = vpack.c.b16 %v2180, %v2178
    %v2221 = vpack.c.b16 %v2183, %v2181
    %v2222 = vpack.c.b16 %v2184, %v2182
    %v2223 = vpack.c.b16 %v2187, %v2185
    %v2224 = vpack.c.b16 %v2188, %v2186
    %v2225 = vpack.c.b16 %v2191, %v2189
    %v2226 = vpack.c.b16 %v2192, %v2190
    %v2227 = vpack.c.b16 %v2195, %v2193
    %v2228 = vpack.c.b16 %v2196, %v2194
    %2261 = vmatpush.bf16.msra.mxu0 %v2211
    %2262 = vmatpush.bf16.msra.mxu0 %v2209
    %2263 = vmatpush.bf16.msra.mxu0 %v2207
    %2264 = vmatpush.bf16.msra.mxu0 %v2205
    %2265 = vmatpush.bf16.msra.mxu0 %v2203
    %2266 = vmatpush.bf16.msra.mxu0 %v2201
    %2267 = vmatpush.bf16.msra.mxu0 %v2199
    %2268 = vmatpush.bf16.msra.mxu0 %v2197
    %2269 = vmatmul.bf16.gmra.mxu0 %v2094
    %v2270 = vpop.f32.mrf.mxu0
    %v2271 = vadd.f32 %v2097, %v2270
    %v2272 = vpop.f32.mrf.mxu0
    %v2273 = vadd.f32 %v2097, %v2272
    %2274 = vdwg.mxu0
    %2275 = vmatpush.bf16.msra.mxu0 %v2227
    %2276 = vmatpush.bf16.msra.mxu0 %v2225
    %2277 = vmatpush.bf16.msra.mxu0 %v2223
    %2278 = vmatpush.bf16.msra.mxu0 %v2221
    %2279 = vmatpush.bf16.msra.mxu0 %v2219
    %2280 = vmatpush.bf16.msra.mxu0 %v2217
    %2281 = vmatpush.bf16.msra.mxu0 %v2215
    %2282 = vmatpush.bf16.msra.mxu0 %v2213
    %2283 = vmatmul.bf16.gmra.mxu0 %v2095
    %v2284 = vpop.f32.mrf.mxu0
    %v2285 = vadd.f32 %v2271, %v2284
    %v2286 = vpop.f32.mrf.mxu0
    %v2287 = vadd.f32 %v2273, %v2286
    %2288 = vdwg.mxu0
    %2289 = vmatpush.bf16.msra.mxu0 %v2212
    %2290 = vmatpush.bf16.msra.mxu0 %v2210
    %2291 = vmatpush.bf16.msra.mxu0 %v2208
    %2292 = vmatpush.bf16.msra.mxu0 %v2206
    %2293 = vmatpush.bf16.msra.mxu0 %v2204
    %2294 = vmatpush.bf16.msra.mxu0 %v2202
    %2295 = vmatpush.bf16.msra.mxu0 %v2200
    %2296 = vmatpush.bf16.msra.mxu0 %v2198
    %2297 = vmatmul.bf16.gmra.mxu0 %v2094
    %v2298 = vpop.f32.mrf.mxu0
    %v2299 = vadd.f32 %v2098, %v2298
    %v2300 = vpop.f32.mrf.mxu0
    %v2301 = vadd.f32 %v2098, %v2300
    %2302 = vdwg.mxu0
    %2303 = vmatpush.bf16.msra.mxu0 %v2228
    %2304 = vmatpush.bf16.msra.mxu0 %v2226
    %2305 = vmatpush.bf16.msra.mxu0 %v2224
    %2306 = vmatpush.bf16.msra.mxu0 %v2222
    %2307 = vmatpush.bf16.msra.mxu0 %v2220
    %2308 = vmatpush.bf16.msra.mxu0 %v2218
    %2309 = vmatpush.bf16.msra.mxu0 %v2216
    %2310 = vmatpush.bf16.msra.mxu0 %v2214
    %2311 = vmatmul.bf16.gmra.mxu0 %v2095
    %v2312 = vpop.f32.mrf.mxu0
    %v2313 = vadd.f32 %v2299, %v2312
    %v2314 = vpop.f32.mrf.mxu0
    %v2315 = vadd.f32 %v2301, %v2314
    %2316 = vdwg.mxu0
    %v2317 = vmax.f32 %v2285, 0.0
    %v2318 = vmax.f32 %v2313, 0.0
    %v2319 = vmax.f32 %v2287, 0.0
    %v2320 = vmax.f32 %v2315, 0.0
    %v2321 = vpack.c.bf16 %v2319, %v2317
    %v2322 = vpack.c.bf16 %v2320, %v2318
    %2323 = vmatpush.bf16.msra.mxu0 0
    %2324 = vmatpush.bf16.msra.mxu0 0
    %2325 = vmatpush.bf16.msra.mxu0 0
    %2326 = vmatpush.bf16.msra.mxu0 0
    %2327 = vmatpush.bf16.msra.mxu0 0
    %2328 = vmatpush.bf16.msra.mxu0 0
    %2329 = vmatpush.bf16.msra.mxu0 0
    %2330 = vmatpush.bf16.msra.mxu0 %v2321
    %2331 = vmatmul.bf16.gmra.mxu0 %v215
    %v2332 = vpop.f32.mrf.mxu0
    %v2333 = vadd.f32 0.0, %v2332
    %v2334 = vpop.f32.mrf.mxu0
    %v2335 = vadd.f32 0.0, %v2334
    %2336 = vdwg.mxu0
    %2337 = vmatpush.bf16.msra.mxu0 0
    %2338 = vmatpush.bf16.msra.mxu0 0
    %2339 = vmatpush.bf16.msra.mxu0 0
    %2340 = vmatpush.bf16.msra.mxu0 0
    %2341 = vmatpush.bf16.msra.mxu0 0
    %2342 = vmatpush.bf16.msra.mxu0 0
    %2343 = vmatpush.bf16.msra.mxu0 0
    %2344 = vmatpush.bf16.msra.mxu0 %v2322
    %2345 = vmatmul.bf16.gmra.mxu0 %v215
    %v2346 = vpop.f32.mrf.mxu0
    %v2347 = vadd.f32 0.0, %v2346
    %v2348 = vpop.f32.mrf.mxu0
    %v2349 = vadd.f32 0.0, %v2348
    %2350 = vdwg.mxu0
    %v2351 = vmul.f32 %v2333, %v234
    %v2352 = vmul.f32 %v2347, %v234
    %v2353 = vmul.f32 %v2335, %v239
    %v2354 = vmul.f32 %v2349, %v239
    %v2355 = vpack.c.bf16 %v2353, %v2351
    %v2356 = vpack.c.bf16 %v2354, %v2352
    %v2358 = vperm.slane %v1997, 0
    %v2359 = vperm.slane %v1997, 1
    %v2360 = vperm.slane %v1997, 2
    %v2361 = vperm.slane %v1997, 3
    %v2362 = vperm.slane %v1997, 4
    %v2464 = vunpack.c.l.b16 %v1901
    %v2465 = vunpack.c.h.b16 %v1901
    %v2466 = vunpack.c.l.b16 %v1902
    %v2467 = vunpack.c.h.b16 %v1902
    %v2468 = vunpack.c.l.b16 %v1903
    %v2469 = vunpack.c.l.b16 %v1904
    %v2470 = vunpack.c.h.b16 %v1904
    %v2471 = vunpack.c.l.b16 %v1905
    %v2472 = vunpack.c.h.b16 %v1905
    %v2473 = vunpack.c.l.b16 %v1906
    %v2474 = vunpack.c.l.b16 %v1907
    %v2475 = vunpack.c.h.b16 %v1907
    %v2476 = vunpack.c.l.b16 %v1908
    %v2477 = vunpack.c.h.b16 %v1908
    %v2478 = vunpack.c.l.b16 %v1909
    %v2479 = vunpack.c.l.b16 %v1910
    %v2480 = vunpack.c.h.b16 %v1910
    %v2481 = vunpack.c.l.b16 %v1911
    %v2482 = vunpack.c.h.b16 %v1911
    %v2483 = vunpack.c.l.b16 %v1912
    %v2484 = vunpack.c.l.b16 %v1913
    %v2485 = vunpack.c.h.b16 %v1913
    %v2486 = vunpack.c.l.b16 %v1914
    %v2487 = vunpack.c.h.b16 %v1914
    %v2488 = vunpack.c.l.b16 %v1915
    %v2489 = vunpack.c.l.b16 %v1916
    %v2490 = vunpack.c.h.b16 %v1916
    %v2491 = vunpack.c.l.b16 %v1917
    %v2492 = vunpack.c.h.b16 %v1917
    %v2493 = vunpack.c.l.b16 %v1918
    %v2494 = vunpack.c.l.b16 %v1919
    %v2495 = vunpack.c.h.b16 %v1919
    %v2496 = vunpack.c.l.b16 %v1920
    %v2497 = vunpack.c.h.b16 %v1920
    %v2498 = vunpack.c.l.b16 %v1921
    %v2499 = vunpack.c.l.b16 %v1922
    %v2500 = vunpack.c.h.b16 %v1922
    %v2501 = vunpack.c.l.b16 %v1923
    %v2502 = vunpack.c.h.b16 %v1923
    %v2503 = vunpack.c.l.b16 %v1924
    %v2504 = vunpack.c.l.b16 %v1925
    %v2505 = vunpack.c.h.b16 %v1925
    %v2506 = vunpack.c.l.b16 %v1926
    %v2507 = vunpack.c.h.b16 %v1926
    %v2508 = vunpack.c.l.b16 %v1927
    %v2509 = vunpack.c.l.b16 %v1928
    %v2510 = vunpack.c.h.b16 %v1928
    %v2511 = vunpack.c.l.b16 %v1929
    %v2512 = vunpack.c.h.b16 %v1929
    %v2513 = vunpack.c.l.b16 %v1930
    %v2514 = vunpack.c.l.b16 %v1931
    %v2515 = vunpack.c.h.b16 %v1931
    %v2516 = vunpack.c.l.b16 %v1932
    %v2517 = vunpack.c.h.b16 %v1932
    %v2518 = vunpack.c.l.b16 %v1933
    %v2519 = vunpack.c.l.b16 %v1934
    %v2520 = vunpack.c.h.b16 %v1934
    %v2521 = vunpack.c.l.b16 %v1935
    %v2522 = vunpack.c.h.b16 %v1935
    %v2523 = vunpack.c.l.b16 %v1936
    %v2524 = vunpack.c.l.b16 %v1937
    %v2525 = vunpack.c.h.b16 %v1937
    %v2526 = vunpack.c.l.b16 %v1938
    %v2527 = vunpack.c.h.b16 %v1938
    %v2528 = vunpack.c.l.b16 %v1939
    %v2529 = vunpack.c.l.b16 %v1940
    %v2530 = vunpack.c.h.b16 %v1940
    %v2531 = vunpack.c.l.b16 %v1941
    %v2532 = vunpack.c.h.b16 %v1941
    %v2533 = vunpack.c.l.b16 %v1942
    %v2534 = vunpack.c.l.b16 %v1943
    %v2535 = vunpack.c.h.b16 %v1943
    %v2536 = vunpack.c.l.b16 %v1944
    %v2537 = vunpack.c.h.b16 %v1944
    %v2538 = vunpack.c.l.b16 %v1945
    %v2539 = vunpack.c.l.b16 %v1946
    %v2540 = vunpack.c.h.b16 %v1946
    %v2541 = vunpack.c.l.b16 %v1947
    %v2542 = vunpack.c.h.b16 %v1947
    %v2543 = vunpack.c.l.b16 %v1948
    %v2544 = vunpack.c.l.b16 %v1949
    %v2545 = vunpack.c.h.b16 %v1949
    %v2546 = vunpack.c.l.b16 %v1950
    %v2547 = vunpack.c.h.b16 %v1950
    %v2548 = vunpack.c.l.b16 %v1951
    %v2549 = vunpack.c.l.b16 %v1952
    %v2550 = vunpack.c.h.b16 %v1952
    %v2551 = vunpack.c.l.b16 %v1953
    %v2552 = vunpack.c.h.b16 %v1953
    %v2553 = vunpack.c.l.b16 %v1954
    %v2554 = vunpack.c.l.b16 %v1955
    %v2555 = vunpack.c.h.b16 %v1955
    %v2556 = vunpack.c.l.b16 %v1956
    %v2557 = vunpack.c.h.b16 %v1956
    %v2558 = vunpack.c.l.b16 %v1957
    %v2559 = vunpack.c.l.b16 %v1958
    %v2560 = vunpack.c.h.b16 %v1958
    %v2561 = vunpack.c.l.b16 %v1959
    %v2562 = vunpack.c.h.b16 %v1959
    %v2563 = vunpack.c.l.b16 %v1960
    %v2564 = vunpack.c.l.b16 %v1961
    %v2565 = vunpack.c.h.b16 %v1961
    %v2566 = vunpack.c.l.b16 %v1962
    %v2567 = vunpack.c.h.b16 %v1962
    %v2568 = vunpack.c.l.b16 %v1963
    %v2569 = vunpack.c.l.b16 %v1964
    %v2570 = vunpack.c.h.b16 %v1964
    %v2571 = vunpack.c.l.b16 %v1965
    %v2572 = vunpack.c.h.b16 %v1965
    %v2573 = vunpack.c.l.b16 %v1966
    %v2574 = vunpack.c.l.b16 %v1967
    %v2575 = vunpack.c.h.b16 %v1967
    %v2576 = vunpack.c.l.b16 %v1968
    %v2577 = vunpack.c.h.b16 %v1968
    %v2578 = vunpack.c.l.b16 %v1969
    %v2579 = vunpack.c.l.b16 %v1970
    %v2580 = vunpack.c.h.b16 %v1970
    %v2581 = vunpack.c.l.b16 %v1971
    %v2582 = vunpack.c.h.b16 %v1971
    %v2583 = vunpack.c.l.b16 %v1972
    %v2584 = vunpack.c.l.b16 %v1973
    %v2585 = vunpack.c.h.b16 %v1973
    %v2586 = vunpack.c.l.b16 %v1974
    %v2587 = vunpack.c.h.b16 %v1974
    %v2588 = vunpack.c.l.b16 %v1975
    %v2589 = vunpack.c.l.b16 %v1976
    %v2590 = vunpack.c.h.b16 %v1976
    %v2591 = vunpack.c.l.b16 %v1977
    %v2592 = vunpack.c.h.b16 %v1977
    %v2593 = vunpack.c.l.b16 %v1978
    %v2594 = vunpack.c.l.b16 %v1979
    %v2595 = vunpack.c.h.b16 %v1979
    %v2596 = vunpack.c.l.b16 %v1980
    %v2597 = vunpack.c.h.b16 %v1980
    %v2598 = vunpack.c.l.b16 %v1981
    %v2599 = vunpack.c.l.b16 %v1982
    %v2600 = vunpack.c.h.b16 %v1982
    %v2601 = vunpack.c.l.b16 %v1983
    %v2602 = vunpack.c.h.b16 %v1983
    %v2603 = vunpack.c.l.b16 %v1984
    %v2604 = vunpack.c.l.b16 %v1985
    %v2605 = vunpack.c.h.b16 %v1985
    %v2606 = vunpack.c.l.b16 %v1986
    %v2607 = vunpack.c.h.b16 %v1986
    %v2608 = vunpack.c.l.b16 %v1987
    %v2609 = vunpack.c.l.b16 %v1988
    %v2610 = vunpack.c.h.b16 %v1988
    %v2611 = vunpack.c.l.b16 %v1989
    %v2612 = vunpack.c.h.b16 %v1989
    %v2613 = vunpack.c.l.b16 %v1990
    %v2614 = vunpack.c.l.b16 %v1991
    %v2615 = vunpack.c.h.b16 %v1991
    %v2616 = vunpack.c.l.b16 %v1992
    %v2617 = vunpack.c.h.b16 %v1992
    %v2618 = vunpack.c.l.b16 %v1993
    %v2619 = vunpack.c.l.b16 %v1994
    %v2620 = vunpack.c.h.b16 %v1994
    %v2621 = vunpack.c.l.b16 %v1995
    %v2622 = vunpack.c.h.b16 %v1995
    %v2623 = vunpack.c.l.b16 %v1996
    %v2624 = vpack.c.b16 %v2469, %v2464
    %v2625 = vpack.c.b16 %v2470, %v2465
    %v2626 = vpack.c.b16 %v2471, %v2466
    %v2627 = vpack.c.b16 %v2472, %v2467
    %v2628 = vpack.c.b16 %v2473, %v2468
    %v2629 = vpack.c.b16 %v2479, %v2474
    %v2630 = vpack.c.b16 %v2480, %v2475
    %v2631 = vpack.c.b16 %v2481, %v2476
    %v2632 = vpack.c.b16 %v2482, %v2477
    %v2633 = vpack.c.b16 %v2483, %v2478
    %v2634 = vpack.c.b16 %v2489, %v2484
    %v2635 = vpack.c.b16 %v2490, %v2485
    %v2636 = vpack.c.b16 %v2491, %v2486
    %v2637 = vpack.c.b16 %v2492, %v2487
    %v2638 = vpack.c.b16 %v2493, %v2488
    %v2639 = vpack.c.b16 %v2499, %v2494
    %v2640 = vpack.c.b16 %v2500, %v2495
    %v2641 = vpack.c.b16 %v2501, %v2496
    %v2642 = vpack.c.b16 %v2502, %v2497
    %v2643 = vpack.c.b16 %v2503, %v2498
    %v2644 = vpack.c.b16 %v2509, %v2504
    %v2645 = vpack.c.b16 %v2510, %v2505
    %v2646 = vpack.c.b16 %v2511, %v2506
    %v2647 = vpack.c.b16 %v2512, %v2507
    %v2648 = vpack.c.b16 %v2513, %v2508
    %v2649 = vpack.c.b16 %v2519, %v2514
    %v2650 = vpack.c.b16 %v2520, %v2515
    %v2651 = vpack.c.b16 %v2521, %v2516
    %v2652 = vpack.c.b16 %v2522, %v2517
    %v2653 = vpack.c.b16 %v2523, %v2518
    %v2654 = vpack.c.b16 %v2529, %v2524
    %v2655 = vpack.c.b16 %v2530, %v2525
    %v2656 = vpack.c.b16 %v2531, %v2526
    %v2657 = vpack.c.b16 %v2532, %v2527
    %v2658 = vpack.c.b16 %v2533, %v2528
    %v2659 = vpack.c.b16 %v2539, %v2534
    %v2660 = vpack.c.b16 %v2540, %v2535
    %v2661 = vpack.c.b16 %v2541, %v2536
    %v2662 = vpack.c.b16 %v2542, %v2537
    %v2663 = vpack.c.b16 %v2543, %v2538
    %v2664 = vpack.c.b16 %v2549, %v2544
    %v2665 = vpack.c.b16 %v2550, %v2545
    %v2666 = vpack.c.b16 %v2551, %v2546
    %v2667 = vpack.c.b16 %v2552, %v2547
    %v2668 = vpack.c.b16 %v2553, %v2548
    %v2669 = vpack.c.b16 %v2559, %v2554
    %v2670 = vpack.c.b16 %v2560, %v2555
    %v2671 = vpack.c.b16 %v2561, %v2556
    %v2672 = vpack.c.b16 %v2562, %v2557
    %v2673 = vpack.c.b16 %v2563, %v2558
    %v2674 = vpack.c.b16 %v2569, %v2564
    %v2675 = vpack.c.b16 %v2570, %v2565
    %v2676 = vpack.c.b16 %v2571, %v2566
    %v2677 = vpack.c.b16 %v2572, %v2567
    %v2678 = vpack.c.b16 %v2573, %v2568
    %v2679 = vpack.c.b16 %v2579, %v2574
    %v2680 = vpack.c.b16 %v2580, %v2575
    %v2681 = vpack.c.b16 %v2581, %v2576
    %v2682 = vpack.c.b16 %v2582, %v2577
    %v2683 = vpack.c.b16 %v2583, %v2578
    %v2684 = vpack.c.b16 %v2589, %v2584
    %v2685 = vpack.c.b16 %v2590, %v2585
    %v2686 = vpack.c.b16 %v2591, %v2586
    %v2687 = vpack.c.b16 %v2592, %v2587
    %v2688 = vpack.c.b16 %v2593, %v2588
    %v2689 = vpack.c.b16 %v2599, %v2594
    %v2690 = vpack.c.b16 %v2600, %v2595
    %v2691 = vpack.c.b16 %v2601, %v2596
    %v2692 = vpack.c.b16 %v2602, %v2597
    %v2693 = vpack.c.b16 %v2603, %v2598
    %v2694 = vpack.c.b16 %v2609, %v2604
    %v2695 = vpack.c.b16 %v2610, %v2605
    %v2696 = vpack.c.b16 %v2611, %v2606
    %v2697 = vpack.c.b16 %v2612, %v2607
    %v2698 = vpack.c.b16 %v2613, %v2608
    %v2699 = vpack.c.b16 %v2619, %v2614
    %v2700 = vpack.c.b16 %v2620, %v2615
    %v2701 = vpack.c.b16 %v2621, %v2616
    %v2702 = vpack.c.b16 %v2622, %v2617
    %v2703 = vpack.c.b16 %v2623, %v2618
    %2784 = vmatpush.bf16.msra.mxu0 %v2659
    %2785 = vmatpush.bf16.msra.mxu0 %v2654
    %2786 = vmatpush.bf16.msra.mxu0 %v2649
    %2787 = vmatpush.bf16.msra.mxu0 %v2644
    %2788 = vmatpush.bf16.msra.mxu0 %v2639
    %2789 = vmatpush.bf16.msra.mxu0 %v2634
    %2790 = vmatpush.bf16.msra.mxu0 %v2629
    %2791 = vmatpush.bf16.msra.mxu0 %v2624
    %2792 = vmatmul.bf16.gmra.mxu0 %v2355
    %v2793 = vpop.f32.mrf.mxu0
    %v2794 = vadd.f32 %v2358, %v2793
    %v2795 = vpop.f32.mrf.mxu0
    %v2796 = vadd.f32 %v2358, %v2795
    %2797 = vdwg.mxu0
    %2798 = vmatpush.bf16.msra.mxu0 %v2699
    %2799 = vmatpush.bf16.msra.mxu0 %v2694
    %2800 = vmatpush.bf16.msra.mxu0 %v2689
    %2801 = vmatpush.bf16.msra.mxu0 %v2684
    %2802 = vmatpush.bf16.msra.mxu0 %v2679
    %2803 = vmatpush.bf16.msra.mxu0 %v2674
    %2804 = vmatpush.bf16.msra.mxu0 %v2669
    %2805 = vmatpush.bf16.msra.mxu0 %v2664
    %2806 = vmatmul.bf16.gmra.mxu0 %v2356
    %v2807 = vpop.f32.mrf.mxu0
    %v2808 = vadd.f32 %v2794, %v2807
    %v2809 = vpop.f32.mrf.mxu0
    %v2810 = vadd.f32 %v2796, %v2809
    %2811 = vdwg.mxu0
    %2812 = vmatpush.bf16.msra.mxu0 %v2660
    %2813 = vmatpush.bf16.msra.mxu0 %v2655
    %2814 = vmatpush.bf16.msra.mxu0 %v2650
    %2815 = vmatpush.bf16.msra.mxu0 %v2645
    %2816 = vmatpush.bf16.msra.mxu0 %v2640
    %2817 = vmatpush.bf16.msra.mxu0 %v2635
    %2818 = vmatpush.bf16.msra.mxu0 %v2630
    %2819 = vmatpush.bf16.msra.mxu0 %v2625
    %2820 = vmatmul.bf16.gmra.mxu0 %v2355
    %v2821 = vpop.f32.mrf.mxu0
    %v2822 = vadd.f32 %v2359, %v2821
    %v2823 = vpop.f32.mrf.mxu0
    %v2824 = vadd.f32 %v2359, %v2823
    %2825 = vdwg.mxu0
    %2826 = vmatpush.bf16.msra.mxu0 %v2700
    %2827 = vmatpush.bf16.msra.mxu0 %v2695
    %2828 = vmatpush.bf16.msra.mxu0 %v2690
    %2829 = vmatpush.bf16.msra.mxu0 %v2685
    %2830 = vmatpush.bf16.msra.mxu0 %v2680
    %2831 = vmatpush.bf16.msra.mxu0 %v2675
    %2832 = vmatpush.bf16.msra.mxu0 %v2670
    %2833 = vmatpush.bf16.msra.mxu0 %v2665
    %2834 = vmatmul.bf16.gmra.mxu0 %v2356
    %v2835 = vpop.f32.mrf.mxu0
    %v2836 = vadd.f32 %v2822, %v2835
    %v2837 = vpop.f32.mrf.mxu0
    %v2838 = vadd.f32 %v2824, %v2837
    %2839 = vdwg.mxu0
    %2840 = vmatpush.bf16.msra.mxu0 %v2661
    %2841 = vmatpush.bf16.msra.mxu0 %v2656
    %2842 = vmatpush.bf16.msra.mxu0 %v2651
    %2843 = vmatpush.bf16.msra.mxu0 %v2646
    %2844 = vmatpush.bf16.msra.mxu0 %v2641
    %2845 = vmatpush.bf16.msra.mxu0 %v2636
    %2846 = vmatpush.bf16.msra.mxu0 %v2631
    %2847 = vmatpush.bf16.msra.mxu0 %v2626
    %2848 = vmatmul.bf16.gmra.mxu0 %v2355
    %v2849 = vpop.f32.mrf.mxu0
    %v2850 = vadd.f32 %v2360, %v2849
    %v2851 = vpop.f32.mrf.mxu0
    %v2852 = vadd.f32 %v2360, %v2851
    %2853 = vdwg.mxu0
    %2854 = vmatpush.bf16.msra.mxu0 %v2701
    %2855 = vmatpush.bf16.msra.mxu0 %v2696
    %2856 = vmatpush.bf16.msra.mxu0 %v2691
    %2857 = vmatpush.bf16.msra.mxu0 %v2686
    %2858 = vmatpush.bf16.msra.mxu0 %v2681
    %2859 = vmatpush.bf16.msra.mxu0 %v2676
    %2860 = vmatpush.bf16.msra.mxu0 %v2671
    %2861 = vmatpush.bf16.msra.mxu0 %v2666
    %2862 = vmatmul.bf16.gmra.mxu0 %v2356
    %v2863 = vpop.f32.mrf.mxu0
    %v2864 = vadd.f32 %v2850, %v2863
    %v2865 = vpop.f32.mrf.mxu0
    %v2866 = vadd.f32 %v2852, %v2865
    %2867 = vdwg.mxu0
    %2868 = vmatpush.bf16.msra.mxu0 %v2662
    %2869 = vmatpush.bf16.msra.mxu0 %v2657
    %2870 = vmatpush.bf16.msra.mxu0 %v2652
    %2871 = vmatpush.bf16.msra.mxu0 %v2647
    %2872 = vmatpush.bf16.msra.mxu0 %v2642
    %2873 = vmatpush.bf16.msra.mxu0 %v2637
    %2874 = vmatpush.bf16.msra.mxu0 %v2632
    %2875 = vmatpush.bf16.msra.mxu0 %v2627
    %2876 = vmatmul.bf16.gmra.mxu0 %v2355
    %v2877 = vpop.f32.mrf.mxu0
    %v2878 = vadd.f32 %v2361, %v2877
    %v2879 = vpop.f32.mrf.mxu0
    %v2880 = vadd.f32 %v2361, %v2879
    %2881 = vdwg.mxu0
    %2882 = vmatpush.bf16.msra.mxu0 %v2702
    %2883 = vmatpush.bf16.msra.mxu0 %v2697
    %2884 = vmatpush.bf16.msra.mxu0 %v2692
    %2885 = vmatpush.bf16.msra.mxu0 %v2687
    %2886 = vmatpush.bf16.msra.mxu0 %v2682
    %2887 = vmatpush.bf16.msra.mxu0 %v2677
    %2888 = vmatpush.bf16.msra.mxu0 %v2672
    %2889 = vmatpush.bf16.msra.mxu0 %v2667
    %2890 = vmatmul.bf16.gmra.mxu0 %v2356
    %v2891 = vpop.f32.mrf.mxu0
    %v2892 = vadd.f32 %v2878, %v2891
    %v2893 = vpop.f32.mrf.mxu0
    %v2894 = vadd.f32 %v2880, %v2893
    %2895 = vdwg.mxu0
    %2896 = vmatpush.bf16.msra.mxu0 %v2663
    %2897 = vmatpush.bf16.msra.mxu0 %v2658
    %2898 = vmatpush.bf16.msra.mxu0 %v2653
    %2899 = vmatpush.bf16.msra.mxu0 %v2648
    %2900 = vmatpush.bf16.msra.mxu0 %v2643
    %2901 = vmatpush.bf16.msra.mxu0 %v2638
    %2902 = vmatpush.bf16.msra.mxu0 %v2633
    %2903 = vmatpush.bf16.msra.mxu0 %v2628
    %2904 = vmatmul.bf16.gmra.mxu0 %v2355
    %v2905 = vpop.f32.mrf.mxu0
    %v2906 = vadd.f32 %v2362, %v2905
    %v2907 = vpop.f32.mrf.mxu0
    %v2908 = vadd.f32 %v2362, %v2907
    %2909 = vdwg.mxu0
    %2910 = vmatpush.bf16.msra.mxu0 %v2703
    %2911 = vmatpush.bf16.msra.mxu0 %v2698
    %2912 = vmatpush.bf16.msra.mxu0 %v2693
    %2913 = vmatpush.bf16.msra.mxu0 %v2688
    %2914 = vmatpush.bf16.msra.mxu0 %v2683
    %2915 = vmatpush.bf16.msra.mxu0 %v2678
    %2916 = vmatpush.bf16.msra.mxu0 %v2673
    %2917 = vmatpush.bf16.msra.mxu0 %v2668
    %2918 = vmatmul.bf16.gmra.mxu0 %v2356
    %v2919 = vpop.f32.mrf.mxu0
    %v2920 = vadd.f32 %v2906, %v2919
    %v2921 = vpop.f32.mrf.mxu0
    %v2922 = vadd.f32 %v2908, %v2921
    %2923 = vdwg.mxu0
    %v3020 = vunpack.c.l.b16 %v1998
    %v3021 = vunpack.c.h.b16 %v1998
    %v3022 = vunpack.c.l.b16 %v1999
    %v3023 = vunpack.c.h.b16 %v1999
    %v3024 = vunpack.c.l.b16 %v2000
    %v3025 = vunpack.c.l.b16 %v2001
    %v3026 = vunpack.c.h.b16 %v2001
    %v3027 = vunpack.c.l.b16 %v2002
    %v3028 = vunpack.c.h.b16 %v2002
    %v3029 = vunpack.c.l.b16 %v2003
    %v3030 = vunpack.c.l.b16 %v2004
    %v3031 = vunpack.c.h.b16 %v2004
    %v3032 = vunpack.c.l.b16 %v2005
    %v3033 = vunpack.c.h.b16 %v2005
    %v3034 = vunpack.c.l.b16 %v2006
    %v3035 = vunpack.c.l.b16 %v2007
    %v3036 = vunpack.c.h.b16 %v2007
    %v3037 = vunpack.c.l.b16 %v2008
    %v3038 = vunpack.c.h.b16 %v2008
    %v3039 = vunpack.c.l.b16 %v2009
    %v3040 = vunpack.c.l.b16 %v2010
    %v3041 = vunpack.c.h.b16 %v2010
    %v3042 = vunpack.c.l.b16 %v2011
    %v3043 = vunpack.c.h.b16 %v2011
    %v3044 = vunpack.c.l.b16 %v2012
    %v3045 = vunpack.c.l.b16 %v2013
    %v3046 = vunpack.c.h.b16 %v2013
    %v3047 = vunpack.c.l.b16 %v2014
    %v3048 = vunpack.c.h.b16 %v2014
    %v3049 = vunpack.c.l.b16 %v2015
    %v3050 = vunpack.c.l.b16 %v2016
    %v3051 = vunpack.c.h.b16 %v2016
    %v3052 = vunpack.c.l.b16 %v2017
    %v3053 = vunpack.c.h.b16 %v2017
    %v3054 = vunpack.c.l.b16 %v2018
    %v3055 = vunpack.c.l.b16 %v2019
    %v3056 = vunpack.c.h.b16 %v2019
    %v3057 = vunpack.c.l.b16 %v2020
    %v3058 = vunpack.c.h.b16 %v2020
    %v3059 = vunpack.c.l.b16 %v2021
    %v3060 = vunpack.c.l.b16 %v2022
    %v3061 = vunpack.c.h.b16 %v2022
    %v3062 = vunpack.c.l.b16 %v2023
    %v3063 = vunpack.c.h.b16 %v2023
    %v3064 = vunpack.c.l.b16 %v2024
    %v3065 = vunpack.c.l.b16 %v2025
    %v3066 = vunpack.c.h.b16 %v2025
    %v3067 = vunpack.c.l.b16 %v2026
    %v3068 = vunpack.c.h.b16 %v2026
    %v3069 = vunpack.c.l.b16 %v2027
    %v3070 = vunpack.c.l.b16 %v2028
    %v3071 = vunpack.c.h.b16 %v2028
    %v3072 = vunpack.c.l.b16 %v2029
    %v3073 = vunpack.c.h.b16 %v2029
    %v3074 = vunpack.c.l.b16 %v2030
    %v3075 = vunpack.c.l.b16 %v2031
    %v3076 = vunpack.c.h.b16 %v2031
    %v3077 = vunpack.c.l.b16 %v2032
    %v3078 = vunpack.c.h.b16 %v2032
    %v3079 = vunpack.c.l.b16 %v2033
    %v3080 = vunpack.c.l.b16 %v2034
    %v3081 = vunpack.c.h.b16 %v2034
    %v3082 = vunpack.c.l.b16 %v2035
    %v3083 = vunpack.c.h.b16 %v2035
    %v3084 = vunpack.c.l.b16 %v2036
    %v3085 = vunpack.c.l.b16 %v2037
    %v3086 = vunpack.c.h.b16 %v2037
    %v3087 = vunpack.c.l.b16 %v2038
    %v3088 = vunpack.c.h.b16 %v2038
    %v3089 = vunpack.c.l.b16 %v2039
    %v3090 = vunpack.c.l.b16 %v2040
    %v3091 = vunpack.c.h.b16 %v2040
    %v3092 = vunpack.c.l.b16 %v2041
    %v3093 = vunpack.c.h.b16 %v2041
    %v3094 = vunpack.c.l.b16 %v2042
    %v3095 = vunpack.c.l.b16 %v2043
    %v3096 = vunpack.c.h.b16 %v2043
    %v3097 = vunpack.c.l.b16 %v2044
    %v3098 = vunpack.c.h.b16 %v2044
    %v3099 = vunpack.c.l.b16 %v2045
    %v3100 = vunpack.c.l.b16 %v2046
    %v3101 = vunpack.c.h.b16 %v2046
    %v3102 = vunpack.c.l.b16 %v2047
    %v3103 = vunpack.c.h.b16 %v2047
    %v3104 = vunpack.c.l.b16 %v2048
    %v3105 = vunpack.c.l.b16 %v2049
    %v3106 = vunpack.c.h.b16 %v2049
    %v3107 = vunpack.c.l.b16 %v2050
    %v3108 = vunpack.c.h.b16 %v2050
    %v3109 = vunpack.c.l.b16 %v2051
    %v3110 = vunpack.c.l.b16 %v2052
    %v3111 = vunpack.c.h.b16 %v2052
    %v3112 = vunpack.c.l.b16 %v2053
    %v3113 = vunpack.c.h.b16 %v2053
    %v3114 = vunpack.c.l.b16 %v2054
    %v3115 = vunpack.c.l.b16 %v2055
    %v3116 = vunpack.c.h.b16 %v2055
    %v3117 = vunpack.c.l.b16 %v2056
    %v3118 = vunpack.c.h.b16 %v2056
    %v3119 = vunpack.c.l.b16 %v2057
    %v3120 = vunpack.c.l.b16 %v2058
    %v3121 = vunpack.c.h.b16 %v2058
    %v3122 = vunpack.c.l.b16 %v2059
    %v3123 = vunpack.c.h.b16 %v2059
    %v3124 = vunpack.c.l.b16 %v2060
    %v3125 = vunpack.c.l.b16 %v2061
    %v3126 = vunpack.c.h.b16 %v2061
    %v3127 = vunpack.c.l.b16 %v2062
    %v3128 = vunpack.c.h.b16 %v2062
    %v3129 = vunpack.c.l.b16 %v2063
    %v3130 = vunpack.c.l.b16 %v2064
    %v3131 = vunpack.c.h.b16 %v2064
    %v3132 = vunpack.c.l.b16 %v2065
    %v3133 = vunpack.c.h.b16 %v2065
    %v3134 = vunpack.c.l.b16 %v2066
    %v3135 = vunpack.c.l.b16 %v2067
    %v3136 = vunpack.c.h.b16 %v2067
    %v3137 = vunpack.c.l.b16 %v2068
    %v3138 = vunpack.c.h.b16 %v2068
    %v3139 = vunpack.c.l.b16 %v2069
    %v3140 = vunpack.c.l.b16 %v2070
    %v3141 = vunpack.c.h.b16 %v2070
    %v3142 = vunpack.c.l.b16 %v2071
    %v3143 = vunpack.c.h.b16 %v2071
    %v3144 = vunpack.c.l.b16 %v2072
    %v3145 = vunpack.c.l.b16 %v2073
    %v3146 = vunpack.c.h.b16 %v2073
    %v3147 = vunpack.c.l.b16 %v2074
    %v3148 = vunpack.c.h.b16 %v2074
    %v3149 = vunpack.c.l.b16 %v2075
    %v3150 = vunpack.c.l.b16 %v2076
    %v3151 = vunpack.c.h.b16 %v2076
    %v3152 = vunpack.c.l.b16 %v2077
    %v3153 = vunpack.c.h.b16 %v2077
    %v3154 = vunpack.c.l.b16 %v2078
    %v3155 = vunpack.c.l.b16 %v2079
    %v3156 = vunpack.c.h.b16 %v2079
    %v3157 = vunpack.c.l.b16 %v2080
    %v3158 = vunpack.c.h.b16 %v2080
    %v3159 = vunpack.c.l.b16 %v2081
    %v3160 = vunpack.c.l.b16 %v2082
    %v3161 = vunpack.c.h.b16 %v2082
    %v3162 = vunpack.c.l.b16 %v2083
    %v3163 = vunpack.c.h.b16 %v2083
    %v3164 = vunpack.c.l.b16 %v2084
    %v3165 = vunpack.c.l.b16 %v2085
    %v3166 = vunpack.c.h.b16 %v2085
    %v3167 = vunpack.c.l.b16 %v2086
    %v3168 = vunpack.c.h.b16 %v2086
    %v3169 = vunpack.c.l.b16 %v2087
    %v3170 = vunpack.c.l.b16 %v2088
    %v3171 = vunpack.c.h.b16 %v2088
    %v3172 = vunpack.c.l.b16 %v2089
    %v3173 = vunpack.c.h.b16 %v2089
    %v3174 = vunpack.c.l.b16 %v2090
    %v3175 = vunpack.c.l.b16 %v2091
    %v3176 = vunpack.c.h.b16 %v2091
    %v3177 = vunpack.c.l.b16 %v2092
    %v3178 = vunpack.c.h.b16 %v2092
    %v3179 = vunpack.c.l.b16 %v2093
    %v3180 = vpack.c.b16 %v3025, %v3020
    %v3181 = vpack.c.b16 %v3026, %v3021
    %v3182 = vpack.c.b16 %v3027, %v3022
    %v3183 = vpack.c.b16 %v3028, %v3023
    %v3184 = vpack.c.b16 %v3029, %v3024
    %v3185 = vpack.c.b16 %v3035, %v3030
    %v3186 = vpack.c.b16 %v3036, %v3031
    %v3187 = vpack.c.b16 %v3037, %v3032
    %v3188 = vpack.c.b16 %v3038, %v3033
    %v3189 = vpack.c.b16 %v3039, %v3034
    %v3190 = vpack.c.b16 %v3045, %v3040
    %v3191 = vpack.c.b16 %v3046, %v3041
    %v3192 = vpack.c.b16 %v3047, %v3042
    %v3193 = vpack.c.b16 %v3048, %v3043
    %v3194 = vpack.c.b16 %v3049, %v3044
    %v3195 = vpack.c.b16 %v3055, %v3050
    %v3196 = vpack.c.b16 %v3056, %v3051
    %v3197 = vpack.c.b16 %v3057, %v3052
    %v3198 = vpack.c.b16 %v3058, %v3053
    %v3199 = vpack.c.b16 %v3059, %v3054
    %v3200 = vpack.c.b16 %v3065, %v3060
    %v3201 = vpack.c.b16 %v3066, %v3061
    %v3202 = vpack.c.b16 %v3067, %v3062
    %v3203 = vpack.c.b16 %v3068, %v3063
    %v3204 = vpack.c.b16 %v3069, %v3064
    %v3205 = vpack.c.b16 %v3075, %v3070
    %v3206 = vpack.c.b16 %v3076, %v3071
    %v3207 = vpack.c.b16 %v3077, %v3072
    %v3208 = vpack.c.b16 %v3078, %v3073
    %v3209 = vpack.c.b16 %v3079, %v3074
    %v3210 = vpack.c.b16 %v3085, %v3080
    %v3211 = vpack.c.b16 %v3086, %v3081
    %v3212 = vpack.c.b16 %v3087, %v3082
    %v3213 = vpack.c.b16 %v3088, %v3083
    %v3214 = vpack.c.b16 %v3089, %v3084
    %v3215 = vpack.c.b16 %v3095, %v3090
    %v3216 = vpack.c.b16 %v3096, %v3091
    %v3217 = vpack.c.b16 %v3097, %v3092
    %v3218 = vpack.c.b16 %v3098, %v3093
    %v3219 = vpack.c.b16 %v3099, %v3094
    %v3220 = vpack.c.b16 %v3105, %v3100
    %v3221 = vpack.c.b16 %v3106, %v3101
    %v3222 = vpack.c.b16 %v3107, %v3102
    %v3223 = vpack.c.b16 %v3108, %v3103
    %v3224 = vpack.c.b16 %v3109, %v3104
    %v3225 = vpack.c.b16 %v3115, %v3110
    %v3226 = vpack.c.b16 %v3116, %v3111
    %v3227 = vpack.c.b16 %v3117, %v3112
    %v3228 = vpack.c.b16 %v3118, %v3113
    %v3229 = vpack.c.b16 %v3119, %v3114
    %v3230 = vpack.c.b16 %v3125, %v3120
    %v3231 = vpack.c.b16 %v3126, %v3121
    %v3232 = vpack.c.b16 %v3127, %v3122
    %v3233 = vpack.c.b16 %v3128, %v3123
    %v3234 = vpack.c.b16 %v3129, %v3124
    %v3235 = vpack.c.b16 %v3135, %v3130
    %v3236 = vpack.c.b16 %v3136, %v3131
    %v3237 = vpack.c.b16 %v3137, %v3132
    %v3238 = vpack.c.b16 %v3138, %v3133
    %v3239 = vpack.c.b16 %v3139, %v3134
    %v3240 = vpack.c.b16 %v3145, %v3140
    %v3241 = vpack.c.b16 %v3146, %v3141
    %v3242 = vpack.c.b16 %v3147, %v3142
    %v3243 = vpack.c.b16 %v3148, %v3143
    %v3244 = vpack.c.b16 %v3149, %v3144
    %v3245 = vpack.c.b16 %v3155, %v3150
    %v3246 = vpack.c.b16 %v3156, %v3151
    %v3247 = vpack.c.b16 %v3157, %v3152
    %v3248 = vpack.c.b16 %v3158, %v3153
    %v3249 = vpack.c.b16 %v3159, %v3154
    %v3250 = vpack.c.b16 %v3165, %v3160
    %v3251 = vpack.c.b16 %v3166, %v3161
    %v3252 = vpack.c.b16 %v3167, %v3162
    %v3253 = vpack.c.b16 %v3168, %v3163
    %v3254 = vpack.c.b16 %v3169, %v3164
    %v3255 = vpack.c.b16 %v3175, %v3170
    %v3256 = vpack.c.b16 %v3176, %v3171
    %v3257 = vpack.c.b16 %v3177, %v3172
    %v3258 = vpack.c.b16 %v3178, %v3173
    %v3259 = vpack.c.b16 %v3179, %v3174
    %3340 = vmatpush.bf16.msra.mxu0 %v3215
    %3341 = vmatpush.bf16.msra.mxu0 %v3210
    %3342 = vmatpush.bf16.msra.mxu0 %v3205
    %3343 = vmatpush.bf16.msra.mxu0 %v3200
    %3344 = vmatpush.bf16.msra.mxu0 %v3195
    %3345 = vmatpush.bf16.msra.mxu0 %v3190
    %3346 = vmatpush.bf16.msra.mxu0 %v3185
    %3347 = vmatpush.bf16.msra.mxu0 %v3180
    %3348 = vmatmul.bf16.gmra.mxu0 %v2094
    %v3349 = vpop.f32.mrf.mxu0
    %v3350 = vadd.f32 0.0, %v3349
    %v3351 = vpop.f32.mrf.mxu0
    %v3352 = vadd.f32 0.0, %v3351
    %3353 = vdwg.mxu0
    %3354 = vmatpush.bf16.msra.mxu0 %v3255
    %3355 = vmatpush.bf16.msra.mxu0 %v3250
    %3356 = vmatpush.bf16.msra.mxu0 %v3245
    %3357 = vmatpush.bf16.msra.mxu0 %v3240
    %3358 = vmatpush.bf16.msra.mxu0 %v3235
    %3359 = vmatpush.bf16.msra.mxu0 %v3230
    %3360 = vmatpush.bf16.msra.mxu0 %v3225
    %3361 = vmatpush.bf16.msra.mxu0 %v3220
    %3362 = vmatmul.bf16.gmra.mxu0 %v2095
    %v3363 = vpop.f32.mrf.mxu0
    %v3364 = vadd.f32 %v3350, %v3363
    %v3365 = vpop.f32.mrf.mxu0
    %v3366 = vadd.f32 %v3352, %v3365
    %3367 = vdwg.mxu0
    %3368 = vmatpush.bf16.msra.mxu0 %v3216
    %3369 = vmatpush.bf16.msra.mxu0 %v3211
    %3370 = vmatpush.bf16.msra.mxu0 %v3206
    %3371 = vmatpush.bf16.msra.mxu0 %v3201
    %3372 = vmatpush.bf16.msra.mxu0 %v3196
    %3373 = vmatpush.bf16.msra.mxu0 %v3191
    %3374 = vmatpush.bf16.msra.mxu0 %v3186
    %3375 = vmatpush.bf16.msra.mxu0 %v3181
    %3376 = vmatmul.bf16.gmra.mxu0 %v2094
    %v3377 = vpop.f32.mrf.mxu0
    %v3378 = vadd.f32 0.0, %v3377
    %v3379 = vpop.f32.mrf.mxu0
    %v3380 = vadd.f32 0.0, %v3379
    %3381 = vdwg.mxu0
    %3382 = vmatpush.bf16.msra.mxu0 %v3256
    %3383 = vmatpush.bf16.msra.mxu0 %v3251
    %3384 = vmatpush.bf16.msra.mxu0 %v3246
    %3385 = vmatpush.bf16.msra.mxu0 %v3241
    %3386 = vmatpush.bf16.msra.mxu0 %v3236
    %3387 = vmatpush.bf16.msra.mxu0 %v3231
    %3388 = vmatpush.bf16.msra.mxu0 %v3226
    %3389 = vmatpush.bf16.msra.mxu0 %v3221
    %3390 = vmatmul.bf16.gmra.mxu0 %v2095
    %v3391 = vpop.f32.mrf.mxu0
    %v3392 = vadd.f32 %v3378, %v3391
    %v3393 = vpop.f32.mrf.mxu0
    %v3394 = vadd.f32 %v3380, %v3393
    %3395 = vdwg.mxu0
    %3396 = vmatpush.bf16.msra.mxu0 %v3217
    %3397 = vmatpush.bf16.msra.mxu0 %v3212
    %3398 = vmatpush.bf16.msra.mxu0 %v3207
    %3399 = vmatpush.bf16.msra.mxu0 %v3202
    %3400 = vmatpush.bf16.msra.mxu0 %v3197
    %3401 = vmatpush.bf16.msra.mxu0 %v3192
    %3402 = vmatpush.bf16.msra.mxu0 %v3187
    %3403 = vmatpush.bf16.msra.mxu0 %v3182
    %3404 = vmatmul.bf16.gmra.mxu0 %v2094
    %v3405 = vpop.f32.mrf.mxu0
    %v3406 = vadd.f32 0.0, %v3405
    %v3407 = vpop.f32.mrf.mxu0
    %v3408 = vadd.f32 0.0, %v3407
    %3409 = vdwg.mxu0
    %3410 = vmatpush.bf16.msra.mxu0 %v3257
    %3411 = vmatpush.bf16.msra.mxu0 %v3252
    %3412 = vmatpush.bf16.msra.mxu0 %v3247
    %3413 = vmatpush.bf16.msra.mxu0 %v3242
    %3414 = vmatpush.bf16.msra.mxu0 %v3237
    %3415 = vmatpush.bf16.msra.mxu0 %v3232
    %3416 = vmatpush.bf16.msra.mxu0 %v3227
    %3417 = vmatpush.bf16.msra.mxu0 %v3222
    %3418 = vmatmul.bf16.gmra.mxu0 %v2095
    %v3419 = vpop.f32.mrf.mxu0
    %v3420 = vadd.f32 %v3406, %v3419
    %v3421 = vpop.f32.mrf.mxu0
    %v3422 = vadd.f32 %v3408, %v3421
    %3423 = vdwg.mxu0
    %3424 = vmatpush.bf16.msra.mxu0 %v3218
    %3425 = vmatpush.bf16.msra.mxu0 %v3213
    %3426 = vmatpush.bf16.msra.mxu0 %v3208
    %3427 = vmatpush.bf16.msra.mxu0 %v3203
    %3428 = vmatpush.bf16.msra.mxu0 %v3198
    %3429 = vmatpush.bf16.msra.mxu0 %v3193
    %3430 = vmatpush.bf16.msra.mxu0 %v3188
    %3431 = vmatpush.bf16.msra.mxu0 %v3183
    %3432 = vmatmul.bf16.gmra.mxu0 %v2094
    %v3433 = vpop.f32.mrf.mxu0
    %v3434 = vadd.f32 0.0, %v3433
    %v3435 = vpop.f32.mrf.mxu0
    %v3436 = vadd.f32 0.0, %v3435
    %3437 = vdwg.mxu0
    %3438 = vmatpush.bf16.msra.mxu0 %v3258
    %3439 = vmatpush.bf16.msra.mxu0 %v3253
    %3440 = vmatpush.bf16.msra.mxu0 %v3248
    %3441 = vmatpush.bf16.msra.mxu0 %v3243
    %3442 = vmatpush.bf16.msra.mxu0 %v3238
    %3443 = vmatpush.bf16.msra.mxu0 %v3233
    %3444 = vmatpush.bf16.msra.mxu0 %v3228
    %3445 = vmatpush.bf16.msra.mxu0 %v3223
    %3446 = vmatmul.bf16.gmra.mxu0 %v2095
    %v3447 = vpop.f32.mrf.mxu0
    %v3448 = vadd.f32 %v3434, %v3447
    %v3449 = vpop.f32.mrf.mxu0
    %v3450 = vadd.f32 %v3436, %v3449
    %3451 = vdwg.mxu0
    %3452 = vmatpush.bf16.msra.mxu0 %v3219
    %3453 = vmatpush.bf16.msra.mxu0 %v3214
    %3454 = vmatpush.bf16.msra.mxu0 %v3209
    %3455 = vmatpush.bf16.msra.mxu0 %v3204
    %3456 = vmatpush.bf16.msra.mxu0 %v3199
    %3457 = vmatpush.bf16.msra.mxu0 %v3194
    %3458 = vmatpush.bf16.msra.mxu0 %v3189
    %3459 = vmatpush.bf16.msra.mxu0 %v3184
    %3460 = vmatmul.bf16.gmra.mxu0 %v2094
    %v3461 = vpop.f32.mrf.mxu0
    %v3462 = vadd.f32 0.0, %v3461
    %v3463 = vpop.f32.mrf.mxu0
    %v3464 = vadd.f32 0.0, %v3463
    %3465 = vdwg.mxu0
    %3466 = vmatpush.bf16.msra.mxu0 %v3259
    %3467 = vmatpush.bf16.msra.mxu0 %v3254
    %3468 = vmatpush.bf16.msra.mxu0 %v3249
    %3469 = vmatpush.bf16.msra.mxu0 %v3244
    %3470 = vmatpush.bf16.msra.mxu0 %v3239
    %3471 = vmatpush.bf16.msra.mxu0 %v3234
    %3472 = vmatpush.bf16.msra.mxu0 %v3229
    %3473 = vmatpush.bf16.msra.mxu0 %v3224
    %3474 = vmatmul.bf16.gmra.mxu0 %v2095
    %v3475 = vpop.f32.mrf.mxu0
    %v3476 = vadd.f32 %v3462, %v3475
    %v3477 = vpop.f32.mrf.mxu0
    %v3478 = vadd.f32 %v3464, %v3477
    %3479 = vdwg.mxu0
    %v3480 = vadd.f32 %v2808, %v3364
    %v3481 = vadd.f32 %v2836, %v3392
    %v3482 = vadd.f32 %v2864, %v3420
    %v3483 = vadd.f32 %v2892, %v3448
    %v3484 = vadd.f32 %v2920, %v3476
    %v3485 = vadd.f32 %v2810, %v3366
    %v3486 = vadd.f32 %v2838, %v3394
    %v3487 = vadd.f32 %v2866, %v3422
    %v3488 = vadd.f32 %v2894, %v3450
    %v3489 = vadd.f32 %v2922, %v3478
    %v3490 = vmul.f32 %v3480, %v3480
    %v3491 = vmul.f32 %v3481, %v3481
    %v3492 = vmul.f32 %v3482, %v3482
    %v3493 = vmul.f32 %v3483, %v3483
    %v3494 = vmul.f32 %v3484, %v3484
    %v3495 = vmul.f32 %v3485, %v3485
    %v3496 = vmul.f32 %v3486, %v3486
    %v3497 = vmul.f32 %v3487, %v3487
    %v3498 = vmul.f32 %v3488, %v3488
    %v3499 = vmul.f32 %v3489, %v3489
    %v3500 = vadd.f32 %v3490, %v3491
    %v3501 = vadd.f32 %v3500, %v3492
    %v3502 = vadd.f32 %v3501, %v3493
    %v3503 = vsel %vm294, %v3494, 0.0
    %v3504 = vadd.f32 %v3502, %v3503
    %3505 = vadd.xlane.f32.xlu0 %v3504
    %v3506 = vpop.xlane.xlu0 %3505
    %v3507 = vadd.f32 %v3495, %v3496
    %v3508 = vadd.f32 %v3507, %v3497
    %v3509 = vadd.f32 %v3508, %v3498
    %v3510 = vsel %vm294, %v3499, 0.0
    %v3511 = vadd.f32 %v3509, %v3510
    %3512 = vadd.xlane.f32.xlu0 %v3511
    %v3513 = vpop.xlane.xlu0 %3512
    %v3514 = vmax.f32 %v3506, 1e-24
    %v3515 = vmax.f32 %v3513, 1e-24
    %v3516 = vrsqrt.pop %v3514
    %v3517 = vmul.f32 %v3516, %v3514
    %v3518 = vmul.f32 %v3517, %v3516
    %v3519 = vmul.f32 0.5, %v3518
    %v3520 = vsub.f32 1.5, %v3519
    %v3521 = vmul.f32 %v3516, %v3520
    %vm3522 = vweird.f32 %v3514
    %vm3523 = vweird.f32 %v3516
    %vm3524 = vmor %vm3522, %vm3523
    %v3525 = vsel %vm3524, %v3516, %v3521
    %v3526 = vrsqrt.pop %v3515
    %v3527 = vmul.f32 %v3526, %v3515
    %v3528 = vmul.f32 %v3527, %v3526
    %v3529 = vmul.f32 0.5, %v3528
    %v3530 = vsub.f32 1.5, %v3529
    %v3531 = vmul.f32 %v3526, %v3530
    %vm3532 = vweird.f32 %v3515
    %vm3533 = vweird.f32 %v3526
    %vm3534 = vmor %vm3532, %vm3533
    %v3535 = vsel %vm3534, %v3526, %v3531
    %v3536 = vmul.f32 %v3480, %v3525
    %v3537 = vmul.f32 %v3481, %v3525
    %v3538 = vmul.f32 %v3482, %v3525
    %v3539 = vmul.f32 %v3483, %v3525
    %v3540 = vmul.f32 %v3484, %v3525
    %v3541 = vmul.f32 %v3485, %v3535
    %v3542 = vmul.f32 %v3486, %v3535
    %v3543 = vmul.f32 %v3487, %v3535
    %v3544 = vmul.f32 %v3488, %v3535
    %v3545 = vmul.f32 %v3489, %v3535
    %3546 = vst [vmem:[#allocation4] sm:$0xff] %v3536
    %3547 = vst [vmem:[#allocation4 + $0x8] sm:$0xff] %v3537
    %3548 = vst [vmem:[#allocation4 + $0x10] sm:$0xff] %v3538
    %3549 = vst [vmem:[#allocation4 + $0x18] sm:$0xff] %v3539
    %3550 = vst.msk [vmem:[#allocation4 + $0x20] sm:$0xff] %vm294, %v3540
    %3551 = vst [vmem:[#allocation4 + $0x28] sm:$0xff] %v3541
    %3552 = vst [vmem:[#allocation4 + $0x30] sm:$0xff] %v3542
    %3553 = vst [vmem:[#allocation4 + $0x38] sm:$0xff] %v3543
    %3554 = vst [vmem:[#allocation4 + $0x40] sm:$0xff] %v3544
    %3555 = vst.msk [vmem:[#allocation4 + $0x48] sm:$0xff] %vm294, %v3545
    // Predicated region
    $region152: #{tpu_custom_call.1} parent=1 // pred_check
      _
    $region153: #{tpu_custom_call.1} parent=1 // pred_check_branch
      %3557 = sbr.rel (0) target = $region155
    $region154: #{tpu_custom_call.1} parent=1 // pred_region
      %3559 = vsyncadd [#allocation5], 0
      %s3560 = sshll.u32 [#allocation4], 4
      %s3561 = int_to_ptr.vmem [resolvable:$true] %s3560
      %s3562 = sshll.u32 %s61, 4
      %s3563 = int_to_ptr.hbm [resolvable:$true] %s3562
      %3568 = dma.vmem_to_hbm [thread:$0]  %s3561, 1280, %s3563, [#allocation5], 640, 640, 40
    $region155: #{tpu_custom_call.1} parent=1 // pred_fallthru
      _
    // Predicated region
    $region156: #{tpu_custom_call.1} parent=1 // pred_check
      _
    $region157: #{tpu_custom_call.1} parent=1 // pred_check_branch
      %3570 = sbr.rel (0) target = $region159
    $region158: #{tpu_custom_call.1} parent=1 // pred_region
      %3572 = dma.done [#allocation5], 1280
    $region159: #{tpu_custom_call.1} parent=1 // pred_fallthru
      _
    %3573 = vsyncpa [#allocation5], 1
  %3574 = vsyncmov [#allocation3]
  %s3575 = vpop.sfrf %3574
  %p3576 = scmp.eq.s32.totalorder %s3575, 0
  %p3577 = pneg %p3576
  %3579 = shalt.err (%p3577)

</llo_original>
